<compile_context>
chip_gen: v7x
topology: tpu7x:2x2x1
jax: 0.10.0
libtpu: 0.0.40
codegen_flags: <defaults>
</compile_context>

<pallas_src>
import functools

import numpy as np
import jax
import jax.numpy as jnp
from jax import lax
from jax.experimental import pallas as pl
from jax.experimental.pallas import tpu as pltpu


def _bilstm_fc_kernel(B, T, E, H, L, *refs):
    """B is the sublane-padded batch size (multiple of 8)."""
    H2, H4, H6, H8 = 2 * H, 4 * H, 6 * H, 8 * H
    f32 = jnp.float32

    # ---- unpack refs: inputs..., output, scratch ----
    pos = 0
    mask_ref = refs[pos]; pos += 1        # (T, B, 2H) f32 step-aligned validity mask
    emb_ref = refs[pos]; pos += 1         # (T*B, E) f32 time-major flattened embeddings
    layers = []
    for _ in range(L):
        layers.append((refs[pos], refs[pos + 1], refs[pos + 2]))   # wx, whh, bias
        pos += 3
    fc1_w_ref, fc1_b_ref, fc2_w_ref, fc2_b_ref = refs[pos:pos + 4]; pos += 4
    out_ref = refs[pos]; pos += 1
    gx_ref, y_ref = refs[pos], refs[pos + 1]   # (T,B,8H) gate x-proj, (T,B,2H) layer outputs

    # Column masks, built once. Gate layout gate-major/dir-minor: [i_f i_b f_f f_b g_f g_b o_f o_b].
    col8 = lax.broadcasted_iota(jnp.int32, (B, H8), 1)

    def band(lo, hi):
        return jnp.logical_and(col8 >= lo, col8 < hi)

    fwd_cols = band(0, H) | band(H2, 3 * H) | band(H4, 5 * H) | band(H6, 7 * H)
    g_cols = band(H4, H6)
    bwd_half = lax.broadcasted_iota(jnp.int32, (B, H2), 1) >= H    # bwd half of [fwd|bwd] rows

    h_last = None
    for l, (wx_ref, whh_ref, bias_ref) in enumerate(layers):
        # -------- hoisted input projection: ONE MXU matmul per layer, off the serial path ------
        if l == 0:
            x = emb_ref[...]                                       # (T*B, E), time-aligned
        else:
            # Time-align prev layer outputs: loop stored y_ref[i] = [fwd h(t=i) | bwd h(t=T-1-i)];
            # swap the bwd halves of rows t <-> T-1-t (pairwise, full-width selects, off-path).
            for t in range(T // 2):
                a = y_ref[t]
                b = y_ref[T - 1 - t]
                y_ref[t] = jnp.where(bwd_half, b, a)
                y_ref[T - 1 - t] = jnp.where(bwd_half, a, b)
            x = y_ref[...].reshape(T * B, H2)
        gx = jnp.dot(x, wx_ref[...], preferred_element_type=f32) + bias_ref[...]
        gx_ref[...] = gx.reshape(T, B, H8)                         # time-aligned

        # Step-align gx so the loop body does ONE aligned gx_ref[i] load: step i needs fwd-gate
        # columns from time i and bwd-gate columns from time T-1-i (pairwise column-masked swap).
        for t in range(T // 2):
            a = gx_ref[t]
            b = gx_ref[T - 1 - t]
            gx_ref[t] = jnp.where(fwd_cols, a, b)
            gx_ref[T - 1 - t] = jnp.where(fwd_cols, b, a)

        whh = whh_ref[...]                                         # (2H, 8H) block-diagonal
        store_y = l < L - 1                                        # last layer outputs are unused

        # TODO(synk): pinning whh in the MXU across timesteps (pltpu.matmul_push_rhs /
        #             matmul_acc_lhs / matmul_pop) left as future work; kept as jnp.dot.
        def body(i, carry):
            h, c = carry                                           # (B, 2H) each, cols=[fwd|bwd]
            # one aligned (8,128)-tile load + one block-diagonal MXU dot per serial step
            gates = gx_ref[i] + jnp.dot(h, whh, preferred_element_type=f32)
            # single tanh pass: sigmoid(x) == 0.5 * (1 + tanh(x / 2))
            th = jnp.tanh(jnp.where(g_cols, gates, gates * 0.5))
            act = jnp.where(g_cols, th, th * 0.5 + 0.5)
            i_g = act[:, 0:H2]
            f_g = act[:, H2:H4]
            g_g = act[:, H4:H6]
            o_g = act[:, H6:H8]
            c_new = f_g * c + i_g * g_g
            h_new = o_g * jnp.tanh(c_new)
            m = mask_ref[i]                                        # (B, 2H) f32 {0,1}
            if store_y:
                y_ref[i] = h_new * m    # ONE full-row store per step (mask folded as a multiply)
            keep = m > 0.0
            return jnp.where(keep, h_new, h), jnp.where(keep, c_new, c)

        h0 = jnp.zeros((B, H2), f32)
        c0 = jnp.zeros((B, H2), f32)
        # partial unroll: LLO scheduling visibility without exploding live ranges at large T
        h_last, _ = lax.fori_loop(0, T, body, (h0, c0), unroll=min(8, T))

    # hidden = [final fwd | final bwd] -> fc1 -> relu -> fc2 (output padded to 128 lanes)
    z = jnp.dot(h_last, fc1_w_ref[...], preferred_element_type=f32) + fc1_b_ref[...]
    z = jnp.maximum(z, 0.0)
    out_ref[...] = jnp.dot(z, fc2_w_ref[...], preferred_element_type=f32) + fc2_b_ref[...]


def _interleave_gate_cols(w_f, w_b, H):
    """(rows, 4H) fwd/bwd (PyTorch gate order i,f,g,o) -> (rows, 8H) gate-major / dir-minor."""
    blocks = []
    for k in range(4):
        blocks.append(w_f[:, k * H:(k + 1) * H])
        blocks.append(w_b[:, k * H:(k + 1) * H])
    return jnp.concatenate(blocks, axis=1)


def _blockdiag_whh(whh_f, whh_b, H):
    """(H,4H) fwd/bwd -> (2H, 8H): rows 0:H feed fwd gate columns, rows H:2H feed bwd."""
    z = jnp.zeros((H, H), whh_f.dtype)
    top, bot = [], []
    for k in range(4):
        top += [whh_f[:, k * H:(k + 1) * H], z]
        bot += [z, whh_b[:, k * H:(k + 1) * H]]
    return jnp.concatenate([jnp.concatenate(top, axis=1),
                            jnp.concatenate(bot, axis=1)], axis=0)


def bilstm_fc_forward(params, wmaps, wmap_lengths):
    B, T = wmaps.shape
    E = params["embed"].shape[1]
    H = params["lstm"][0][0]["w_hh"].shape[0]
    L = len(params["lstm"])
    num_labels = params["fc2_w"].shape[1]
    H2 = 2 * H
    B_pad = max(8, ((B + 7) // 8) * 8)                  # sublane-aligned batch
    OUT_PAD = ((num_labels + 127) // 128) * 128         # lane-dense fc2 output columns

    # forward() sorts the lengths descending but does NOT reorder the sequences (faithful quirk).
    lens = -jnp.sort(-wmap_lengths.astype(jnp.int32))                        # (B,)
    lens_p = jnp.concatenate([lens, jnp.zeros((B_pad - B,), jnp.int32)])     # padded rows: len 0

    # Embedding gather (+ dropout = identity at inference) -> time-major, batch padded to B_pad.
    # TODO(synk): embedding gather / packed-sequence bookkeeping stay in plain-JAX glue; the
    #             packing is reproduced in-kernel via the validity mask.
    emb = jnp.take(params["embed"], wmaps, axis=0).astype(jnp.float32)       # (B, T, E)
    emb = jnp.pad(jnp.transpose(emb, (1, 0, 2)), ((0, 0), (0, B_pad - B), (0, 0)))
    emb_flat = emb.reshape(T * B_pad, E)

    # Step-aligned validity mask: step-i row = [fwd valid at time i | bwd valid at time T-1-i].
    t_idx = jnp.arange(T, dtype=jnp.int32)
    vf = (t_idx[:, None] < lens_p[None, :]).astype(jnp.float32)              # (T, B_pad)
    vb = ((T - 1 - t_idx)[:, None] < lens_p[None, :]).astype(jnp.float32)    # (T, B_pad)
    mask3 = jnp.concatenate(
        [jnp.broadcast_to(vf[:, :, None], (T, B_pad, H)),
         jnp.broadcast_to(vb[:, :, None], (T, B_pad, H))], axis=-1)          # (T, B_pad, 2H)

    fc2_w = jnp.pad(params["fc2_w"], ((0, 0), (0, OUT_PAD - num_labels)))
    fc2_b = jnp.pad(params["fc2_b"], ((0, 0), (0, OUT_PAD - num_labels)))

    inputs = [mask3, emb_flat]
    for l in range(L):
        wf, wb = params["lstm"][l][0], params["lstm"][l][1]
        inputs.append(_interleave_gate_cols(wf["w_ih"], wb["w_ih"], H))      # (E or 2H, 8H)
        inputs.append(_blockdiag_whh(wf["w_hh"], wb["w_hh"], H))             # (2H, 8H)
        inputs.append(_interleave_gate_cols(wf["b"], wb["b"], H))            # (1, 8H)
    inputs += [params["fc1_w"], params["fc1_b"], fc2_w, fc2_b]

    kernel = functools.partial(_bilstm_fc_kernel, B_pad, T, E, H, L)
    # TODO(synk): at production sizes chunk the (T,B,8H) gx scratch over time (v7x 64 MiB VMEM),
    #             raise vmem_limit_bytes on v6e, and add a leading batch grid axis with
    #             dimension_semantics=("parallel",) to use both v7x TensorCores.
    out = pl.pallas_call(
        kernel,
        out_shape=jax.ShapeDtypeStruct((B_pad, OUT_PAD), jnp.float32),
        in_specs=[pl.BlockSpec(memory_space=pltpu.MemorySpace.VMEM)] * len(inputs),
        out_specs=pl.BlockSpec(memory_space=pltpu.MemorySpace.VMEM),
        scratch_shapes=[pltpu.VMEM((T, B_pad, 8 * H), jnp.float32),   # step-aligned gate x-proj
                        pltpu.VMEM((T, B_pad, H2), jnp.float32)],     # layer outputs [fwd | bwd]
        compiler_params=pltpu.CompilerParams(vmem_limit_bytes=32 * 1024 * 1024),
    )(*inputs)
    return out[:B, :num_labels]


def reference_forward(params, wmaps, wmap_lengths):
    """Pure-JAX reference matching the PyTorch forward() semantics (full f32 precision)."""
    B, T = wmaps.shape
    H = params["lstm"][0][0]["w_hh"].shape[0]
    L = len(params["lstm"])
    hp = jax.lax.Precision.HIGHEST
    lens = -jnp.sort(-wmap_lengths.astype(jnp.int32))
    x = jnp.take(params["embed"], wmaps, axis=0).astype(jnp.float32)
    x = jnp.transpose(x, (1, 0, 2))  # (T, B, E)

    def run_dir(x_tbd, w, reverse):
        h = jnp.zeros((B, H), jnp.float32)
        c = jnp.zeros((B, H), jnp.float32)
        outs = [None] * T
        order = range(T - 1, -1, -1) if reverse else range(T)
        for t in order:
            gates = (jnp.dot(x_tbd[t], w["w_ih"], precision=hp)
                     + jnp.dot(h, w["w_hh"], precision=hp) + w["b"])
            i_g = jax.nn.sigmoid(gates[:, :H])
            f_g = jax.nn.sigmoid(gates[:, H:2 * H])
            g_g = jnp.tanh(gates[:, 2 * H:3 * H])
            o_g = jax.nn.sigmoid(gates[:, 3 * H:])
            c_new = f_g * c + i_g * g_g
            h_new = o_g * jnp.tanh(c_new)
            valid = (t < lens)[:, None]
            h = jnp.where(valid, h_new, h)
            c = jnp.where(valid, c_new, c)
            outs[t] = jnp.where(valid, h_new, 0.0)
        return jnp.stack(outs, 0), h

    inp = x
    for l in range(L):
        of, hf = run_dir(inp, params["lstm"][l][0], False)
        ob, hb = run_dir(inp, params["lstm"][l][1], True)
        inp = jnp.concatenate([of, ob], axis=-1)
    hidden = jnp.concatenate([hf, hb], axis=-1)
    z = jax.nn.relu(jnp.dot(hidden, params["fc1_w"], precision=hp) + params["fc1_b"])
    return jnp.dot(z, params["fc2_w"], precision=hp) + params["fc2_b"]


def init_params(key, vocab_size, word_emb_dim, word_rnn_dim, word_rnn_layers, num_labels):
    H = word_rnn_dim // 2
    keys = iter(jax.random.split(key, 4 + word_rnn_layers * 2 * 3 + 4))

    def unif(shape, scale):
        return jax.random.uniform(next(keys), shape, jnp.float32, -scale, scale)

    s = 1.0 / (H ** 0.5)
    params = {"embed": jax.random.normal(next(keys), (vocab_size, word_emb_dim), jnp.float32)}
    lstm = []
    for l in range(word_rnn_layers):
        in_dim = word_emb_dim if l == 0 else word_rnn_dim
        dirs = []
        for _ in range(2):
            dirs.append({"w_ih": unif((in_dim, 4 * H), s),
                         "w_hh": unif((H, 4 * H), s),
                         "b": unif((1, 4 * H), s)})    # b_ih + b_hh combined
        lstm.append(dirs)
    params["lstm"] = lstm
    sf = 1.0 / (word_rnn_dim ** 0.5)
    params["fc1_w"] = unif((word_rnn_dim, word_rnn_dim), sf)
    params["fc1_b"] = unif((1, word_rnn_dim), sf)
    params["fc2_w"] = unif((word_rnn_dim, num_labels), sf)
    params["fc2_b"] = unif((1, num_labels), sf)
    return params


if __name__ == "__main__":
    key = jax.random.PRNGKey(0)
    # module hyper-params (tagset_size / lm_vocab_size unused by forward())
    tagset_size, vocab_size, lm_vocab_size = 5, 50, 50
    word_emb_dim, word_rnn_dim, word_rnn_layers = 32, 32, 2
    dropout, num_labels = 0.0, 6
    B, T = 2, 8

    kp, kw = jax.random.split(key)
    params = init_params(kp, vocab_size, word_emb_dim, word_rnn_dim,
                         word_rnn_layers, num_labels)
    wmaps = jax.random.randint(kw, (B, T), 1, vocab_size, dtype=jnp.int32)
    wmap_lengths = jnp.array([5, 8], dtype=jnp.int32)

    out = bilstm_fc_forward(params, wmaps, wmap_lengths)
    out = jax.block_until_ready(out)

    ref = reference_forward(params, wmaps, wmap_lengths)
    assert out.shape == (B, num_labels)
    # All-f32 kernel vs f32 reference; sigmoid-via-tanh is the same expansion XLA uses.
    np.testing.assert_allclose(np.asarray(out), np.asarray(ref), rtol=1e-4, atol=1e-4)
    print("KERNEL_OK")
</pallas_src>

<mosaic_0001>
module attributes {stable_mosaic.version = 11 : i64} {
  func.func @_bilstm_fc_kernel(%arg0: memref<8x8x32xf32, #tpu.memory_space<vmem>>, %arg1: memref<64x32xf32, #tpu.memory_space<vmem>>, %arg2: memref<32x128xf32, #tpu.memory_space<vmem>>, %arg3: memref<32x128xf32, #tpu.memory_space<vmem>>, %arg4: memref<1x128xf32, #tpu.memory_space<vmem>>, %arg5: memref<32x128xf32, #tpu.memory_space<vmem>>, %arg6: memref<32x128xf32, #tpu.memory_space<vmem>>, %arg7: memref<1x128xf32, #tpu.memory_space<vmem>>, %arg8: memref<32x32xf32, #tpu.memory_space<vmem>>, %arg9: memref<1x32xf32, #tpu.memory_space<vmem>>, %arg10: memref<32x128xf32, #tpu.memory_space<vmem>>, %arg11: memref<1x128xf32, #tpu.memory_space<vmem>>, %arg12: memref<8x128xf32, #tpu.memory_space<vmem>>, %arg13: memref<8x8x128xf32, #tpu.memory_space<vmem>>, %arg14: memref<8x8x32xf32, #tpu.memory_space<vmem>>) attributes {dimension_semantics = [], scalar_prefetch = 0 : i64, scratch_operands = 2 : i64, tpu.core_type = #tpu.core_type<tc>} {
    %0 = tpu.iota {dimensions = array<i32: 1>} : vector<8x128xi32>
    %c0_i32 = arith.constant 0 : i32
    %1 = vector.broadcast %c0_i32 : i32 to vector<8x128xi32>
    %2 = arith.cmpi sge, %0, %1 : vector<8x128xi32>
    %c16_i32 = arith.constant 16 : i32
    %3 = vector.broadcast %c16_i32 : i32 to vector<8x128xi32>
    %4 = arith.cmpi slt, %0, %3 : vector<8x128xi32>
    %5 = arith.andi %2, %4 : vector<8x128xi1>
    %c32_i32 = arith.constant 32 : i32
    %6 = vector.broadcast %c32_i32 : i32 to vector<8x128xi32>
    %7 = arith.cmpi sge, %0, %6 : vector<8x128xi32>
    %c48_i32 = arith.constant 48 : i32
    %8 = vector.broadcast %c48_i32 : i32 to vector<8x128xi32>
    %9 = arith.cmpi slt, %0, %8 : vector<8x128xi32>
    %10 = arith.andi %7, %9 : vector<8x128xi1>
    %11 = arith.ori %5, %10 : vector<8x128xi1>
    %c64_i32 = arith.constant 64 : i32
    %12 = vector.broadcast %c64_i32 : i32 to vector<8x128xi32>
    %13 = arith.cmpi sge, %0, %12 : vector<8x128xi32>
    %c80_i32 = arith.constant 80 : i32
    %14 = vector.broadcast %c80_i32 : i32 to vector<8x128xi32>
    %15 = arith.cmpi slt, %0, %14 : vector<8x128xi32>
    %16 = arith.andi %13, %15 : vector<8x128xi1>
    %17 = arith.ori %11, %16 : vector<8x128xi1>
    %c96_i32 = arith.constant 96 : i32
    %18 = vector.broadcast %c96_i32 : i32 to vector<8x128xi32>
    %19 = arith.cmpi sge, %0, %18 : vector<8x128xi32>
    %c112_i32 = arith.constant 112 : i32
    %20 = vector.broadcast %c112_i32 : i32 to vector<8x128xi32>
    %21 = arith.cmpi slt, %0, %20 : vector<8x128xi32>
    %22 = arith.andi %19, %21 : vector<8x128xi1>
    %23 = arith.ori %17, %22 : vector<8x128xi1>
    %c64_i32_0 = arith.constant 64 : i32
    %24 = vector.broadcast %c64_i32_0 : i32 to vector<8x128xi32>
    %25 = arith.cmpi sge, %0, %24 : vector<8x128xi32>
    %c96_i32_1 = arith.constant 96 : i32
    %26 = vector.broadcast %c96_i32_1 : i32 to vector<8x128xi32>
    %27 = arith.cmpi slt, %0, %26 : vector<8x128xi32>
    %28 = arith.andi %25, %27 : vector<8x128xi1>
    %29 = tpu.iota {dimensions = array<i32: 1>} : vector<8x32xi32>
    %c16_i32_2 = arith.constant 16 : i32
    %30 = vector.broadcast %c16_i32_2 : i32 to vector<8x32xi32>
    %31 = arith.cmpi sge, %29, %30 : vector<8x32xi32>
    %c0 = arith.constant 0 : index
    %c0_3 = arith.constant 0 : index
    %32 = vector.load %arg1[%c0, %c0_3] : memref<64x32xf32, #tpu.memory_space<vmem>>, vector<64x32xf32>
    %c0_4 = arith.constant 0 : index
    %c0_5 = arith.constant 0 : index
    %33 = vector.load %arg2[%c0_4, %c0_5] : memref<32x128xf32, #tpu.memory_space<vmem>>, vector<32x128xf32>
    %cst = arith.constant dense<0.000000e+00> : vector<64x128xf32>
    %34 = tpu.matmul %32, %33, %cst {dimension_numbers = #tpu.dot_dimension_numbers<[1], [0], [0], [1], [0, 0, 1, 1], [], []>} : vector<64x32xf32>, vector<32x128xf32>, vector<64x128xf32> -> vector<64x128xf32>
    %c0_6 = arith.constant 0 : index
    %c0_7 = arith.constant 0 : index
    %35 = vector.load %arg4[%c0_6, %c0_7] : memref<1x128xf32, #tpu.memory_space<vmem>>, vector<1x128xf32>
    %36 = vector.broadcast %35 : vector<1x128xf32> to vector<64x128xf32>
    %37 = arith.addf %34, %36 : vector<64x128xf32>
    %38 = vector.shape_cast %37 : vector<64x128xf32> to vector<8x8x128xf32>
    %c0_8 = arith.constant 0 : index
    %c0_9 = arith.constant 0 : index
    %c0_10 = arith.constant 0 : index
    %39 = vector.load %arg13[%c0_8, %c0_9, %c0_10] : memref<8x8x128xf32, #tpu.memory_space<vmem>>, vector<8x8x128xf32>
    tpu.vector_store %arg13[%c0_8, %c0_9, %c0_10], %38 {strides = array<i32>} : memref<8x8x128xf32, #tpu.memory_space<vmem>>, vector<8x8x128xf32>,
    %c0_11 = arith.constant 0 : index
    %c0_12 = arith.constant 0 : index
    %c0_13 = arith.constant 0 : index
    %40 = vector.load %arg13[%c0_11, %c0_12, %c0_13] : memref<8x8x128xf32, #tpu.memory_space<vmem>>, vector<1x8x128xf32>
    %41 = vector.shape_cast %40 : vector<1x8x128xf32> to vector<8x128xf32>
    %c7 = arith.constant 7 : index
    %c0_14 = arith.constant 0 : index
    %c0_15 = arith.constant 0 : index
    %42 = vector.load %arg13[%c7, %c0_14, %c0_15] : memref<8x8x128xf32, #tpu.memory_space<vmem>>, vector<1x8x128xf32>
    %43 = vector.shape_cast %42 : vector<1x8x128xf32> to vector<8x128xf32>
    %44 = arith.select %23, %41, %43 : vector<8x128xi1>, vector<8x128xf32>
    %c0_16 = arith.constant 0 : index
    %c0_17 = arith.constant 0 : index
    %c0_18 = arith.constant 0 : index
    %45 = vector.load %arg13[%c0_16, %c0_17, %c0_18] : memref<8x8x128xf32, #tpu.memory_space<vmem>>, vector<1x8x128xf32>
    %46 = vector.shape_cast %45 : vector<1x8x128xf32> to vector<8x128xf32>
    %47 = vector.shape_cast %44 : vector<8x128xf32> to vector<1x8x128xf32>
    tpu.vector_store %arg13[%c0_16, %c0_17, %c0_18], %47 {strides = array<i32>} : memref<8x8x128xf32, #tpu.memory_space<vmem>>, vector<1x8x128xf32>,
    %48 = arith.select %23, %43, %41 : vector<8x128xi1>, vector<8x128xf32>
    %c7_19 = arith.constant 7 : index
    %c0_20 = arith.constant 0 : index
    %c0_21 = arith.constant 0 : index
    %49 = vector.load %arg13[%c7_19, %c0_20, %c0_21] : memref<8x8x128xf32, #tpu.memory_space<vmem>>, vector<1x8x128xf32>
    %50 = vector.shape_cast %49 : vector<1x8x128xf32> to vector<8x128xf32>
    %51 = vector.shape_cast %48 : vector<8x128xf32> to vector<1x8x128xf32>
    tpu.vector_store %arg13[%c7_19, %c0_20, %c0_21], %51 {strides = array<i32>} : memref<8x8x128xf32, #tpu.memory_space<vmem>>, vector<1x8x128xf32>,
    %c1 = arith.constant 1 : index
    %c0_22 = arith.constant 0 : index
    %c0_23 = arith.constant 0 : index
    %52 = vector.load %arg13[%c1, %c0_22, %c0_23] : memref<8x8x128xf32, #tpu.memory_space<vmem>>, vector<1x8x128xf32>
    %53 = vector.shape_cast %52 : vector<1x8x128xf32> to vector<8x128xf32>
    %c6 = arith.constant 6 : index
    %c0_24 = arith.constant 0 : index
    %c0_25 = arith.constant 0 : index
    %54 = vector.load %arg13[%c6, %c0_24, %c0_25] : memref<8x8x128xf32, #tpu.memory_space<vmem>>, vector<1x8x128xf32>
    %55 = vector.shape_cast %54 : vector<1x8x128xf32> to vector<8x128xf32>
    %56 = arith.select %23, %53, %55 : vector<8x128xi1>, vector<8x128xf32>
    %c1_26 = arith.constant 1 : index
    %c0_27 = arith.constant 0 : index
    %c0_28 = arith.constant 0 : index
    %57 = vector.load %arg13[%c1_26, %c0_27, %c0_28] : memref<8x8x128xf32, #tpu.memory_space<vmem>>, vector<1x8x128xf32>
    %58 = vector.shape_cast %57 : vector<1x8x128xf32> to vector<8x128xf32>
    %59 = vector.shape_cast %56 : vector<8x128xf32> to vector<1x8x128xf32>
    tpu.vector_store %arg13[%c1_26, %c0_27, %c0_28], %59 {strides = array<i32>} : memref<8x8x128xf32, #tpu.memory_space<vmem>>, vector<1x8x128xf32>,
    %60 = arith.select %23, %55, %53 : vector<8x128xi1>, vector<8x128xf32>
    %c6_29 = arith.constant 6 : index
    %c0_30 = arith.constant 0 : index
    %c0_31 = arith.constant 0 : index
    %61 = vector.load %arg13[%c6_29, %c0_30, %c0_31] : memref<8x8x128xf32, #tpu.memory_space<vmem>>, vector<1x8x128xf32>
    %62 = vector.shape_cast %61 : vector<1x8x128xf32> to vector<8x128xf32>
    %63 = vector.shape_cast %60 : vector<8x128xf32> to vector<1x8x128xf32>
    tpu.vector_store %arg13[%c6_29, %c0_30, %c0_31], %63 {strides = array<i32>} : memref<8x8x128xf32, #tpu.memory_space<vmem>>, vector<1x8x128xf32>,
    %c2 = arith.constant 2 : index
    %c0_32 = arith.constant 0 : index
    %c0_33 = arith.constant 0 : index
    %64 = vector.load %arg13[%c2, %c0_32, %c0_33] : memref<8x8x128xf32, #tpu.memory_space<vmem>>, vector<1x8x128xf32>
    %65 = vector.shape_cast %64 : vector<1x8x128xf32> to vector<8x128xf32>
    %c5 = arith.constant 5 : index
    %c0_34 = arith.constant 0 : index
    %c0_35 = arith.constant 0 : index
    %66 = vector.load %arg13[%c5, %c0_34, %c0_35] : memref<8x8x128xf32, #tpu.memory_space<vmem>>, vector<1x8x128xf32>
    %67 = vector.shape_cast %66 : vector<1x8x128xf32> to vector<8x128xf32>
    %68 = arith.select %23, %65, %67 : vector<8x128xi1>, vector<8x128xf32>
    %c2_36 = arith.constant 2 : index
    %c0_37 = arith.constant 0 : index
    %c0_38 = arith.constant 0 : index
    %69 = vector.load %arg13[%c2_36, %c0_37, %c0_38] : memref<8x8x128xf32, #tpu.memory_space<vmem>>, vector<1x8x128xf32>
    %70 = vector.shape_cast %69 : vector<1x8x128xf32> to vector<8x128xf32>
    %71 = vector.shape_cast %68 : vector<8x128xf32> to vector<1x8x128xf32>
    tpu.vector_store %arg13[%c2_36, %c0_37, %c0_38], %71 {strides = array<i32>} : memref<8x8x128xf32, #tpu.memory_space<vmem>>, vector<1x8x128xf32>,
    %72 = arith.select %23, %67, %65 : vector<8x128xi1>, vector<8x128xf32>
    %c5_39 = arith.constant 5 : index
    %c0_40 = arith.constant 0 : index
    %c0_41 = arith.constant 0 : index
    %73 = vector.load %arg13[%c5_39, %c0_40, %c0_41] : memref<8x8x128xf32, #tpu.memory_space<vmem>>, vector<1x8x128xf32>
    %74 = vector.shape_cast %73 : vector<1x8x128xf32> to vector<8x128xf32>
    %75 = vector.shape_cast %72 : vector<8x128xf32> to vector<1x8x128xf32>
    tpu.vector_store %arg13[%c5_39, %c0_40, %c0_41], %75 {strides = array<i32>} : memref<8x8x128xf32, #tpu.memory_space<vmem>>, vector<1x8x128xf32>,
    %c3 = arith.constant 3 : index
    %c0_42 = arith.constant 0 : index
    %c0_43 = arith.constant 0 : index
    %76 = vector.load %arg13[%c3, %c0_42, %c0_43] : memref<8x8x128xf32, #tpu.memory_space<vmem>>, vector<1x8x128xf32>
    %77 = vector.shape_cast %76 : vector<1x8x128xf32> to vector<8x128xf32>
    %c4 = arith.constant 4 : index
    %c0_44 = arith.constant 0 : index
    %c0_45 = arith.constant 0 : index
    %78 = vector.load %arg13[%c4, %c0_44, %c0_45] : memref<8x8x128xf32, #tpu.memory_space<vmem>>, vector<1x8x128xf32>
    %79 = vector.shape_cast %78 : vector<1x8x128xf32> to vector<8x128xf32>
    %80 = arith.select %23, %77, %79 : vector<8x128xi1>, vector<8x128xf32>
    %c3_46 = arith.constant 3 : index
    %c0_47 = arith.constant 0 : index
    %c0_48 = arith.constant 0 : index
    %81 = vector.load %arg13[%c3_46, %c0_47, %c0_48] : memref<8x8x128xf32, #tpu.memory_space<vmem>>, vector<1x8x128xf32>
    %82 = vector.shape_cast %81 : vector<1x8x128xf32> to vector<8x128xf32>
    %83 = vector.shape_cast %80 : vector<8x128xf32> to vector<1x8x128xf32>
    tpu.vector_store %arg13[%c3_46, %c0_47, %c0_48], %83 {strides = array<i32>} : memref<8x8x128xf32, #tpu.memory_space<vmem>>, vector<1x8x128xf32>,
    %84 = arith.select %23, %79, %77 : vector<8x128xi1>, vector<8x128xf32>
    %c4_49 = arith.constant 4 : index
    %c0_50 = arith.constant 0 : index
    %c0_51 = arith.constant 0 : index
    %85 = vector.load %arg13[%c4_49, %c0_50, %c0_51] : memref<8x8x128xf32, #tpu.memory_space<vmem>>, vector<1x8x128xf32>
    %86 = vector.shape_cast %85 : vector<1x8x128xf32> to vector<8x128xf32>
    %87 = vector.shape_cast %84 : vector<8x128xf32> to vector<1x8x128xf32>
    tpu.vector_store %arg13[%c4_49, %c0_50, %c0_51], %87 {strides = array<i32>} : memref<8x8x128xf32, #tpu.memory_space<vmem>>, vector<1x8x128xf32>,
    %c0_52 = arith.constant 0 : index
    %c0_53 = arith.constant 0 : index
    %88 = vector.load %arg3[%c0_52, %c0_53] : memref<32x128xf32, #tpu.memory_space<vmem>>, vector<32x128xf32>
    %cst_54 = arith.constant 0.000000e+00 : f32
    %89 = vector.broadcast %cst_54 : f32 to vector<8x32xf32>
    %cst_55 = arith.constant 0.000000e+00 : f32
    %90 = vector.broadcast %cst_55 : f32 to vector<8x32xf32>
    %c0_i32_56 = arith.constant 0 : i32
    %91 = arith.index_cast %c0_i32_56 : i32 to index
    %c0_57 = arith.constant 0 : index
    %c0_58 = arith.constant 0 : index
    %92 = vector.load %arg13[%91, %c0_57, %c0_58] : memref<8x8x128xf32, #tpu.memory_space<vmem>>, vector<1x8x128xf32>
    %93 = vector.shape_cast %92 : vector<1x8x128xf32> to vector<8x128xf32>
    %cst_59 = arith.constant dense<0.000000e+00> : vector<8x128xf32>
    %94 = tpu.matmul %89, %88, %cst_59 {dimension_numbers = #tpu.dot_dimension_numbers<[1], [0], [0], [1], [0, 0, 1, 1], [], []>} : vector<8x32xf32>, vector<32x128xf32>, vector<8x128xf32> -> vector<8x128xf32>
    %95 = arith.addf %93, %94 : vector<8x128xf32>
    %cst_60 = arith.constant 5.000000e-01 : f32
    %96 = vector.broadcast %cst_60 : f32 to vector<8x128xf32>
    %97 = arith.mulf %95, %96 : vector<8x128xf32>
    %98 = arith.select %28, %95, %97 : vector<8x128xi1>, vector<8x128xf32>
    %99 = math.tanh %98 : vector<8x128xf32>
    %cst_61 = arith.constant 5.000000e-01 : f32
    %100 = vector.broadcast %cst_61 : f32 to vector<8x128xf32>
    %101 = arith.mulf %99, %100 : vector<8x128xf32>
    %cst_62 = arith.constant 5.000000e-01 : f32
    %102 = vector.broadcast %cst_62 : f32 to vector<8x128xf32>
    %103 = arith.addf %101, %102 : vector<8x128xf32>
    %104 = arith.select %28, %99, %103 : vector<8x128xi1>, vector<8x128xf32>
    %105 = vector.extract_strided_slice %104 {offsets = [0, 0], sizes = [8, 32], strides = [1, 1]} : vector<8x128xf32> to vector<8x32xf32>
    %106 = vector.extract_strided_slice %104 {offsets = [0, 32], sizes = [8, 32], strides = [1, 1]} : vector<8x128xf32> to vector<8x32xf32>
    %107 = vector.extract_strided_slice %104 {offsets = [0, 64], sizes = [8, 32], strides = [1, 1]} : vector<8x128xf32> to vector<8x32xf32>
    %108 = vector.extract_strided_slice %104 {offsets = [0, 96], sizes = [8, 32], strides = [1, 1]} : vector<8x128xf32> to vector<8x32xf32>
    %109 = arith.mulf %106, %90 : vector<8x32xf32>
    %110 = arith.mulf %105, %107 : vector<8x32xf32>
    %111 = arith.addf %109, %110 : vector<8x32xf32>
    %112 = math.tanh %111 : vector<8x32xf32>
    %113 = arith.mulf %108, %112 : vector<8x32xf32>
    %114 = arith.index_cast %c0_i32_56 : i32 to index
    %c0_63 = arith.constant 0 : index
    %c0_64 = arith.constant 0 : index
    %115 = vector.load %arg0[%114, %c0_63, %c0_64] : memref<8x8x32xf32, #tpu.memory_space<vmem>>, vector<1x8x32xf32>
    %116 = vector.shape_cast %115 : vector<1x8x32xf32> to vector<8x32xf32>
    %117 = arith.mulf %113, %116 : vector<8x32xf32>
    %118 = arith.index_cast %c0_i32_56 : i32 to index
    %c0_65 = arith.constant 0 : index
    %c0_66 = arith.constant 0 : index
    %119 = vector.load %arg14[%118, %c0_65, %c0_66] : memref<8x8x32xf32, #tpu.memory_space<vmem>>, vector<1x8x32xf32>
    %120 = vector.shape_cast %119 : vector<1x8x32xf32> to vector<8x32xf32>
    %121 = vector.shape_cast %117 : vector<8x32xf32> to vector<1x8x32xf32>
    tpu.vector_store %arg14[%118, %c0_65, %c0_66], %121 {strides = array<i32>} : memref<8x8x32xf32, #tpu.memory_space<vmem>>, vector<1x8x32xf32>,
    %cst_67 = arith.constant 0.000000e+00 : f32
    %122 = vector.broadcast %cst_67 : f32 to vector<8x32xf32>
    %123 = arith.cmpf ogt, %116, %122 : vector<8x32xf32>
    %124 = arith.select %123, %113, %89 : vector<8x32xi1>, vector<8x32xf32>
    %125 = arith.select %123, %111, %90 : vector<8x32xi1>, vector<8x32xf32>
    %c1_i32 = arith.constant 1 : i32
    %126 = arith.index_cast %c1_i32 : i32 to index
    %c0_68 = arith.constant 0 : index
    %c0_69 = arith.constant 0 : index
    %127 = vector.load %arg13[%126, %c0_68, %c0_69] : memref<8x8x128xf32, #tpu.memory_space<vmem>>, vector<1x8x128xf32>
    %128 = vector.shape_cast %127 : vector<1x8x128xf32> to vector<8x128xf32>
    %cst_70 = arith.constant dense<0.000000e+00> : vector<8x128xf32>
    %129 = tpu.matmul %124, %88, %cst_70 {dimension_numbers = #tpu.dot_dimension_numbers<[1], [0], [0], [1], [0, 0, 1, 1], [], []>} : vector<8x32xf32>, vector<32x128xf32>, vector<8x128xf32> -> vector<8x128xf32>
    %130 = arith.addf %128, %129 : vector<8x128xf32>
    %cst_71 = arith.constant 5.000000e-01 : f32
    %131 = vector.broadcast %cst_71 : f32 to vector<8x128xf32>
    %132 = arith.mulf %130, %131 : vector<8x128xf32>
    %133 = arith.select %28, %130, %132 : vector<8x128xi1>, vector<8x128xf32>
    %134 = math.tanh %133 : vector<8x128xf32>
    %cst_72 = arith.constant 5.000000e-01 : f32
    %135 = vector.broadcast %cst_72 : f32 to vector<8x128xf32>
    %136 = arith.mulf %134, %135 : vector<8x128xf32>
    %cst_73 = arith.constant 5.000000e-01 : f32
    %137 = vector.broadcast %cst_73 : f32 to vector<8x128xf32>
    %138 = arith.addf %136, %137 : vector<8x128xf32>
    %139 = arith.select %28, %134, %138 : vector<8x128xi1>, vector<8x128xf32>
    %140 = vector.extract_strided_slice %139 {offsets = [0, 0], sizes = [8, 32], strides = [1, 1]} : vector<8x128xf32> to vector<8x32xf32>
    %141 = vector.extract_strided_slice %139 {offsets = [0, 32], sizes = [8, 32], strides = [1, 1]} : vector<8x128xf32> to vector<8x32xf32>
    %142 = vector.extract_strided_slice %139 {offsets = [0, 64], sizes = [8, 32], strides = [1, 1]} : vector<8x128xf32> to vector<8x32xf32>
    %143 = vector.extract_strided_slice %139 {offsets = [0, 96], sizes = [8, 32], strides = [1, 1]} : vector<8x128xf32> to vector<8x32xf32>
    %144 = arith.mulf %141, %125 : vector<8x32xf32>
    %145 = arith.mulf %140, %142 : vector<8x32xf32>
    %146 = arith.addf %144, %145 : vector<8x32xf32>
    %147 = math.tanh %146 : vector<8x32xf32>
    %148 = arith.mulf %143, %147 : vector<8x32xf32>
    %149 = arith.index_cast %c1_i32 : i32 to index
    %c0_74 = arith.constant 0 : index
    %c0_75 = arith.constant 0 : index
    %150 = vector.load %arg0[%149, %c0_74, %c0_75] : memref<8x8x32xf32, #tpu.memory_space<vmem>>, vector<1x8x32xf32>
    %151 = vector.shape_cast %150 : vector<1x8x32xf32> to vector<8x32xf32>
    %152 = arith.mulf %148, %151 : vector<8x32xf32>
    %153 = arith.index_cast %c1_i32 : i32 to index
    %c0_76 = arith.constant 0 : index
    %c0_77 = arith.constant 0 : index
    %154 = vector.load %arg14[%153, %c0_76, %c0_77] : memref<8x8x32xf32, #tpu.memory_space<vmem>>, vector<1x8x32xf32>
    %155 = vector.shape_cast %154 : vector<1x8x32xf32> to vector<8x32xf32>
    %156 = vector.shape_cast %152 : vector<8x32xf32> to vector<1x8x32xf32>
    tpu.vector_store %arg14[%153, %c0_76, %c0_77], %156 {strides = array<i32>} : memref<8x8x32xf32, #tpu.memory_space<vmem>>, vector<1x8x32xf32>,
    %cst_78 = arith.constant 0.000000e+00 : f32
    %157 = vector.broadcast %cst_78 : f32 to vector<8x32xf32>
    %158 = arith.cmpf ogt, %151, %157 : vector<8x32xf32>
    %159 = arith.select %158, %148, %124 : vector<8x32xi1>, vector<8x32xf32>
    %160 = arith.select %158, %146, %125 : vector<8x32xi1>, vector<8x32xf32>
    %c2_i32 = arith.constant 2 : i32
    %161 = arith.index_cast %c2_i32 : i32 to index
    %c0_79 = arith.constant 0 : index
    %c0_80 = arith.constant 0 : index
    %162 = vector.load %arg13[%161, %c0_79, %c0_80] : memref<8x8x128xf32, #tpu.memory_space<vmem>>, vector<1x8x128xf32>
    %163 = vector.shape_cast %162 : vector<1x8x128xf32> to vector<8x128xf32>
    %cst_81 = arith.constant dense<0.000000e+00> : vector<8x128xf32>
    %164 = tpu.matmul %159, %88, %cst_81 {dimension_numbers = #tpu.dot_dimension_numbers<[1], [0], [0], [1], [0, 0, 1, 1], [], []>} : vector<8x32xf32>, vector<32x128xf32>, vector<8x128xf32> -> vector<8x128xf32>
    %165 = arith.addf %163, %164 : vector<8x128xf32>
    %cst_82 = arith.constant 5.000000e-01 : f32
    %166 = vector.broadcast %cst_82 : f32 to vector<8x128xf32>
    %167 = arith.mulf %165, %166 : vector<8x128xf32>
    %168 = arith.select %28, %165, %167 : vector<8x128xi1>, vector<8x128xf32>
    %169 = math.tanh %168 : vector<8x128xf32>
    %cst_83 = arith.constant 5.000000e-01 : f32
    %170 = vector.broadcast %cst_83 : f32 to vector<8x128xf32>
    %171 = arith.mulf %169, %170 : vector<8x128xf32>
    %cst_84 = arith.constant 5.000000e-01 : f32
    %172 = vector.broadcast %cst_84 : f32 to vector<8x128xf32>
    %173 = arith.addf %171, %172 : vector<8x128xf32>
    %174 = arith.select %28, %169, %173 : vector<8x128xi1>, vector<8x128xf32>
    %175 = vector.extract_strided_slice %174 {offsets = [0, 0], sizes = [8, 32], strides = [1, 1]} : vector<8x128xf32> to vector<8x32xf32>
    %176 = vector.extract_strided_slice %174 {offsets = [0, 32], sizes = [8, 32], strides = [1, 1]} : vector<8x128xf32> to vector<8x32xf32>
    %177 = vector.extract_strided_slice %174 {offsets = [0, 64], sizes = [8, 32], strides = [1, 1]} : vector<8x128xf32> to vector<8x32xf32>
    %178 = vector.extract_strided_slice %174 {offsets = [0, 96], sizes = [8, 32], strides = [1, 1]} : vector<8x128xf32> to vector<8x32xf32>
    %179 = arith.mulf %176, %160 : vector<8x32xf32>
    %180 = arith.mulf %175, %177 : vector<8x32xf32>
    %181 = arith.addf %179, %180 : vector<8x32xf32>
    %182 = math.tanh %181 : vector<8x32xf32>
    %183 = arith.mulf %178, %182 : vector<8x32xf32>
    %184 = arith.index_cast %c2_i32 : i32 to index
    %c0_85 = arith.constant 0 : index
    %c0_86 = arith.constant 0 : index
    %185 = vector.load %arg0[%184, %c0_85, %c0_86] : memref<8x8x32xf32, #tpu.memory_space<vmem>>, vector<1x8x32xf32>
    %186 = vector.shape_cast %185 : vector<1x8x32xf32> to vector<8x32xf32>
    %187 = arith.mulf %183, %186 : vector<8x32xf32>
    %188 = arith.index_cast %c2_i32 : i32 to index
    %c0_87 = arith.constant 0 : index
    %c0_88 = arith.constant 0 : index
    %189 = vector.load %arg14[%188, %c0_87, %c0_88] : memref<8x8x32xf32, #tpu.memory_space<vmem>>, vector<1x8x32xf32>
    %190 = vector.shape_cast %189 : vector<1x8x32xf32> to vector<8x32xf32>
    %191 = vector.shape_cast %187 : vector<8x32xf32> to vector<1x8x32xf32>
    tpu.vector_store %arg14[%188, %c0_87, %c0_88], %191 {strides = array<i32>} : memref<8x8x32xf32, #tpu.memory_space<vmem>>, vector<1x8x32xf32>,
    %cst_89 = arith.constant 0.000000e+00 : f32
    %192 = vector.broadcast %cst_89 : f32 to vector<8x32xf32>
    %193 = arith.cmpf ogt, %186, %192 : vector<8x32xf32>
    %194 = arith.select %193, %183, %159 : vector<8x32xi1>, vector<8x32xf32>
    %195 = arith.select %193, %181, %160 : vector<8x32xi1>, vector<8x32xf32>
    %c3_i32 = arith.constant 3 : i32
    %196 = arith.index_cast %c3_i32 : i32 to index
    %c0_90 = arith.constant 0 : index
    %c0_91 = arith.constant 0 : index
    %197 = vector.load %arg13[%196, %c0_90, %c0_91] : memref<8x8x128xf32, #tpu.memory_space<vmem>>, vector<1x8x128xf32>
    %198 = vector.shape_cast %197 : vector<1x8x128xf32> to vector<8x128xf32>
    %cst_92 = arith.constant dense<0.000000e+00> : vector<8x128xf32>
    %199 = tpu.matmul %194, %88, %cst_92 {dimension_numbers = #tpu.dot_dimension_numbers<[1], [0], [0], [1], [0, 0, 1, 1], [], []>} : vector<8x32xf32>, vector<32x128xf32>, vector<8x128xf32> -> vector<8x128xf32>
    %200 = arith.addf %198, %199 : vector<8x128xf32>
    %cst_93 = arith.constant 5.000000e-01 : f32
    %201 = vector.broadcast %cst_93 : f32 to vector<8x128xf32>
    %202 = arith.mulf %200, %201 : vector<8x128xf32>
    %203 = arith.select %28, %200, %202 : vector<8x128xi1>, vector<8x128xf32>
    %204 = math.tanh %203 : vector<8x128xf32>
    %cst_94 = arith.constant 5.000000e-01 : f32
    %205 = vector.broadcast %cst_94 : f32 to vector<8x128xf32>
    %206 = arith.mulf %204, %205 : vector<8x128xf32>
    %cst_95 = arith.constant 5.000000e-01 : f32
    %207 = vector.broadcast %cst_95 : f32 to vector<8x128xf32>
    %208 = arith.addf %206, %207 : vector<8x128xf32>
    %209 = arith.select %28, %204, %208 : vector<8x128xi1>, vector<8x128xf32>
    %210 = vector.extract_strided_slice %209 {offsets = [0, 0], sizes = [8, 32], strides = [1, 1]} : vector<8x128xf32> to vector<8x32xf32>
    %211 = vector.extract_strided_slice %209 {offsets = [0, 32], sizes = [8, 32], strides = [1, 1]} : vector<8x128xf32> to vector<8x32xf32>
    %212 = vector.extract_strided_slice %209 {offsets = [0, 64], sizes = [8, 32], strides = [1, 1]} : vector<8x128xf32> to vector<8x32xf32>
    %213 = vector.extract_strided_slice %209 {offsets = [0, 96], sizes = [8, 32], strides = [1, 1]} : vector<8x128xf32> to vector<8x32xf32>
    %214 = arith.mulf %211, %195 : vector<8x32xf32>
    %215 = arith.mulf %210, %212 : vector<8x32xf32>
    %216 = arith.addf %214, %215 : vector<8x32xf32>
    %217 = math.tanh %216 : vector<8x32xf32>
    %218 = arith.mulf %213, %217 : vector<8x32xf32>
    %219 = arith.index_cast %c3_i32 : i32 to index
    %c0_96 = arith.constant 0 : index
    %c0_97 = arith.constant 0 : index
    %220 = vector.load %arg0[%219, %c0_96, %c0_97] : memref<8x8x32xf32, #tpu.memory_space<vmem>>, vector<1x8x32xf32>
    %221 = vector.shape_cast %220 : vector<1x8x32xf32> to vector<8x32xf32>
    %222 = arith.mulf %218, %221 : vector<8x32xf32>
    %223 = arith.index_cast %c3_i32 : i32 to index
    %c0_98 = arith.constant 0 : index
    %c0_99 = arith.constant 0 : index
    %224 = vector.load %arg14[%223, %c0_98, %c0_99] : memref<8x8x32xf32, #tpu.memory_space<vmem>>, vector<1x8x32xf32>
    %225 = vector.shape_cast %224 : vector<1x8x32xf32> to vector<8x32xf32>
    %226 = vector.shape_cast %222 : vector<8x32xf32> to vector<1x8x32xf32>
    tpu.vector_store %arg14[%223, %c0_98, %c0_99], %226 {strides = array<i32>} : memref<8x8x32xf32, #tpu.memory_space<vmem>>, vector<1x8x32xf32>,
    %cst_100 = arith.constant 0.000000e+00 : f32
    %227 = vector.broadcast %cst_100 : f32 to vector<8x32xf32>
    %228 = arith.cmpf ogt, %221, %227 : vector<8x32xf32>
    %229 = arith.select %228, %218, %194 : vector<8x32xi1>, vector<8x32xf32>
    %230 = arith.select %228, %216, %195 : vector<8x32xi1>, vector<8x32xf32>
    %c4_i32 = arith.constant 4 : i32
    %231 = arith.index_cast %c4_i32 : i32 to index
    %c0_101 = arith.constant 0 : index
    %c0_102 = arith.constant 0 : index
    %232 = vector.load %arg13[%231, %c0_101, %c0_102] : memref<8x8x128xf32, #tpu.memory_space<vmem>>, vector<1x8x128xf32>
    %233 = vector.shape_cast %232 : vector<1x8x128xf32> to vector<8x128xf32>
    %cst_103 = arith.constant dense<0.000000e+00> : vector<8x128xf32>
    %234 = tpu.matmul %229, %88, %cst_103 {dimension_numbers = #tpu.dot_dimension_numbers<[1], [0], [0], [1], [0, 0, 1, 1], [], []>} : vector<8x32xf32>, vector<32x128xf32>, vector<8x128xf32> -> vector<8x128xf32>
    %235 = arith.addf %233, %234 : vector<8x128xf32>
    %cst_104 = arith.constant 5.000000e-01 : f32
    %236 = vector.broadcast %cst_104 : f32 to vector<8x128xf32>
    %237 = arith.mulf %235, %236 : vector<8x128xf32>
    %238 = arith.select %28, %235, %237 : vector<8x128xi1>, vector<8x128xf32>
    %239 = math.tanh %238 : vector<8x128xf32>
    %cst_105 = arith.constant 5.000000e-01 : f32
    %240 = vector.broadcast %cst_105 : f32 to vector<8x128xf32>
    %241 = arith.mulf %239, %240 : vector<8x128xf32>
    %cst_106 = arith.constant 5.000000e-01 : f32
    %242 = vector.broadcast %cst_106 : f32 to vector<8x128xf32>
    %243 = arith.addf %241, %242 : vector<8x128xf32>
    %244 = arith.select %28, %239, %243 : vector<8x128xi1>, vector<8x128xf32>
    %245 = vector.extract_strided_slice %244 {offsets = [0, 0], sizes = [8, 32], strides = [1, 1]} : vector<8x128xf32> to vector<8x32xf32>
    %246 = vector.extract_strided_slice %244 {offsets = [0, 32], sizes = [8, 32], strides = [1, 1]} : vector<8x128xf32> to vector<8x32xf32>
    %247 = vector.extract_strided_slice %244 {offsets = [0, 64], sizes = [8, 32], strides = [1, 1]} : vector<8x128xf32> to vector<8x32xf32>
    %248 = vector.extract_strided_slice %244 {offsets = [0, 96], sizes = [8, 32], strides = [1, 1]} : vector<8x128xf32> to vector<8x32xf32>
    %249 = arith.mulf %246, %230 : vector<8x32xf32>
    %250 = arith.mulf %245, %247 : vector<8x32xf32>
    %251 = arith.addf %249, %250 : vector<8x32xf32>
    %252 = math.tanh %251 : vector<8x32xf32>
    %253 = arith.mulf %248, %252 : vector<8x32xf32>
    %254 = arith.index_cast %c4_i32 : i32 to index
    %c0_107 = arith.constant 0 : index
    %c0_108 = arith.constant 0 : index
    %255 = vector.load %arg0[%254, %c0_107, %c0_108] : memref<8x8x32xf32, #tpu.memory_space<vmem>>, vector<1x8x32xf32>
    %256 = vector.shape_cast %255 : vector<1x8x32xf32> to vector<8x32xf32>
    %257 = arith.mulf %253, %256 : vector<8x32xf32>
    %258 = arith.index_cast %c4_i32 : i32 to index
    %c0_109 = arith.constant 0 : index
    %c0_110 = arith.constant 0 : index
    %259 = vector.load %arg14[%258, %c0_109, %c0_110] : memref<8x8x32xf32, #tpu.memory_space<vmem>>, vector<1x8x32xf32>
    %260 = vector.shape_cast %259 : vector<1x8x32xf32> to vector<8x32xf32>
    %261 = vector.shape_cast %257 : vector<8x32xf32> to vector<1x8x32xf32>
    tpu.vector_store %arg14[%258, %c0_109, %c0_110], %261 {strides = array<i32>} : memref<8x8x32xf32, #tpu.memory_space<vmem>>, vector<1x8x32xf32>,
    %cst_111 = arith.constant 0.000000e+00 : f32
    %262 = vector.broadcast %cst_111 : f32 to vector<8x32xf32>
    %263 = arith.cmpf ogt, %256, %262 : vector<8x32xf32>
    %264 = arith.select %263, %253, %229 : vector<8x32xi1>, vector<8x32xf32>
    %265 = arith.select %263, %251, %230 : vector<8x32xi1>, vector<8x32xf32>
    %c5_i32 = arith.constant 5 : i32
    %266 = arith.index_cast %c5_i32 : i32 to index
    %c0_112 = arith.constant 0 : index
    %c0_113 = arith.constant 0 : index
    %267 = vector.load %arg13[%266, %c0_112, %c0_113] : memref<8x8x128xf32, #tpu.memory_space<vmem>>, vector<1x8x128xf32>
    %268 = vector.shape_cast %267 : vector<1x8x128xf32> to vector<8x128xf32>
    %cst_114 = arith.constant dense<0.000000e+00> : vector<8x128xf32>
    %269 = tpu.matmul %264, %88, %cst_114 {dimension_numbers = #tpu.dot_dimension_numbers<[1], [0], [0], [1], [0, 0, 1, 1], [], []>} : vector<8x32xf32>, vector<32x128xf32>, vector<8x128xf32> -> vector<8x128xf32>
    %270 = arith.addf %268, %269 : vector<8x128xf32>
    %cst_115 = arith.constant 5.000000e-01 : f32
    %271 = vector.broadcast %cst_115 : f32 to vector<8x128xf32>
    %272 = arith.mulf %270, %271 : vector<8x128xf32>
    %273 = arith.select %28, %270, %272 : vector<8x128xi1>, vector<8x128xf32>
    %274 = math.tanh %273 : vector<8x128xf32>
    %cst_116 = arith.constant 5.000000e-01 : f32
    %275 = vector.broadcast %cst_116 : f32 to vector<8x128xf32>
    %276 = arith.mulf %274, %275 : vector<8x128xf32>
    %cst_117 = arith.constant 5.000000e-01 : f32
    %277 = vector.broadcast %cst_117 : f32 to vector<8x128xf32>
    %278 = arith.addf %276, %277 : vector<8x128xf32>
    %279 = arith.select %28, %274, %278 : vector<8x128xi1>, vector<8x128xf32>
    %280 = vector.extract_strided_slice %279 {offsets = [0, 0], sizes = [8, 32], strides = [1, 1]} : vector<8x128xf32> to vector<8x32xf32>
    %281 = vector.extract_strided_slice %279 {offsets = [0, 32], sizes = [8, 32], strides = [1, 1]} : vector<8x128xf32> to vector<8x32xf32>
    %282 = vector.extract_strided_slice %279 {offsets = [0, 64], sizes = [8, 32], strides = [1, 1]} : vector<8x128xf32> to vector<8x32xf32>
    %283 = vector.extract_strided_slice %279 {offsets = [0, 96], sizes = [8, 32], strides = [1, 1]} : vector<8x128xf32> to vector<8x32xf32>
    %284 = arith.mulf %281, %265 : vector<8x32xf32>
    %285 = arith.mulf %280, %282 : vector<8x32xf32>
    %286 = arith.addf %284, %285 : vector<8x32xf32>
    %287 = math.tanh %286 : vector<8x32xf32>
    %288 = arith.mulf %283, %287 : vector<8x32xf32>
    %289 = arith.index_cast %c5_i32 : i32 to index
    %c0_118 = arith.constant 0 : index
    %c0_119 = arith.constant 0 : index
    %290 = vector.load %arg0[%289, %c0_118, %c0_119] : memref<8x8x32xf32, #tpu.memory_space<vmem>>, vector<1x8x32xf32>
    %291 = vector.shape_cast %290 : vector<1x8x32xf32> to vector<8x32xf32>
    %292 = arith.mulf %288, %291 : vector<8x32xf32>
    %293 = arith.index_cast %c5_i32 : i32 to index
    %c0_120 = arith.constant 0 : index
    %c0_121 = arith.constant 0 : index
    %294 = vector.load %arg14[%293, %c0_120, %c0_121] : memref<8x8x32xf32, #tpu.memory_space<vmem>>, vector<1x8x32xf32>
    %295 = vector.shape_cast %294 : vector<1x8x32xf32> to vector<8x32xf32>
    %296 = vector.shape_cast %292 : vector<8x32xf32> to vector<1x8x32xf32>
    tpu.vector_store %arg14[%293, %c0_120, %c0_121], %296 {strides = array<i32>} : memref<8x8x32xf32, #tpu.memory_space<vmem>>, vector<1x8x32xf32>,
    %cst_122 = arith.constant 0.000000e+00 : f32
    %297 = vector.broadcast %cst_122 : f32 to vector<8x32xf32>
    %298 = arith.cmpf ogt, %291, %297 : vector<8x32xf32>
    %299 = arith.select %298, %288, %264 : vector<8x32xi1>, vector<8x32xf32>
    %300 = arith.select %298, %286, %265 : vector<8x32xi1>, vector<8x32xf32>
    %c6_i32 = arith.constant 6 : i32
    %301 = arith.index_cast %c6_i32 : i32 to index
    %c0_123 = arith.constant 0 : index
    %c0_124 = arith.constant 0 : index
    %302 = vector.load %arg13[%301, %c0_123, %c0_124] : memref<8x8x128xf32, #tpu.memory_space<vmem>>, vector<1x8x128xf32>
    %303 = vector.shape_cast %302 : vector<1x8x128xf32> to vector<8x128xf32>
    %cst_125 = arith.constant dense<0.000000e+00> : vector<8x128xf32>
    %304 = tpu.matmul %299, %88, %cst_125 {dimension_numbers = #tpu.dot_dimension_numbers<[1], [0], [0], [1], [0, 0, 1, 1], [], []>} : vector<8x32xf32>, vector<32x128xf32>, vector<8x128xf32> -> vector<8x128xf32>
    %305 = arith.addf %303, %304 : vector<8x128xf32>
    %cst_126 = arith.constant 5.000000e-01 : f32
    %306 = vector.broadcast %cst_126 : f32 to vector<8x128xf32>
    %307 = arith.mulf %305, %306 : vector<8x128xf32>
    %308 = arith.select %28, %305, %307 : vector<8x128xi1>, vector<8x128xf32>
    %309 = math.tanh %308 : vector<8x128xf32>
    %cst_127 = arith.constant 5.000000e-01 : f32
    %310 = vector.broadcast %cst_127 : f32 to vector<8x128xf32>
    %311 = arith.mulf %309, %310 : vector<8x128xf32>
    %cst_128 = arith.constant 5.000000e-01 : f32
    %312 = vector.broadcast %cst_128 : f32 to vector<8x128xf32>
    %313 = arith.addf %311, %312 : vector<8x128xf32>
    %314 = arith.select %28, %309, %313 : vector<8x128xi1>, vector<8x128xf32>
    %315 = vector.extract_strided_slice %314 {offsets = [0, 0], sizes = [8, 32], strides = [1, 1]} : vector<8x128xf32> to vector<8x32xf32>
    %316 = vector.extract_strided_slice %314 {offsets = [0, 32], sizes = [8, 32], strides = [1, 1]} : vector<8x128xf32> to vector<8x32xf32>
    %317 = vector.extract_strided_slice %314 {offsets = [0, 64], sizes = [8, 32], strides = [1, 1]} : vector<8x128xf32> to vector<8x32xf32>
    %318 = vector.extract_strided_slice %314 {offsets = [0, 96], sizes = [8, 32], strides = [1, 1]} : vector<8x128xf32> to vector<8x32xf32>
    %319 = arith.mulf %316, %300 : vector<8x32xf32>
    %320 = arith.mulf %315, %317 : vector<8x32xf32>
    %321 = arith.addf %319, %320 : vector<8x32xf32>
    %322 = math.tanh %321 : vector<8x32xf32>
    %323 = arith.mulf %318, %322 : vector<8x32xf32>
    %324 = arith.index_cast %c6_i32 : i32 to index
    %c0_129 = arith.constant 0 : index
    %c0_130 = arith.constant 0 : index
    %325 = vector.load %arg0[%324, %c0_129, %c0_130] : memref<8x8x32xf32, #tpu.memory_space<vmem>>, vector<1x8x32xf32>
    %326 = vector.shape_cast %325 : vector<1x8x32xf32> to vector<8x32xf32>
    %327 = arith.mulf %323, %326 : vector<8x32xf32>
    %328 = arith.index_cast %c6_i32 : i32 to index
    %c0_131 = arith.constant 0 : index
    %c0_132 = arith.constant 0 : index
    %329 = vector.load %arg14[%328, %c0_131, %c0_132] : memref<8x8x32xf32, #tpu.memory_space<vmem>>, vector<1x8x32xf32>
    %330 = vector.shape_cast %329 : vector<1x8x32xf32> to vector<8x32xf32>
    %331 = vector.shape_cast %327 : vector<8x32xf32> to vector<1x8x32xf32>
    tpu.vector_store %arg14[%328, %c0_131, %c0_132], %331 {strides = array<i32>} : memref<8x8x32xf32, #tpu.memory_space<vmem>>, vector<1x8x32xf32>,
    %cst_133 = arith.constant 0.000000e+00 : f32
    %332 = vector.broadcast %cst_133 : f32 to vector<8x32xf32>
    %333 = arith.cmpf ogt, %326, %332 : vector<8x32xf32>
    %334 = arith.select %333, %323, %299 : vector<8x32xi1>, vector<8x32xf32>
    %335 = arith.select %333, %321, %300 : vector<8x32xi1>, vector<8x32xf32>
    %c7_i32 = arith.constant 7 : i32
    %336 = arith.index_cast %c7_i32 : i32 to index
    %c0_134 = arith.constant 0 : index
    %c0_135 = arith.constant 0 : index
    %337 = vector.load %arg13[%336, %c0_134, %c0_135] : memref<8x8x128xf32, #tpu.memory_space<vmem>>, vector<1x8x128xf32>
    %338 = vector.shape_cast %337 : vector<1x8x128xf32> to vector<8x128xf32>
    %cst_136 = arith.constant dense<0.000000e+00> : vector<8x128xf32>
    %339 = tpu.matmul %334, %88, %cst_136 {dimension_numbers = #tpu.dot_dimension_numbers<[1], [0], [0], [1], [0, 0, 1, 1], [], []>} : vector<8x32xf32>, vector<32x128xf32>, vector<8x128xf32> -> vector<8x128xf32>
    %340 = arith.addf %338, %339 : vector<8x128xf32>
    %cst_137 = arith.constant 5.000000e-01 : f32
    %341 = vector.broadcast %cst_137 : f32 to vector<8x128xf32>
    %342 = arith.mulf %340, %341 : vector<8x128xf32>
    %343 = arith.select %28, %340, %342 : vector<8x128xi1>, vector<8x128xf32>
    %344 = math.tanh %343 : vector<8x128xf32>
    %cst_138 = arith.constant 5.000000e-01 : f32
    %345 = vector.broadcast %cst_138 : f32 to vector<8x128xf32>
    %346 = arith.mulf %344, %345 : vector<8x128xf32>
    %cst_139 = arith.constant 5.000000e-01 : f32
    %347 = vector.broadcast %cst_139 : f32 to vector<8x128xf32>
    %348 = arith.addf %346, %347 : vector<8x128xf32>
    %349 = arith.select %28, %344, %348 : vector<8x128xi1>, vector<8x128xf32>
    %350 = vector.extract_strided_slice %349 {offsets = [0, 0], sizes = [8, 32], strides = [1, 1]} : vector<8x128xf32> to vector<8x32xf32>
    %351 = vector.extract_strided_slice %349 {offsets = [0, 32], sizes = [8, 32], strides = [1, 1]} : vector<8x128xf32> to vector<8x32xf32>
    %352 = vector.extract_strided_slice %349 {offsets = [0, 64], sizes = [8, 32], strides = [1, 1]} : vector<8x128xf32> to vector<8x32xf32>
    %353 = vector.extract_strided_slice %349 {offsets = [0, 96], sizes = [8, 32], strides = [1, 1]} : vector<8x128xf32> to vector<8x32xf32>
    %354 = arith.mulf %351, %335 : vector<8x32xf32>
    %355 = arith.mulf %350, %352 : vector<8x32xf32>
    %356 = arith.addf %354, %355 : vector<8x32xf32>
    %357 = math.tanh %356 : vector<8x32xf32>
    %358 = arith.mulf %353, %357 : vector<8x32xf32>
    %359 = arith.index_cast %c7_i32 : i32 to index
    %c0_140 = arith.constant 0 : index
    %c0_141 = arith.constant 0 : index
    %360 = vector.load %arg0[%359, %c0_140, %c0_141] : memref<8x8x32xf32, #tpu.memory_space<vmem>>, vector<1x8x32xf32>
    %361 = vector.shape_cast %360 : vector<1x8x32xf32> to vector<8x32xf32>
    %362 = arith.mulf %358, %361 : vector<8x32xf32>
    %363 = arith.index_cast %c7_i32 : i32 to index
    %c0_142 = arith.constant 0 : index
    %c0_143 = arith.constant 0 : index
    %364 = vector.load %arg14[%363, %c0_142, %c0_143] : memref<8x8x32xf32, #tpu.memory_space<vmem>>, vector<1x8x32xf32>
    %365 = vector.shape_cast %364 : vector<1x8x32xf32> to vector<8x32xf32>
    %366 = vector.shape_cast %362 : vector<8x32xf32> to vector<1x8x32xf32>
    tpu.vector_store %arg14[%363, %c0_142, %c0_143], %366 {strides = array<i32>} : memref<8x8x32xf32, #tpu.memory_space<vmem>>, vector<1x8x32xf32>,
    %cst_144 = arith.constant 0.000000e+00 : f32
    %367 = vector.broadcast %cst_144 : f32 to vector<8x32xf32>
    %368 = arith.cmpf ogt, %361, %367 : vector<8x32xf32>
    %369 = arith.select %368, %358, %334 : vector<8x32xi1>, vector<8x32xf32>
    %370 = arith.select %368, %356, %335 : vector<8x32xi1>, vector<8x32xf32>
    %c8_i32 = arith.constant 8 : i32
    %c0_145 = arith.constant 0 : index
    %c0_146 = arith.constant 0 : index
    %c0_147 = arith.constant 0 : index
    %371 = vector.load %arg14[%c0_145, %c0_146, %c0_147] : memref<8x8x32xf32, #tpu.memory_space<vmem>>, vector<1x8x32xf32>
    %372 = vector.shape_cast %371 : vector<1x8x32xf32> to vector<8x32xf32>
    %c7_148 = arith.constant 7 : index
    %c0_149 = arith.constant 0 : index
    %c0_150 = arith.constant 0 : index
    %373 = vector.load %arg14[%c7_148, %c0_149, %c0_150] : memref<8x8x32xf32, #tpu.memory_space<vmem>>, vector<1x8x32xf32>
    %374 = vector.shape_cast %373 : vector<1x8x32xf32> to vector<8x32xf32>
    %375 = arith.select %31, %374, %372 : vector<8x32xi1>, vector<8x32xf32>
    %c0_151 = arith.constant 0 : index
    %c0_152 = arith.constant 0 : index
    %c0_153 = arith.constant 0 : index
    %376 = vector.load %arg14[%c0_151, %c0_152, %c0_153] : memref<8x8x32xf32, #tpu.memory_space<vmem>>, vector<1x8x32xf32>
    %377 = vector.shape_cast %376 : vector<1x8x32xf32> to vector<8x32xf32>
    %378 = vector.shape_cast %375 : vector<8x32xf32> to vector<1x8x32xf32>
    tpu.vector_store %arg14[%c0_151, %c0_152, %c0_153], %378 {strides = array<i32>} : memref<8x8x32xf32, #tpu.memory_space<vmem>>, vector<1x8x32xf32>,
    %379 = arith.select %31, %372, %374 : vector<8x32xi1>, vector<8x32xf32>
    %c7_154 = arith.constant 7 : index
    %c0_155 = arith.constant 0 : index
    %c0_156 = arith.constant 0 : index
    %380 = vector.load %arg14[%c7_154, %c0_155, %c0_156] : memref<8x8x32xf32, #tpu.memory_space<vmem>>, vector<1x8x32xf32>
    %381 = vector.shape_cast %380 : vector<1x8x32xf32> to vector<8x32xf32>
    %382 = vector.shape_cast %379 : vector<8x32xf32> to vector<1x8x32xf32>
    tpu.vector_store %arg14[%c7_154, %c0_155, %c0_156], %382 {strides = array<i32>} : memref<8x8x32xf32, #tpu.memory_space<vmem>>, vector<1x8x32xf32>,
    %c1_157 = arith.constant 1 : index
    %c0_158 = arith.constant 0 : index
    %c0_159 = arith.constant 0 : index
    %383 = vector.load %arg14[%c1_157, %c0_158, %c0_159] : memref<8x8x32xf32, #tpu.memory_space<vmem>>, vector<1x8x32xf32>
    %384 = vector.shape_cast %383 : vector<1x8x32xf32> to vector<8x32xf32>
    %c6_160 = arith.constant 6 : index
    %c0_161 = arith.constant 0 : index
    %c0_162 = arith.constant 0 : index
    %385 = vector.load %arg14[%c6_160, %c0_161, %c0_162] : memref<8x8x32xf32, #tpu.memory_space<vmem>>, vector<1x8x32xf32>
    %386 = vector.shape_cast %385 : vector<1x8x32xf32> to vector<8x32xf32>
    %387 = arith.select %31, %386, %384 : vector<8x32xi1>, vector<8x32xf32>
    %c1_163 = arith.constant 1 : index
    %c0_164 = arith.constant 0 : index
    %c0_165 = arith.constant 0 : index
    %388 = vector.load %arg14[%c1_163, %c0_164, %c0_165] : memref<8x8x32xf32, #tpu.memory_space<vmem>>, vector<1x8x32xf32>
    %389 = vector.shape_cast %388 : vector<1x8x32xf32> to vector<8x32xf32>
    %390 = vector.shape_cast %387 : vector<8x32xf32> to vector<1x8x32xf32>
    tpu.vector_store %arg14[%c1_163, %c0_164, %c0_165], %390 {strides = array<i32>} : memref<8x8x32xf32, #tpu.memory_space<vmem>>, vector<1x8x32xf32>,
    %391 = arith.select %31, %384, %386 : vector<8x32xi1>, vector<8x32xf32>
    %c6_166 = arith.constant 6 : index
    %c0_167 = arith.constant 0 : index
    %c0_168 = arith.constant 0 : index
    %392 = vector.load %arg14[%c6_166, %c0_167, %c0_168] : memref<8x8x32xf32, #tpu.memory_space<vmem>>, vector<1x8x32xf32>
    %393 = vector.shape_cast %392 : vector<1x8x32xf32> to vector<8x32xf32>
    %394 = vector.shape_cast %391 : vector<8x32xf32> to vector<1x8x32xf32>
    tpu.vector_store %arg14[%c6_166, %c0_167, %c0_168], %394 {strides = array<i32>} : memref<8x8x32xf32, #tpu.memory_space<vmem>>, vector<1x8x32xf32>,
    %c2_169 = arith.constant 2 : index
    %c0_170 = arith.constant 0 : index
    %c0_171 = arith.constant 0 : index
    %395 = vector.load %arg14[%c2_169, %c0_170, %c0_171] : memref<8x8x32xf32, #tpu.memory_space<vmem>>, vector<1x8x32xf32>
    %396 = vector.shape_cast %395 : vector<1x8x32xf32> to vector<8x32xf32>
    %c5_172 = arith.constant 5 : index
    %c0_173 = arith.constant 0 : index
    %c0_174 = arith.constant 0 : index
    %397 = vector.load %arg14[%c5_172, %c0_173, %c0_174] : memref<8x8x32xf32, #tpu.memory_space<vmem>>, vector<1x8x32xf32>
    %398 = vector.shape_cast %397 : vector<1x8x32xf32> to vector<8x32xf32>
    %399 = arith.select %31, %398, %396 : vector<8x32xi1>, vector<8x32xf32>
    %c2_175 = arith.constant 2 : index
    %c0_176 = arith.constant 0 : index
    %c0_177 = arith.constant 0 : index
    %400 = vector.load %arg14[%c2_175, %c0_176, %c0_177] : memref<8x8x32xf32, #tpu.memory_space<vmem>>, vector<1x8x32xf32>
    %401 = vector.shape_cast %400 : vector<1x8x32xf32> to vector<8x32xf32>
    %402 = vector.shape_cast %399 : vector<8x32xf32> to vector<1x8x32xf32>
    tpu.vector_store %arg14[%c2_175, %c0_176, %c0_177], %402 {strides = array<i32>} : memref<8x8x32xf32, #tpu.memory_space<vmem>>, vector<1x8x32xf32>,
    %403 = arith.select %31, %396, %398 : vector<8x32xi1>, vector<8x32xf32>
    %c5_178 = arith.constant 5 : index
    %c0_179 = arith.constant 0 : index
    %c0_180 = arith.constant 0 : index
    %404 = vector.load %arg14[%c5_178, %c0_179, %c0_180] : memref<8x8x32xf32, #tpu.memory_space<vmem>>, vector<1x8x32xf32>
    %405 = vector.shape_cast %404 : vector<1x8x32xf32> to vector<8x32xf32>
    %406 = vector.shape_cast %403 : vector<8x32xf32> to vector<1x8x32xf32>
    tpu.vector_store %arg14[%c5_178, %c0_179, %c0_180], %406 {strides = array<i32>} : memref<8x8x32xf32, #tpu.memory_space<vmem>>, vector<1x8x32xf32>,
    %c3_181 = arith.constant 3 : index
    %c0_182 = arith.constant 0 : index
    %c0_183 = arith.constant 0 : index
    %407 = vector.load %arg14[%c3_181, %c0_182, %c0_183] : memref<8x8x32xf32, #tpu.memory_space<vmem>>, vector<1x8x32xf32>
    %408 = vector.shape_cast %407 : vector<1x8x32xf32> to vector<8x32xf32>
    %c4_184 = arith.constant 4 : index
    %c0_185 = arith.constant 0 : index
    %c0_186 = arith.constant 0 : index
    %409 = vector.load %arg14[%c4_184, %c0_185, %c0_186] : memref<8x8x32xf32, #tpu.memory_space<vmem>>, vector<1x8x32xf32>
    %410 = vector.shape_cast %409 : vector<1x8x32xf32> to vector<8x32xf32>
    %411 = arith.select %31, %410, %408 : vector<8x32xi1>, vector<8x32xf32>
    %c3_187 = arith.constant 3 : index
    %c0_188 = arith.constant 0 : index
    %c0_189 = arith.constant 0 : index
    %412 = vector.load %arg14[%c3_187, %c0_188, %c0_189] : memref<8x8x32xf32, #tpu.memory_space<vmem>>, vector<1x8x32xf32>
    %413 = vector.shape_cast %412 : vector<1x8x32xf32> to vector<8x32xf32>
    %414 = vector.shape_cast %411 : vector<8x32xf32> to vector<1x8x32xf32>
    tpu.vector_store %arg14[%c3_187, %c0_188, %c0_189], %414 {strides = array<i32>} : memref<8x8x32xf32, #tpu.memory_space<vmem>>, vector<1x8x32xf32>,
    %415 = arith.select %31, %408, %410 : vector<8x32xi1>, vector<8x32xf32>
    %c4_190 = arith.constant 4 : index
    %c0_191 = arith.constant 0 : index
    %c0_192 = arith.constant 0 : index
    %416 = vector.load %arg14[%c4_190, %c0_191, %c0_192] : memref<8x8x32xf32, #tpu.memory_space<vmem>>, vector<1x8x32xf32>
    %417 = vector.shape_cast %416 : vector<1x8x32xf32> to vector<8x32xf32>
    %418 = vector.shape_cast %415 : vector<8x32xf32> to vector<1x8x32xf32>
    tpu.vector_store %arg14[%c4_190, %c0_191, %c0_192], %418 {strides = array<i32>} : memref<8x8x32xf32, #tpu.memory_space<vmem>>, vector<1x8x32xf32>,
    %c0_193 = arith.constant 0 : index
    %c0_194 = arith.constant 0 : index
    %c0_195 = arith.constant 0 : index
    %419 = vector.load %arg14[%c0_193, %c0_194, %c0_195] : memref<8x8x32xf32, #tpu.memory_space<vmem>>, vector<8x8x32xf32>
    %420 = vector.shape_cast %419 : vector<8x8x32xf32> to vector<64x32xf32>
    %c0_196 = arith.constant 0 : index
    %c0_197 = arith.constant 0 : index
    %421 = vector.load %arg5[%c0_196, %c0_197] : memref<32x128xf32, #tpu.memory_space<vmem>>, vector<32x128xf32>
    %cst_198 = arith.constant dense<0.000000e+00> : vector<64x128xf32>
    %422 = tpu.matmul %420, %421, %cst_198 {dimension_numbers = #tpu.dot_dimension_numbers<[1], [0], [0], [1], [0, 0, 1, 1], [], []>} : vector<64x32xf32>, vector<32x128xf32>, vector<64x128xf32> -> vector<64x128xf32>
    %c0_199 = arith.constant 0 : index
    %c0_200 = arith.constant 0 : index
    %423 = vector.load %arg7[%c0_199, %c0_200] : memref<1x128xf32, #tpu.memory_space<vmem>>, vector<1x128xf32>
    %424 = vector.broadcast %423 : vector<1x128xf32> to vector<64x128xf32>
    %425 = arith.addf %422, %424 : vector<64x128xf32>
    %426 = vector.shape_cast %425 : vector<64x128xf32> to vector<8x8x128xf32>
    %c0_201 = arith.constant 0 : index
    %c0_202 = arith.constant 0 : index
    %c0_203 = arith.constant 0 : index
    %427 = vector.load %arg13[%c0_201, %c0_202, %c0_203] : memref<8x8x128xf32, #tpu.memory_space<vmem>>, vector<8x8x128xf32>
    tpu.vector_store %arg13[%c0_201, %c0_202, %c0_203], %426 {strides = array<i32>} : memref<8x8x128xf32, #tpu.memory_space<vmem>>, vector<8x8x128xf32>,
    %c0_204 = arith.constant 0 : index
    %c0_205 = arith.constant 0 : index
    %c0_206 = arith.constant 0 : index
    %428 = vector.load %arg13[%c0_204, %c0_205, %c0_206] : memref<8x8x128xf32, #tpu.memory_space<vmem>>, vector<1x8x128xf32>
    %429 = vector.shape_cast %428 : vector<1x8x128xf32> to vector<8x128xf32>
    %c7_207 = arith.constant 7 : index
    %c0_208 = arith.constant 0 : index
    %c0_209 = arith.constant 0 : index
    %430 = vector.load %arg13[%c7_207, %c0_208, %c0_209] : memref<8x8x128xf32, #tpu.memory_space<vmem>>, vector<1x8x128xf32>
    %431 = vector.shape_cast %430 : vector<1x8x128xf32> to vector<8x128xf32>
    %432 = arith.select %23, %429, %431 : vector<8x128xi1>, vector<8x128xf32>
    %c0_210 = arith.constant 0 : index
    %c0_211 = arith.constant 0 : index
    %c0_212 = arith.constant 0 : index
    %433 = vector.load %arg13[%c0_210, %c0_211, %c0_212] : memref<8x8x128xf32, #tpu.memory_space<vmem>>, vector<1x8x128xf32>
    %434 = vector.shape_cast %433 : vector<1x8x128xf32> to vector<8x128xf32>
    %435 = vector.shape_cast %432 : vector<8x128xf32> to vector<1x8x128xf32>
    tpu.vector_store %arg13[%c0_210, %c0_211, %c0_212], %435 {strides = array<i32>} : memref<8x8x128xf32, #tpu.memory_space<vmem>>, vector<1x8x128xf32>,
    %436 = arith.select %23, %431, %429 : vector<8x128xi1>, vector<8x128xf32>
    %c7_213 = arith.constant 7 : index
    %c0_214 = arith.constant 0 : index
    %c0_215 = arith.constant 0 : index
    %437 = vector.load %arg13[%c7_213, %c0_214, %c0_215] : memref<8x8x128xf32, #tpu.memory_space<vmem>>, vector<1x8x128xf32>
    %438 = vector.shape_cast %437 : vector<1x8x128xf32> to vector<8x128xf32>
    %439 = vector.shape_cast %436 : vector<8x128xf32> to vector<1x8x128xf32>
    tpu.vector_store %arg13[%c7_213, %c0_214, %c0_215], %439 {strides = array<i32>} : memref<8x8x128xf32, #tpu.memory_space<vmem>>, vector<1x8x128xf32>,
    %c1_216 = arith.constant 1 : index
    %c0_217 = arith.constant 0 : index
    %c0_218 = arith.constant 0 : index
    %440 = vector.load %arg13[%c1_216, %c0_217, %c0_218] : memref<8x8x128xf32, #tpu.memory_space<vmem>>, vector<1x8x128xf32>
    %441 = vector.shape_cast %440 : vector<1x8x128xf32> to vector<8x128xf32>
    %c6_219 = arith.constant 6 : index
    %c0_220 = arith.constant 0 : index
    %c0_221 = arith.constant 0 : index
    %442 = vector.load %arg13[%c6_219, %c0_220, %c0_221] : memref<8x8x128xf32, #tpu.memory_space<vmem>>, vector<1x8x128xf32>
    %443 = vector.shape_cast %442 : vector<1x8x128xf32> to vector<8x128xf32>
    %444 = arith.select %23, %441, %443 : vector<8x128xi1>, vector<8x128xf32>
    %c1_222 = arith.constant 1 : index
    %c0_223 = arith.constant 0 : index
    %c0_224 = arith.constant 0 : index
    %445 = vector.load %arg13[%c1_222, %c0_223, %c0_224] : memref<8x8x128xf32, #tpu.memory_space<vmem>>, vector<1x8x128xf32>
    %446 = vector.shape_cast %445 : vector<1x8x128xf32> to vector<8x128xf32>
    %447 = vector.shape_cast %444 : vector<8x128xf32> to vector<1x8x128xf32>
    tpu.vector_store %arg13[%c1_222, %c0_223, %c0_224], %447 {strides = array<i32>} : memref<8x8x128xf32, #tpu.memory_space<vmem>>, vector<1x8x128xf32>,
    %448 = arith.select %23, %443, %441 : vector<8x128xi1>, vector<8x128xf32>
    %c6_225 = arith.constant 6 : index
    %c0_226 = arith.constant 0 : index
    %c0_227 = arith.constant 0 : index
    %449 = vector.load %arg13[%c6_225, %c0_226, %c0_227] : memref<8x8x128xf32, #tpu.memory_space<vmem>>, vector<1x8x128xf32>
    %450 = vector.shape_cast %449 : vector<1x8x128xf32> to vector<8x128xf32>
    %451 = vector.shape_cast %448 : vector<8x128xf32> to vector<1x8x128xf32>
    tpu.vector_store %arg13[%c6_225, %c0_226, %c0_227], %451 {strides = array<i32>} : memref<8x8x128xf32, #tpu.memory_space<vmem>>, vector<1x8x128xf32>,
    %c2_228 = arith.constant 2 : index
    %c0_229 = arith.constant 0 : index
    %c0_230 = arith.constant 0 : index
    %452 = vector.load %arg13[%c2_228, %c0_229, %c0_230] : memref<8x8x128xf32, #tpu.memory_space<vmem>>, vector<1x8x128xf32>
    %453 = vector.shape_cast %452 : vector<1x8x128xf32> to vector<8x128xf32>
    %c5_231 = arith.constant 5 : index
    %c0_232 = arith.constant 0 : index
    %c0_233 = arith.constant 0 : index
    %454 = vector.load %arg13[%c5_231, %c0_232, %c0_233] : memref<8x8x128xf32, #tpu.memory_space<vmem>>, vector<1x8x128xf32>
    %455 = vector.shape_cast %454 : vector<1x8x128xf32> to vector<8x128xf32>
    %456 = arith.select %23, %453, %455 : vector<8x128xi1>, vector<8x128xf32>
    %c2_234 = arith.constant 2 : index
    %c0_235 = arith.constant 0 : index
    %c0_236 = arith.constant 0 : index
    %457 = vector.load %arg13[%c2_234, %c0_235, %c0_236] : memref<8x8x128xf32, #tpu.memory_space<vmem>>, vector<1x8x128xf32>
    %458 = vector.shape_cast %457 : vector<1x8x128xf32> to vector<8x128xf32>
    %459 = vector.shape_cast %456 : vector<8x128xf32> to vector<1x8x128xf32>
    tpu.vector_store %arg13[%c2_234, %c0_235, %c0_236], %459 {strides = array<i32>} : memref<8x8x128xf32, #tpu.memory_space<vmem>>, vector<1x8x128xf32>,
    %460 = arith.select %23, %455, %453 : vector<8x128xi1>, vector<8x128xf32>
    %c5_237 = arith.constant 5 : index
    %c0_238 = arith.constant 0 : index
    %c0_239 = arith.constant 0 : index
    %461 = vector.load %arg13[%c5_237, %c0_238, %c0_239] : memref<8x8x128xf32, #tpu.memory_space<vmem>>, vector<1x8x128xf32>
    %462 = vector.shape_cast %461 : vector<1x8x128xf32> to vector<8x128xf32>
    %463 = vector.shape_cast %460 : vector<8x128xf32> to vector<1x8x128xf32>
    tpu.vector_store %arg13[%c5_237, %c0_238, %c0_239], %463 {strides = array<i32>} : memref<8x8x128xf32, #tpu.memory_space<vmem>>, vector<1x8x128xf32>,
    %c3_240 = arith.constant 3 : index
    %c0_241 = arith.constant 0 : index
    %c0_242 = arith.constant 0 : index
    %464 = vector.load %arg13[%c3_240, %c0_241, %c0_242] : memref<8x8x128xf32, #tpu.memory_space<vmem>>, vector<1x8x128xf32>
    %465 = vector.shape_cast %464 : vector<1x8x128xf32> to vector<8x128xf32>
    %c4_243 = arith.constant 4 : index
    %c0_244 = arith.constant 0 : index
    %c0_245 = arith.constant 0 : index
    %466 = vector.load %arg13[%c4_243, %c0_244, %c0_245] : memref<8x8x128xf32, #tpu.memory_space<vmem>>, vector<1x8x128xf32>
    %467 = vector.shape_cast %466 : vector<1x8x128xf32> to vector<8x128xf32>
    %468 = arith.select %23, %465, %467 : vector<8x128xi1>, vector<8x128xf32>
    %c3_246 = arith.constant 3 : index
    %c0_247 = arith.constant 0 : index
    %c0_248 = arith.constant 0 : index
    %469 = vector.load %arg13[%c3_246, %c0_247, %c0_248] : memref<8x8x128xf32, #tpu.memory_space<vmem>>, vector<1x8x128xf32>
    %470 = vector.shape_cast %469 : vector<1x8x128xf32> to vector<8x128xf32>
    %471 = vector.shape_cast %468 : vector<8x128xf32> to vector<1x8x128xf32>
    tpu.vector_store %arg13[%c3_246, %c0_247, %c0_248], %471 {strides = array<i32>} : memref<8x8x128xf32, #tpu.memory_space<vmem>>, vector<1x8x128xf32>,
    %472 = arith.select %23, %467, %465 : vector<8x128xi1>, vector<8x128xf32>
    %c4_249 = arith.constant 4 : index
    %c0_250 = arith.constant 0 : index
    %c0_251 = arith.constant 0 : index
    %473 = vector.load %arg13[%c4_249, %c0_250, %c0_251] : memref<8x8x128xf32, #tpu.memory_space<vmem>>, vector<1x8x128xf32>
    %474 = vector.shape_cast %473 : vector<1x8x128xf32> to vector<8x128xf32>
    %475 = vector.shape_cast %472 : vector<8x128xf32> to vector<1x8x128xf32>
    tpu.vector_store %arg13[%c4_249, %c0_250, %c0_251], %475 {strides = array<i32>} : memref<8x8x128xf32, #tpu.memory_space<vmem>>, vector<1x8x128xf32>,
    %c0_252 = arith.constant 0 : index
    %c0_253 = arith.constant 0 : index
    %476 = vector.load %arg6[%c0_252, %c0_253] : memref<32x128xf32, #tpu.memory_space<vmem>>, vector<32x128xf32>
    %cst_254 = arith.constant 0.000000e+00 : f32
    %477 = vector.broadcast %cst_254 : f32 to vector<8x32xf32>
    %cst_255 = arith.constant 0.000000e+00 : f32
    %478 = vector.broadcast %cst_255 : f32 to vector<8x32xf32>
    %c0_i32_256 = arith.constant 0 : i32
    %479 = arith.index_cast %c0_i32_256 : i32 to index
    %c0_257 = arith.constant 0 : index
    %c0_258 = arith.constant 0 : index
    %480 = vector.load %arg13[%479, %c0_257, %c0_258] : memref<8x8x128xf32, #tpu.memory_space<vmem>>, vector<1x8x128xf32>
    %481 = vector.shape_cast %480 : vector<1x8x128xf32> to vector<8x128xf32>
    %cst_259 = arith.constant dense<0.000000e+00> : vector<8x128xf32>
    %482 = tpu.matmul %477, %476, %cst_259 {dimension_numbers = #tpu.dot_dimension_numbers<[1], [0], [0], [1], [0, 0, 1, 1], [], []>} : vector<8x32xf32>, vector<32x128xf32>, vector<8x128xf32> -> vector<8x128xf32>
    %483 = arith.addf %481, %482 : vector<8x128xf32>
    %cst_260 = arith.constant 5.000000e-01 : f32
    %484 = vector.broadcast %cst_260 : f32 to vector<8x128xf32>
    %485 = arith.mulf %483, %484 : vector<8x128xf32>
    %486 = arith.select %28, %483, %485 : vector<8x128xi1>, vector<8x128xf32>
    %487 = math.tanh %486 : vector<8x128xf32>
    %cst_261 = arith.constant 5.000000e-01 : f32
    %488 = vector.broadcast %cst_261 : f32 to vector<8x128xf32>
    %489 = arith.mulf %487, %488 : vector<8x128xf32>
    %cst_262 = arith.constant 5.000000e-01 : f32
    %490 = vector.broadcast %cst_262 : f32 to vector<8x128xf32>
    %491 = arith.addf %489, %490 : vector<8x128xf32>
    %492 = arith.select %28, %487, %491 : vector<8x128xi1>, vector<8x128xf32>
    %493 = vector.extract_strided_slice %492 {offsets = [0, 0], sizes = [8, 32], strides = [1, 1]} : vector<8x128xf32> to vector<8x32xf32>
    %494 = vector.extract_strided_slice %492 {offsets = [0, 32], sizes = [8, 32], strides = [1, 1]} : vector<8x128xf32> to vector<8x32xf32>
    %495 = vector.extract_strided_slice %492 {offsets = [0, 64], sizes = [8, 32], strides = [1, 1]} : vector<8x128xf32> to vector<8x32xf32>
    %496 = vector.extract_strided_slice %492 {offsets = [0, 96], sizes = [8, 32], strides = [1, 1]} : vector<8x128xf32> to vector<8x32xf32>
    %497 = arith.mulf %494, %478 : vector<8x32xf32>
    %498 = arith.mulf %493, %495 : vector<8x32xf32>
    %499 = arith.addf %497, %498 : vector<8x32xf32>
    %500 = math.tanh %499 : vector<8x32xf32>
    %501 = arith.mulf %496, %500 : vector<8x32xf32>
    %502 = arith.index_cast %c0_i32_256 : i32 to index
    %c0_263 = arith.constant 0 : index
    %c0_264 = arith.constant 0 : index
    %503 = vector.load %arg0[%502, %c0_263, %c0_264] : memref<8x8x32xf32, #tpu.memory_space<vmem>>, vector<1x8x32xf32>
    %504 = vector.shape_cast %503 : vector<1x8x32xf32> to vector<8x32xf32>
    %cst_265 = arith.constant 0.000000e+00 : f32
    %505 = vector.broadcast %cst_265 : f32 to vector<8x32xf32>
    %506 = arith.cmpf ogt, %504, %505 : vector<8x32xf32>
    %507 = arith.select %506, %501, %477 : vector<8x32xi1>, vector<8x32xf32>
    %508 = arith.select %506, %499, %478 : vector<8x32xi1>, vector<8x32xf32>
    %c1_i32_266 = arith.constant 1 : i32
    %509 = arith.index_cast %c1_i32_266 : i32 to index
    %c0_267 = arith.constant 0 : index
    %c0_268 = arith.constant 0 : index
    %510 = vector.load %arg13[%509, %c0_267, %c0_268] : memref<8x8x128xf32, #tpu.memory_space<vmem>>, vector<1x8x128xf32>
    %511 = vector.shape_cast %510 : vector<1x8x128xf32> to vector<8x128xf32>
    %cst_269 = arith.constant dense<0.000000e+00> : vector<8x128xf32>
    %512 = tpu.matmul %507, %476, %cst_269 {dimension_numbers = #tpu.dot_dimension_numbers<[1], [0], [0], [1], [0, 0, 1, 1], [], []>} : vector<8x32xf32>, vector<32x128xf32>, vector<8x128xf32> -> vector<8x128xf32>
    %513 = arith.addf %511, %512 : vector<8x128xf32>
    %cst_270 = arith.constant 5.000000e-01 : f32
    %514 = vector.broadcast %cst_270 : f32 to vector<8x128xf32>
    %515 = arith.mulf %513, %514 : vector<8x128xf32>
    %516 = arith.select %28, %513, %515 : vector<8x128xi1>, vector<8x128xf32>
    %517 = math.tanh %516 : vector<8x128xf32>
    %cst_271 = arith.constant 5.000000e-01 : f32
    %518 = vector.broadcast %cst_271 : f32 to vector<8x128xf32>
    %519 = arith.mulf %517, %518 : vector<8x128xf32>
    %cst_272 = arith.constant 5.000000e-01 : f32
    %520 = vector.broadcast %cst_272 : f32 to vector<8x128xf32>
    %521 = arith.addf %519, %520 : vector<8x128xf32>
    %522 = arith.select %28, %517, %521 : vector<8x128xi1>, vector<8x128xf32>
    %523 = vector.extract_strided_slice %522 {offsets = [0, 0], sizes = [8, 32], strides = [1, 1]} : vector<8x128xf32> to vector<8x32xf32>
    %524 = vector.extract_strided_slice %522 {offsets = [0, 32], sizes = [8, 32], strides = [1, 1]} : vector<8x128xf32> to vector<8x32xf32>
    %525 = vector.extract_strided_slice %522 {offsets = [0, 64], sizes = [8, 32], strides = [1, 1]} : vector<8x128xf32> to vector<8x32xf32>
    %526 = vector.extract_strided_slice %522 {offsets = [0, 96], sizes = [8, 32], strides = [1, 1]} : vector<8x128xf32> to vector<8x32xf32>
    %527 = arith.mulf %524, %508 : vector<8x32xf32>
    %528 = arith.mulf %523, %525 : vector<8x32xf32>
    %529 = arith.addf %527, %528 : vector<8x32xf32>
    %530 = math.tanh %529 : vector<8x32xf32>
    %531 = arith.mulf %526, %530 : vector<8x32xf32>
    %532 = arith.index_cast %c1_i32_266 : i32 to index
    %c0_273 = arith.constant 0 : index
    %c0_274 = arith.constant 0 : index
    %533 = vector.load %arg0[%532, %c0_273, %c0_274] : memref<8x8x32xf32, #tpu.memory_space<vmem>>, vector<1x8x32xf32>
    %534 = vector.shape_cast %533 : vector<1x8x32xf32> to vector<8x32xf32>
    %cst_275 = arith.constant 0.000000e+00 : f32
    %535 = vector.broadcast %cst_275 : f32 to vector<8x32xf32>
    %536 = arith.cmpf ogt, %534, %535 : vector<8x32xf32>
    %537 = arith.select %536, %531, %507 : vector<8x32xi1>, vector<8x32xf32>
    %538 = arith.select %536, %529, %508 : vector<8x32xi1>, vector<8x32xf32>
    %c2_i32_276 = arith.constant 2 : i32
    %539 = arith.index_cast %c2_i32_276 : i32 to index
    %c0_277 = arith.constant 0 : index
    %c0_278 = arith.constant 0 : index
    %540 = vector.load %arg13[%539, %c0_277, %c0_278] : memref<8x8x128xf32, #tpu.memory_space<vmem>>, vector<1x8x128xf32>
    %541 = vector.shape_cast %540 : vector<1x8x128xf32> to vector<8x128xf32>
    %cst_279 = arith.constant dense<0.000000e+00> : vector<8x128xf32>
    %542 = tpu.matmul %537, %476, %cst_279 {dimension_numbers = #tpu.dot_dimension_numbers<[1], [0], [0], [1], [0, 0, 1, 1], [], []>} : vector<8x32xf32>, vector<32x128xf32>, vector<8x128xf32> -> vector<8x128xf32>
    %543 = arith.addf %541, %542 : vector<8x128xf32>
    %cst_280 = arith.constant 5.000000e-01 : f32
    %544 = vector.broadcast %cst_280 : f32 to vector<8x128xf32>
    %545 = arith.mulf %543, %544 : vector<8x128xf32>
    %546 = arith.select %28, %543, %545 : vector<8x128xi1>, vector<8x128xf32>
    %547 = math.tanh %546 : vector<8x128xf32>
    %cst_281 = arith.constant 5.000000e-01 : f32
    %548 = vector.broadcast %cst_281 : f32 to vector<8x128xf32>
    %549 = arith.mulf %547, %548 : vector<8x128xf32>
    %cst_282 = arith.constant 5.000000e-01 : f32
    %550 = vector.broadcast %cst_282 : f32 to vector<8x128xf32>
    %551 = arith.addf %549, %550 : vector<8x128xf32>
    %552 = arith.select %28, %547, %551 : vector<8x128xi1>, vector<8x128xf32>
    %553 = vector.extract_strided_slice %552 {offsets = [0, 0], sizes = [8, 32], strides = [1, 1]} : vector<8x128xf32> to vector<8x32xf32>
    %554 = vector.extract_strided_slice %552 {offsets = [0, 32], sizes = [8, 32], strides = [1, 1]} : vector<8x128xf32> to vector<8x32xf32>
    %555 = vector.extract_strided_slice %552 {offsets = [0, 64], sizes = [8, 32], strides = [1, 1]} : vector<8x128xf32> to vector<8x32xf32>
    %556 = vector.extract_strided_slice %552 {offsets = [0, 96], sizes = [8, 32], strides = [1, 1]} : vector<8x128xf32> to vector<8x32xf32>
    %557 = arith.mulf %554, %538 : vector<8x32xf32>
    %558 = arith.mulf %553, %555 : vector<8x32xf32>
    %559 = arith.addf %557, %558 : vector<8x32xf32>
    %560 = math.tanh %559 : vector<8x32xf32>
    %561 = arith.mulf %556, %560 : vector<8x32xf32>
    %562 = arith.index_cast %c2_i32_276 : i32 to index
    %c0_283 = arith.constant 0 : index
    %c0_284 = arith.constant 0 : index
    %563 = vector.load %arg0[%562, %c0_283, %c0_284] : memref<8x8x32xf32, #tpu.memory_space<vmem>>, vector<1x8x32xf32>
    %564 = vector.shape_cast %563 : vector<1x8x32xf32> to vector<8x32xf32>
    %cst_285 = arith.constant 0.000000e+00 : f32
    %565 = vector.broadcast %cst_285 : f32 to vector<8x32xf32>
    %566 = arith.cmpf ogt, %564, %565 : vector<8x32xf32>
    %567 = arith.select %566, %561, %537 : vector<8x32xi1>, vector<8x32xf32>
    %568 = arith.select %566, %559, %538 : vector<8x32xi1>, vector<8x32xf32>
    %c3_i32_286 = arith.constant 3 : i32
    %569 = arith.index_cast %c3_i32_286 : i32 to index
    %c0_287 = arith.constant 0 : index
    %c0_288 = arith.constant 0 : index
    %570 = vector.load %arg13[%569, %c0_287, %c0_288] : memref<8x8x128xf32, #tpu.memory_space<vmem>>, vector<1x8x128xf32>
    %571 = vector.shape_cast %570 : vector<1x8x128xf32> to vector<8x128xf32>
    %cst_289 = arith.constant dense<0.000000e+00> : vector<8x128xf32>
    %572 = tpu.matmul %567, %476, %cst_289 {dimension_numbers = #tpu.dot_dimension_numbers<[1], [0], [0], [1], [0, 0, 1, 1], [], []>} : vector<8x32xf32>, vector<32x128xf32>, vector<8x128xf32> -> vector<8x128xf32>
    %573 = arith.addf %571, %572 : vector<8x128xf32>
    %cst_290 = arith.constant 5.000000e-01 : f32
    %574 = vector.broadcast %cst_290 : f32 to vector<8x128xf32>
    %575 = arith.mulf %573, %574 : vector<8x128xf32>
    %576 = arith.select %28, %573, %575 : vector<8x128xi1>, vector<8x128xf32>
    %577 = math.tanh %576 : vector<8x128xf32>
    %cst_291 = arith.constant 5.000000e-01 : f32
    %578 = vector.broadcast %cst_291 : f32 to vector<8x128xf32>
    %579 = arith.mulf %577, %578 : vector<8x128xf32>
    %cst_292 = arith.constant 5.000000e-01 : f32
    %580 = vector.broadcast %cst_292 : f32 to vector<8x128xf32>
    %581 = arith.addf %579, %580 : vector<8x128xf32>
    %582 = arith.select %28, %577, %581 : vector<8x128xi1>, vector<8x128xf32>
    %583 = vector.extract_strided_slice %582 {offsets = [0, 0], sizes = [8, 32], strides = [1, 1]} : vector<8x128xf32> to vector<8x32xf32>
    %584 = vector.extract_strided_slice %582 {offsets = [0, 32], sizes = [8, 32], strides = [1, 1]} : vector<8x128xf32> to vector<8x32xf32>
    %585 = vector.extract_strided_slice %582 {offsets = [0, 64], sizes = [8, 32], strides = [1, 1]} : vector<8x128xf32> to vector<8x32xf32>
    %586 = vector.extract_strided_slice %582 {offsets = [0, 96], sizes = [8, 32], strides = [1, 1]} : vector<8x128xf32> to vector<8x32xf32>
    %587 = arith.mulf %584, %568 : vector<8x32xf32>
    %588 = arith.mulf %583, %585 : vector<8x32xf32>
    %589 = arith.addf %587, %588 : vector<8x32xf32>
    %590 = math.tanh %589 : vector<8x32xf32>
    %591 = arith.mulf %586, %590 : vector<8x32xf32>
    %592 = arith.index_cast %c3_i32_286 : i32 to index
    %c0_293 = arith.constant 0 : index
    %c0_294 = arith.constant 0 : index
    %593 = vector.load %arg0[%592, %c0_293, %c0_294] : memref<8x8x32xf32, #tpu.memory_space<vmem>>, vector<1x8x32xf32>
    %594 = vector.shape_cast %593 : vector<1x8x32xf32> to vector<8x32xf32>
    %cst_295 = arith.constant 0.000000e+00 : f32
    %595 = vector.broadcast %cst_295 : f32 to vector<8x32xf32>
    %596 = arith.cmpf ogt, %594, %595 : vector<8x32xf32>
    %597 = arith.select %596, %591, %567 : vector<8x32xi1>, vector<8x32xf32>
    %598 = arith.select %596, %589, %568 : vector<8x32xi1>, vector<8x32xf32>
    %c4_i32_296 = arith.constant 4 : i32
    %599 = arith.index_cast %c4_i32_296 : i32 to index
    %c0_297 = arith.constant 0 : index
    %c0_298 = arith.constant 0 : index
    %600 = vector.load %arg13[%599, %c0_297, %c0_298] : memref<8x8x128xf32, #tpu.memory_space<vmem>>, vector<1x8x128xf32>
    %601 = vector.shape_cast %600 : vector<1x8x128xf32> to vector<8x128xf32>
    %cst_299 = arith.constant dense<0.000000e+00> : vector<8x128xf32>
    %602 = tpu.matmul %597, %476, %cst_299 {dimension_numbers = #tpu.dot_dimension_numbers<[1], [0], [0], [1], [0, 0, 1, 1], [], []>} : vector<8x32xf32>, vector<32x128xf32>, vector<8x128xf32> -> vector<8x128xf32>
    %603 = arith.addf %601, %602 : vector<8x128xf32>
    %cst_300 = arith.constant 5.000000e-01 : f32
    %604 = vector.broadcast %cst_300 : f32 to vector<8x128xf32>
    %605 = arith.mulf %603, %604 : vector<8x128xf32>
    %606 = arith.select %28, %603, %605 : vector<8x128xi1>, vector<8x128xf32>
    %607 = math.tanh %606 : vector<8x128xf32>
    %cst_301 = arith.constant 5.000000e-01 : f32
    %608 = vector.broadcast %cst_301 : f32 to vector<8x128xf32>
    %609 = arith.mulf %607, %608 : vector<8x128xf32>
    %cst_302 = arith.constant 5.000000e-01 : f32
    %610 = vector.broadcast %cst_302 : f32 to vector<8x128xf32>
    %611 = arith.addf %609, %610 : vector<8x128xf32>
    %612 = arith.select %28, %607, %611 : vector<8x128xi1>, vector<8x128xf32>
    %613 = vector.extract_strided_slice %612 {offsets = [0, 0], sizes = [8, 32], strides = [1, 1]} : vector<8x128xf32> to vector<8x32xf32>
    %614 = vector.extract_strided_slice %612 {offsets = [0, 32], sizes = [8, 32], strides = [1, 1]} : vector<8x128xf32> to vector<8x32xf32>
    %615 = vector.extract_strided_slice %612 {offsets = [0, 64], sizes = [8, 32], strides = [1, 1]} : vector<8x128xf32> to vector<8x32xf32>
    %616 = vector.extract_strided_slice %612 {offsets = [0, 96], sizes = [8, 32], strides = [1, 1]} : vector<8x128xf32> to vector<8x32xf32>
    %617 = arith.mulf %614, %598 : vector<8x32xf32>
    %618 = arith.mulf %613, %615 : vector<8x32xf32>
    %619 = arith.addf %617, %618 : vector<8x32xf32>
    %620 = math.tanh %619 : vector<8x32xf32>
    %621 = arith.mulf %616, %620 : vector<8x32xf32>
    %622 = arith.index_cast %c4_i32_296 : i32 to index
    %c0_303 = arith.constant 0 : index
    %c0_304 = arith.constant 0 : index
    %623 = vector.load %arg0[%622, %c0_303, %c0_304] : memref<8x8x32xf32, #tpu.memory_space<vmem>>, vector<1x8x32xf32>
    %624 = vector.shape_cast %623 : vector<1x8x32xf32> to vector<8x32xf32>
    %cst_305 = arith.constant 0.000000e+00 : f32
    %625 = vector.broadcast %cst_305 : f32 to vector<8x32xf32>
    %626 = arith.cmpf ogt, %624, %625 : vector<8x32xf32>
    %627 = arith.select %626, %621, %597 : vector<8x32xi1>, vector<8x32xf32>
    %628 = arith.select %626, %619, %598 : vector<8x32xi1>, vector<8x32xf32>
    %c5_i32_306 = arith.constant 5 : i32
    %629 = arith.index_cast %c5_i32_306 : i32 to index
    %c0_307 = arith.constant 0 : index
    %c0_308 = arith.constant 0 : index
    %630 = vector.load %arg13[%629, %c0_307, %c0_308] : memref<8x8x128xf32, #tpu.memory_space<vmem>>, vector<1x8x128xf32>
    %631 = vector.shape_cast %630 : vector<1x8x128xf32> to vector<8x128xf32>
    %cst_309 = arith.constant dense<0.000000e+00> : vector<8x128xf32>
    %632 = tpu.matmul %627, %476, %cst_309 {dimension_numbers = #tpu.dot_dimension_numbers<[1], [0], [0], [1], [0, 0, 1, 1], [], []>} : vector<8x32xf32>, vector<32x128xf32>, vector<8x128xf32> -> vector<8x128xf32>
    %633 = arith.addf %631, %632 : vector<8x128xf32>
    %cst_310 = arith.constant 5.000000e-01 : f32
    %634 = vector.broadcast %cst_310 : f32 to vector<8x128xf32>
    %635 = arith.mulf %633, %634 : vector<8x128xf32>
    %636 = arith.select %28, %633, %635 : vector<8x128xi1>, vector<8x128xf32>
    %637 = math.tanh %636 : vector<8x128xf32>
    %cst_311 = arith.constant 5.000000e-01 : f32
    %638 = vector.broadcast %cst_311 : f32 to vector<8x128xf32>
    %639 = arith.mulf %637, %638 : vector<8x128xf32>
    %cst_312 = arith.constant 5.000000e-01 : f32
    %640 = vector.broadcast %cst_312 : f32 to vector<8x128xf32>
    %641 = arith.addf %639, %640 : vector<8x128xf32>
    %642 = arith.select %28, %637, %641 : vector<8x128xi1>, vector<8x128xf32>
    %643 = vector.extract_strided_slice %642 {offsets = [0, 0], sizes = [8, 32], strides = [1, 1]} : vector<8x128xf32> to vector<8x32xf32>
    %644 = vector.extract_strided_slice %642 {offsets = [0, 32], sizes = [8, 32], strides = [1, 1]} : vector<8x128xf32> to vector<8x32xf32>
    %645 = vector.extract_strided_slice %642 {offsets = [0, 64], sizes = [8, 32], strides = [1, 1]} : vector<8x128xf32> to vector<8x32xf32>
    %646 = vector.extract_strided_slice %642 {offsets = [0, 96], sizes = [8, 32], strides = [1, 1]} : vector<8x128xf32> to vector<8x32xf32>
    %647 = arith.mulf %644, %628 : vector<8x32xf32>
    %648 = arith.mulf %643, %645 : vector<8x32xf32>
    %649 = arith.addf %647, %648 : vector<8x32xf32>
    %650 = math.tanh %649 : vector<8x32xf32>
    %651 = arith.mulf %646, %650 : vector<8x32xf32>
    %652 = arith.index_cast %c5_i32_306 : i32 to index
    %c0_313 = arith.constant 0 : index
    %c0_314 = arith.constant 0 : index
    %653 = vector.load %arg0[%652, %c0_313, %c0_314] : memref<8x8x32xf32, #tpu.memory_space<vmem>>, vector<1x8x32xf32>
    %654 = vector.shape_cast %653 : vector<1x8x32xf32> to vector<8x32xf32>
    %cst_315 = arith.constant 0.000000e+00 : f32
    %655 = vector.broadcast %cst_315 : f32 to vector<8x32xf32>
    %656 = arith.cmpf ogt, %654, %655 : vector<8x32xf32>
    %657 = arith.select %656, %651, %627 : vector<8x32xi1>, vector<8x32xf32>
    %658 = arith.select %656, %649, %628 : vector<8x32xi1>, vector<8x32xf32>
    %c6_i32_316 = arith.constant 6 : i32
    %659 = arith.index_cast %c6_i32_316 : i32 to index
    %c0_317 = arith.constant 0 : index
    %c0_318 = arith.constant 0 : index
    %660 = vector.load %arg13[%659, %c0_317, %c0_318] : memref<8x8x128xf32, #tpu.memory_space<vmem>>, vector<1x8x128xf32>
    %661 = vector.shape_cast %660 : vector<1x8x128xf32> to vector<8x128xf32>
    %cst_319 = arith.constant dense<0.000000e+00> : vector<8x128xf32>
    %662 = tpu.matmul %657, %476, %cst_319 {dimension_numbers = #tpu.dot_dimension_numbers<[1], [0], [0], [1], [0, 0, 1, 1], [], []>} : vector<8x32xf32>, vector<32x128xf32>, vector<8x128xf32> -> vector<8x128xf32>
    %663 = arith.addf %661, %662 : vector<8x128xf32>
    %cst_320 = arith.constant 5.000000e-01 : f32
    %664 = vector.broadcast %cst_320 : f32 to vector<8x128xf32>
    %665 = arith.mulf %663, %664 : vector<8x128xf32>
    %666 = arith.select %28, %663, %665 : vector<8x128xi1>, vector<8x128xf32>
    %667 = math.tanh %666 : vector<8x128xf32>
    %cst_321 = arith.constant 5.000000e-01 : f32
    %668 = vector.broadcast %cst_321 : f32 to vector<8x128xf32>
    %669 = arith.mulf %667, %668 : vector<8x128xf32>
    %cst_322 = arith.constant 5.000000e-01 : f32
    %670 = vector.broadcast %cst_322 : f32 to vector<8x128xf32>
    %671 = arith.addf %669, %670 : vector<8x128xf32>
    %672 = arith.select %28, %667, %671 : vector<8x128xi1>, vector<8x128xf32>
    %673 = vector.extract_strided_slice %672 {offsets = [0, 0], sizes = [8, 32], strides = [1, 1]} : vector<8x128xf32> to vector<8x32xf32>
    %674 = vector.extract_strided_slice %672 {offsets = [0, 32], sizes = [8, 32], strides = [1, 1]} : vector<8x128xf32> to vector<8x32xf32>
    %675 = vector.extract_strided_slice %672 {offsets = [0, 64], sizes = [8, 32], strides = [1, 1]} : vector<8x128xf32> to vector<8x32xf32>
    %676 = vector.extract_strided_slice %672 {offsets = [0, 96], sizes = [8, 32], strides = [1, 1]} : vector<8x128xf32> to vector<8x32xf32>
    %677 = arith.mulf %674, %658 : vector<8x32xf32>
    %678 = arith.mulf %673, %675 : vector<8x32xf32>
    %679 = arith.addf %677, %678 : vector<8x32xf32>
    %680 = math.tanh %679 : vector<8x32xf32>
    %681 = arith.mulf %676, %680 : vector<8x32xf32>
    %682 = arith.index_cast %c6_i32_316 : i32 to index
    %c0_323 = arith.constant 0 : index
    %c0_324 = arith.constant 0 : index
    %683 = vector.load %arg0[%682, %c0_323, %c0_324] : memref<8x8x32xf32, #tpu.memory_space<vmem>>, vector<1x8x32xf32>
    %684 = vector.shape_cast %683 : vector<1x8x32xf32> to vector<8x32xf32>
    %cst_325 = arith.constant 0.000000e+00 : f32
    %685 = vector.broadcast %cst_325 : f32 to vector<8x32xf32>
    %686 = arith.cmpf ogt, %684, %685 : vector<8x32xf32>
    %687 = arith.select %686, %681, %657 : vector<8x32xi1>, vector<8x32xf32>
    %688 = arith.select %686, %679, %658 : vector<8x32xi1>, vector<8x32xf32>
    %c7_i32_326 = arith.constant 7 : i32
    %689 = arith.index_cast %c7_i32_326 : i32 to index
    %c0_327 = arith.constant 0 : index
    %c0_328 = arith.constant 0 : index
    %690 = vector.load %arg13[%689, %c0_327, %c0_328] : memref<8x8x128xf32, #tpu.memory_space<vmem>>, vector<1x8x128xf32>
    %691 = vector.shape_cast %690 : vector<1x8x128xf32> to vector<8x128xf32>
    %cst_329 = arith.constant dense<0.000000e+00> : vector<8x128xf32>
    %692 = tpu.matmul %687, %476, %cst_329 {dimension_numbers = #tpu.dot_dimension_numbers<[1], [0], [0], [1], [0, 0, 1, 1], [], []>} : vector<8x32xf32>, vector<32x128xf32>, vector<8x128xf32> -> vector<8x128xf32>
    %693 = arith.addf %691, %692 : vector<8x128xf32>
    %cst_330 = arith.constant 5.000000e-01 : f32
    %694 = vector.broadcast %cst_330 : f32 to vector<8x128xf32>
    %695 = arith.mulf %693, %694 : vector<8x128xf32>
    %696 = arith.select %28, %693, %695 : vector<8x128xi1>, vector<8x128xf32>
    %697 = math.tanh %696 : vector<8x128xf32>
    %cst_331 = arith.constant 5.000000e-01 : f32
    %698 = vector.broadcast %cst_331 : f32 to vector<8x128xf32>
    %699 = arith.mulf %697, %698 : vector<8x128xf32>
    %cst_332 = arith.constant 5.000000e-01 : f32
    %700 = vector.broadcast %cst_332 : f32 to vector<8x128xf32>
    %701 = arith.addf %699, %700 : vector<8x128xf32>
    %702 = arith.select %28, %697, %701 : vector<8x128xi1>, vector<8x128xf32>
    %703 = vector.extract_strided_slice %702 {offsets = [0, 0], sizes = [8, 32], strides = [1, 1]} : vector<8x128xf32> to vector<8x32xf32>
    %704 = vector.extract_strided_slice %702 {offsets = [0, 32], sizes = [8, 32], strides = [1, 1]} : vector<8x128xf32> to vector<8x32xf32>
    %705 = vector.extract_strided_slice %702 {offsets = [0, 64], sizes = [8, 32], strides = [1, 1]} : vector<8x128xf32> to vector<8x32xf32>
    %706 = vector.extract_strided_slice %702 {offsets = [0, 96], sizes = [8, 32], strides = [1, 1]} : vector<8x128xf32> to vector<8x32xf32>
    %707 = arith.mulf %704, %688 : vector<8x32xf32>
    %708 = arith.mulf %703, %705 : vector<8x32xf32>
    %709 = arith.addf %707, %708 : vector<8x32xf32>
    %710 = math.tanh %709 : vector<8x32xf32>
    %711 = arith.mulf %706, %710 : vector<8x32xf32>
    %712 = arith.index_cast %c7_i32_326 : i32 to index
    %c0_333 = arith.constant 0 : index
    %c0_334 = arith.constant 0 : index
    %713 = vector.load %arg0[%712, %c0_333, %c0_334] : memref<8x8x32xf32, #tpu.memory_space<vmem>>, vector<1x8x32xf32>
    %714 = vector.shape_cast %713 : vector<1x8x32xf32> to vector<8x32xf32>
    %cst_335 = arith.constant 0.000000e+00 : f32
    %715 = vector.broadcast %cst_335 : f32 to vector<8x32xf32>
    %716 = arith.cmpf ogt, %714, %715 : vector<8x32xf32>
    %717 = arith.select %716, %711, %687 : vector<8x32xi1>, vector<8x32xf32>
    %718 = arith.select %716, %709, %688 : vector<8x32xi1>, vector<8x32xf32>
    %c8_i32_336 = arith.constant 8 : i32
    %c0_337 = arith.constant 0 : index
    %c0_338 = arith.constant 0 : index
    %719 = vector.load %arg8[%c0_337, %c0_338] : memref<32x32xf32, #tpu.memory_space<vmem>>, vector<32x32xf32>
    %cst_339 = arith.constant dense<0.000000e+00> : vector<8x32xf32>
    %720 = tpu.matmul %717, %719, %cst_339 {dimension_numbers = #tpu.dot_dimension_numbers<[1], [0], [0], [1], [0, 0, 1, 1], [], []>} : vector<8x32xf32>, vector<32x32xf32>, vector<8x32xf32> -> vector<8x32xf32>
    %c0_340 = arith.constant 0 : index
    %c0_341 = arith.constant 0 : index
    %721 = vector.load %arg9[%c0_340, %c0_341] : memref<1x32xf32, #tpu.memory_space<vmem>>, vector<1x32xf32>
    %722 = vector.broadcast %721 : vector<1x32xf32> to vector<8x32xf32>
    %723 = arith.addf %720, %722 : vector<8x32xf32>
    %cst_342 = arith.constant 0.000000e+00 : f32
    %724 = vector.broadcast %cst_342 : f32 to vector<8x32xf32>
    %725 = arith.maximumf %723, %724 : vector<8x32xf32>
    %c0_343 = arith.constant 0 : index
    %c0_344 = arith.constant 0 : index
    %726 = vector.load %arg10[%c0_343, %c0_344] : memref<32x128xf32, #tpu.memory_space<vmem>>, vector<32x128xf32>
    %cst_345 = arith.constant dense<0.000000e+00> : vector<8x128xf32>
    %727 = tpu.matmul %725, %726, %cst_345 {dimension_numbers = #tpu.dot_dimension_numbers<[1], [0], [0], [1], [0, 0, 1, 1], [], []>} : vector<8x32xf32>, vector<32x128xf32>, vector<8x128xf32> -> vector<8x128xf32>
    %c0_346 = arith.constant 0 : index
    %c0_347 = arith.constant 0 : index
    %728 = vector.load %arg11[%c0_346, %c0_347] : memref<1x128xf32, #tpu.memory_space<vmem>>, vector<1x128xf32>
    %729 = vector.broadcast %728 : vector<1x128xf32> to vector<8x128xf32>
    %730 = arith.addf %727, %729 : vector<8x128xf32>
    %c0_348 = arith.constant 0 : index
    %c0_349 = arith.constant 0 : index
    %731 = vector.load %arg12[%c0_348, %c0_349] : memref<8x128xf32, #tpu.memory_space<vmem>>, vector<8x128xf32>
    tpu.vector_store %arg12[%c0_348, %c0_349], %730 {strides = array<i32>} : memref<8x128xf32, #tpu.memory_space<vmem>>, vector<8x128xf32>,
    return
  }
}

</mosaic_0001>

<llo_original>
// kernel: tpu_custom_call.1
$region0: #{tpu_custom_call.1}
  #allocation0 [shape = 'u32[]', space=smem, size = 0x4, offset = 0x4, fixed_abs, tag = 'smem constant byte address 0x4 - core index']
  #allocation1 [shape = 'u32[144,128]{1,0:T(1,128)}', space=vmem, size = 0x12000, scoped, tag = 'internal scratch']
  #allocation2 [shape = 'f32[8,8,128]{2,1,0:T(8,128)}', space=vmem, size = 0x8000, scoped, tag = 'scratch operand']
  #allocation3 [shape = 'f32[8,8,32]{2,1,0:T(8,128)}', space=vmem, size = 0x8000, scoped, tag = 'scratch operand']
  %s0 = inlined_call_operand.vmem [shape: f32[8,8,32], index: 0, kind: input, shape index: {}]
  %s1 = inlined_call_operand.vmem [shape: f32[64,32], index: 1, kind: input, shape index: {}]
  %s2 = inlined_call_operand.vmem [shape: f32[32,128], index: 2, kind: input, shape index: {}]
  %s3 = inlined_call_operand.hbm [shape: f32[32,128], index: 3, kind: input, shape index: {}]
  %s4 = inlined_call_operand.vmem [shape: f32[1,128], index: 4, kind: input, shape index: {}]
  %s5 = inlined_call_operand.hbm [shape: f32[32,128], index: 5, kind: input, shape index: {}]
  %s6 = inlined_call_operand.hbm [shape: f32[32,128], index: 6, kind: input, shape index: {}]
  %s7 = inlined_call_operand.vmem [shape: f32[1,128], index: 7, kind: input, shape index: {}]
  %s8 = inlined_call_operand.hbm [shape: f32[32,32], index: 8, kind: input, shape index: {}]
  %s9 = inlined_call_operand.hbm [shape: f32[1,32], index: 9, kind: input, shape index: {}]
  %s10 = inlined_call_operand.vmem [shape: f32[32,128], index: 10, kind: input, shape index: {}]
  %s11 = inlined_call_operand.vmem [shape: f32[1,128], index: 11, kind: input, shape index: {}]
  %s12 = inlined_call_operand.hbm [shape: f32[8,128], index: 12, kind: output, shape index: {}]
  %s13 = sld [smem:[#allocation0]]
  $region78: #{tpu_custom_call.1} parent=0
    _
  %s15 = ssub.s32 1, %s13
  %s16 = scalar_select 0, %s15, %s13
  $region1: #{tpu_custom_call.1} parent=0
    #allocation4 [shape = 'u8[16384]{0}', space=vmem, size = 0x4000, scoped, tag = 'input window, operand 3, single buffered']
    #allocation5 [shape = 's32[1]{0}', space=sflag, size = 0x4, scoped, tag = 'scoped memory for tpu_custom_call.1']
    #allocation6 [shape = 's32[1]{0}', space=sflag, size = 0x4, scoped, tag = 'scoped memory for tpu_custom_call.1']
    #allocation7 [shape = 'u8[16384]{0}', space=vmem, size = 0x4000, scoped, tag = 'input window, operand 5, single buffered']
    #allocation8 [shape = 's32[1]{0}', space=sflag, size = 0x4, scoped, tag = 'scoped memory for tpu_custom_call.1']
    #allocation9 [shape = 'u8[16384]{0}', space=vmem, size = 0x4000, scoped, tag = 'input window, operand 6, single buffered']
    #allocation10 [shape = 'u8[16384]{0}', space=vmem, size = 0x4000, scoped, tag = 'input window, operand 8, single buffered']
    #allocation11 [shape = 's32[1]{0}', space=sflag, size = 0x4, scoped, tag = 'scoped memory for tpu_custom_call.1']
    #allocation12 [shape = 'u8[512]{0}', space=vmem, size = 0x400, scoped, tag = 'input window, operand 9, single buffered']
    #allocation13 [shape = 'u8[4096]{0}', space=vmem, size = 0x1000, scoped, tag = 'output window, operand 0, single buffered']
    %17 = vsyncpa [#allocation5], 0
    %18 = vsyncpa [#allocation8], 0
    %19 = vsyncpa [#allocation11], 0
    %20 = vsyncpa [#allocation6], 0
    // Predicated region
    $region2: #{tpu_custom_call.1} parent=1 // pred_check
      _
    $region3: #{tpu_custom_call.1} parent=1 // pred_check_branch
      %22 = sbr.rel (0) target = $region5
    $region4: #{tpu_custom_call.1} parent=1 // pred_region
      _
    $region5: #{tpu_custom_call.1} parent=1 // pred_fallthru
      _
    // Predicated region
    $region6: #{tpu_custom_call.1} parent=1 // pred_check
      _
    $region7: #{tpu_custom_call.1} parent=1 // pred_check_branch
      %24 = sbr.rel (0) target = $region9
    $region8: #{tpu_custom_call.1} parent=1 // pred_region
      _
    $region9: #{tpu_custom_call.1} parent=1 // pred_fallthru
      _
    // Predicated region
    $region10: #{tpu_custom_call.1} parent=1 // pred_check
      _
    $region11: #{tpu_custom_call.1} parent=1 // pred_check_branch
      %26 = sbr.rel (0) target = $region13
    $region12: #{tpu_custom_call.1} parent=1 // pred_region
      _
    $region13: #{tpu_custom_call.1} parent=1 // pred_fallthru
      _
    // Predicated region
    $region14: #{tpu_custom_call.1} parent=1 // pred_check
      _
    $region15: #{tpu_custom_call.1} parent=1 // pred_check_branch
      %28 = sbr.rel (0) target = $region17
    $region16: #{tpu_custom_call.1} parent=1 // pred_region
      %s30 = ssub.s32 512, 512
      %31 = vsyncadd [#allocation5], %s30
      %s32 = sshll.u32 [#allocation4], 4
      %s33 = int_to_ptr.vmem [resolvable:$true] %s32
      %38 = dma.hbm_to_vmem [thread:$0]  %s3, 512, %s33, [#allocation5], 128, 128, 8
    $region17: #{tpu_custom_call.1} parent=1 // pred_fallthru
      _
    // Predicated region
    $region18: #{tpu_custom_call.1} parent=1 // pred_check
      _
    $region19: #{tpu_custom_call.1} parent=1 // pred_check_branch
      %40 = sbr.rel (0) target = $region21
    $region20: #{tpu_custom_call.1} parent=1 // pred_region
      _
    $region21: #{tpu_custom_call.1} parent=1 // pred_fallthru
      _
    // Predicated region
    $region22: #{tpu_custom_call.1} parent=1 // pred_check
      _
    $region23: #{tpu_custom_call.1} parent=1 // pred_check_branch
      %42 = sbr.rel (0) target = $region25
    $region24: #{tpu_custom_call.1} parent=1 // pred_region
      %s44 = ssub.s32 512, 512
      %45 = vsyncadd [#allocation8], %s44
      %s46 = sshll.u32 [#allocation7], 4
      %s47 = int_to_ptr.vmem [resolvable:$true] %s46
      %52 = dma.hbm_to_vmem [thread:$0]  %s5, 512, %s47, [#allocation8], 128, 128, 8
    $region25: #{tpu_custom_call.1} parent=1 // pred_fallthru
      _
    // Predicated region
    $region26: #{tpu_custom_call.1} parent=1 // pred_check
      _
    $region27: #{tpu_custom_call.1} parent=1 // pred_check_branch
      %54 = sbr.rel (0) target = $region29
    $region28: #{tpu_custom_call.1} parent=1 // pred_region
      %s56 = ssub.s32 512, 512
      %57 = vsyncadd [#allocation8], %s56
      %s58 = sshll.u32 [#allocation9], 4
      %s59 = int_to_ptr.vmem [resolvable:$true] %s58
      %64 = dma.hbm_to_vmem [thread:$0]  %s6, 512, %s59, [#allocation8], 128, 128, 8
    $region29: #{tpu_custom_call.1} parent=1 // pred_fallthru
      _
    // Predicated region
    $region30: #{tpu_custom_call.1} parent=1 // pred_check
      _
    $region31: #{tpu_custom_call.1} parent=1 // pred_check_branch
      %66 = sbr.rel (0) target = $region33
    $region32: #{tpu_custom_call.1} parent=1 // pred_region
      _
    $region33: #{tpu_custom_call.1} parent=1 // pred_fallthru
      _
    // Predicated region
    $region34: #{tpu_custom_call.1} parent=1 // pred_check
      _
    $region35: #{tpu_custom_call.1} parent=1 // pred_check_branch
      %68 = sbr.rel (0) target = $region37
    $region36: #{tpu_custom_call.1} parent=1 // pred_region
      %s70 = ssub.s32 512, 512
      %71 = vsyncadd [#allocation11], %s70
      %s72 = sshll.u32 [#allocation10], 4
      %s73 = int_to_ptr.vmem [resolvable:$true] %s72
      %78 = dma.hbm_to_vmem [thread:$0]  %s8, 512, %s73, [#allocation11], 128, 128, 8
    $region37: #{tpu_custom_call.1} parent=1 // pred_fallthru
      _
    // Predicated region
    $region38: #{tpu_custom_call.1} parent=1 // pred_check
      _
    $region39: #{tpu_custom_call.1} parent=1 // pred_check_branch
      %80 = sbr.rel (0) target = $region41
    $region40: #{tpu_custom_call.1} parent=1 // pred_region
      %s82 = ssub.s32 16, 16
      %83 = vsyncadd [#allocation11], %s82
      %s85 = sshll.u32 [#allocation12], 4
      %s86 = int_to_ptr.vmem [resolvable:$true] %s85
      %88 = dma.hbm_to_vmem [thread:$0]  %s9, 16, %s86, [#allocation11]
    $region41: #{tpu_custom_call.1} parent=1 // pred_fallthru
      _
    // Predicated region
    $region42: #{tpu_custom_call.1} parent=1 // pred_check
      _
    $region43: #{tpu_custom_call.1} parent=1 // pred_check_branch
      %90 = sbr.rel (0) target = $region45
    $region44: #{tpu_custom_call.1} parent=1 // pred_region
      _
    $region45: #{tpu_custom_call.1} parent=1 // pred_fallthru
      _
    // Predicated region
    $region46: #{tpu_custom_call.1} parent=1 // pred_check
      _
    $region47: #{tpu_custom_call.1} parent=1 // pred_check_branch
      %92 = sbr.rel (0) target = $region49
    $region48: #{tpu_custom_call.1} parent=1 // pred_region
      _
    $region49: #{tpu_custom_call.1} parent=1 // pred_fallthru
      _
    // Predicated region
    $region50: #{tpu_custom_call.1} parent=1 // pred_check
      _
    $region51: #{tpu_custom_call.1} parent=1 // pred_check_branch
      %94 = sbr.rel (0) target = $region53
    $region52: #{tpu_custom_call.1} parent=1 // pred_region
      %95 = dma.done [#allocation5], 512
    $region53: #{tpu_custom_call.1} parent=1 // pred_fallthru
      _
    // Predicated region
    $region54: #{tpu_custom_call.1} parent=1 // pred_check
      _
    $region55: #{tpu_custom_call.1} parent=1 // pred_check_branch
      %97 = sbr.rel (0) target = $region57
    $region56: #{tpu_custom_call.1} parent=1 // pred_region
      %98 = dma.done [#allocation8], 512
    $region57: #{tpu_custom_call.1} parent=1 // pred_fallthru
      _
    // Predicated region
    $region58: #{tpu_custom_call.1} parent=1 // pred_check
      _
    $region59: #{tpu_custom_call.1} parent=1 // pred_check_branch
      %100 = sbr.rel (0) target = $region61
    $region60: #{tpu_custom_call.1} parent=1 // pred_region
      %101 = dma.done [#allocation8], 512
    $region61: #{tpu_custom_call.1} parent=1 // pred_fallthru
      _
    // Predicated region
    $region62: #{tpu_custom_call.1} parent=1 // pred_check
      _
    $region63: #{tpu_custom_call.1} parent=1 // pred_check_branch
      %103 = sbr.rel (0) target = $region65
    $region64: #{tpu_custom_call.1} parent=1 // pred_region
      %104 = dma.done [#allocation11], 512
    $region65: #{tpu_custom_call.1} parent=1 // pred_fallthru
      _
    // Predicated region
    $region66: #{tpu_custom_call.1} parent=1 // pred_check
      _
    $region67: #{tpu_custom_call.1} parent=1 // pred_check_branch
      %106 = sbr.rel (0) target = $region69
    $region68: #{tpu_custom_call.1} parent=1 // pred_region
      %107 = dma.done [#allocation11], 16
    $region69: #{tpu_custom_call.1} parent=1 // pred_fallthru
      _
    %v108 = vlaneseq
    %v109 = vand.u32 %v108, 127
    %vm110 = vcmp.ge.s32.totalorder %v109, 0
    %vm111 = vcmp.lt.s32.totalorder %v109, 16
    %vm112 = vmand %vm110, %vm111
    %vm113 = vcmp.ge.s32.totalorder %v109, 32
    %vm114 = vcmp.lt.s32.totalorder %v109, 48
    %vm115 = vmand %vm113, %vm114
    %vm116 = vmor %vm112, %vm115
    %vm117 = vcmp.ge.s32.totalorder %v109, 64
    %vm118 = vcmp.lt.s32.totalorder %v109, 80
    %vm119 = vmand %vm117, %vm118
    %vm120 = vmor %vm116, %vm119
    %vm121 = vcmp.ge.s32.totalorder %v109, 96
    %vm122 = vcmp.lt.s32.totalorder %v109, 112
    %vm123 = vmand %vm121, %vm122
    %vm124 = vmor %vm120, %vm123
    %vm125 = vcmp.lt.s32.totalorder %v109, 96
    %vm126 = vmand %vm117, %vm125
    %vm127 = vcmp.ge.s32.totalorder %v109, 16
    %v128 = vld [vmem:[%s1] sm:$0xff]
    %v129 = vld [vmem:[%s1 + $0x8] sm:$0xff]
    %v130 = vld [vmem:[%s1 + $0x10] sm:$0xff]
    %v131 = vld [vmem:[%s1 + $0x18] sm:$0xff]
    %v132 = vld [vmem:[%s1 + $0x20] sm:$0xff]
    %v133 = vld [vmem:[%s1 + $0x28] sm:$0xff]
    %v134 = vld [vmem:[%s1 + $0x30] sm:$0xff]
    %v135 = vld [vmem:[%s1 + $0x38] sm:$0xff]
    %v136 = vld [vmem:[%s2] sm:$0xff]
    %v137 = vld [vmem:[%s2 + $0x8] sm:$0xff]
    %v138 = vld [vmem:[%s2 + $0x10] sm:$0xff]
    %v139 = vld [vmem:[%s2 + $0x18] sm:$0xff]
    %v140 = vld [vmem:[%s4] sm:$0x1]
    %v142 = vlaneseq
    %v143 = vshrl.u32 %v142, 7
    %v144 = vsub.s32 0, %v143
    %v145 = vrot.slane %v140, %v144
    %vm147 = vcmask 261120
    %v149 = vsel %vm147, %v128, 0
    %v152 = vsel %vm147, %v129, 0
    %v155 = vsel %vm147, %v130, 0
    %v158 = vsel %vm147, %v131, 0
    %v161 = vsel %vm147, %v132, 0
    %v164 = vsel %vm147, %v133, 0
    %v167 = vsel %vm147, %v134, 0
    %v170 = vsel %vm147, %v135, 0
    %172 = vmatprep.subr.mxu0 0.0
    %173 = vmatpush1.msra.mxu0 %v136
    %174 = vmatprep.subr.mxu0 0.0
    %175 = vmatpush1.msra.mxu0 %v137
    %176 = vmatprep.subr.mxu0 0.0
    %177 = vmatpush1.msra.mxu0 %v138
    %178 = vmatprep.subr.mxu0 0.0
    %179 = vmatpush1.msra.mxu0 %v139
    %180 = vmatprep.subr.mxu0 0.0
    %181 = vmatpush1.msra.mxu0 0.0
    %182 = vmatprep.subr.mxu0 0.0
    %183 = vmatpush1.msra.mxu0 0.0
    %184 = vmatprep.subr.mxu0 0.0
    %185 = vmatpush1.msra.mxu0 0.0
    %186 = vmatprep.subr.mxu0 0.0
    %187 = vmatpush1.msra.mxu0 0.0
    %188 = vmatprep.subr.mxu0 0.0
    %189 = vmatpush1.msra.mxu0 0.0
    %190 = vmatprep.subr.mxu0 0.0
    %191 = vmatpush1.msra.mxu0 0.0
    %192 = vmatprep.subr.mxu0 0.0
    %193 = vmatpush1.msra.mxu0 0.0
    %194 = vmatprep.subr.mxu0 0.0
    %195 = vmatpush1.msra.mxu0 0.0
    %196 = vmatprep.subr.mxu0 0.0
    %197 = vmatpush1.msra.mxu0 0.0
    %198 = vmatprep.subr.mxu0 0.0
    %199 = vmatpush1.msra.mxu0 0.0
    %200 = vmatprep.subr.mxu0 0.0
    %201 = vmatpush1.msra.mxu0 0.0
    %202 = vmatprep.subr.mxu0 0.0
    %203 = vmatpush1.msra.mxu0 0.0
    %204 = vmatprep.subr.mxu0 0.0
    %205 = vmatpush1.msra.mxu0 0.0
    %206 = vmatprep.subr.mxu0 0.0
    %207 = vmatpush1.msra.mxu0 0.0
    %208 = vmatprep.subr.mxu0 0.0
    %209 = vmatpush1.msra.mxu0 0.0
    %210 = vmatprep.subr.mxu0 0.0
    %211 = vmatpush1.msra.mxu0 0.0
    %212 = vmatprep.subr.mxu0 0.0
    %213 = vmatpush1.msra.mxu0 0.0
    %214 = vmatprep.subr.mxu0 0.0
    %215 = vmatpush1.msra.mxu0 0.0
    %216 = vmatprep.subr.mxu0 0.0
    %217 = vmatpush1.msra.mxu0 0.0
    %218 = vmatprep.subr.mxu0 0.0
    %219 = vmatpush1.msra.mxu0 0.0
    %220 = vmatprep.subr.mxu0 0.0
    %221 = vmatpush1.msra.mxu0 0.0
    %222 = vmatprep.subr.mxu0 0.0
    %223 = vmatpush1.msra.mxu0 0.0
    %224 = vmatprep.subr.mxu0 0.0
    %225 = vmatpush1.msra.mxu0 0.0
    %226 = vmatprep.subr.mxu0 0.0
    %227 = vmatpush1.msra.mxu0 0.0
    %228 = vmatprep.subr.mxu0 0.0
    %229 = vmatpush1.msra.mxu0 0.0
    %230 = vmatprep.subr.mxu0 0.0
    %231 = vmatpush1.msra.mxu0 0.0
    %232 = vmatprep.subr.mxu0 0.0
    %233 = vmatpush1.msra.mxu0 0.0
    %234 = vmatprep.subr.mxu0 0.0
    %235 = vmatpush1.msra.mxu0 0.0
    %236 = vmatprep.mubr.f32.mxu0 0.0
    %237 = vmatmul.mubr.f32.gmra.mrb[0].mxu0 %v149
    %v238 = vpop.f32.mrb[0].mxu0
    %v239 = vadd.f32 %v145, %v238
    %v240 = vpop.f32.mrb[0].mxu0
    %241 = vmatprep.mubr.f32.mxu0 0.0
    %242 = vmatmul.mubr.f32.gmra.mrb[0].mxu0 %v152
    %v243 = vpop.f32.mrb[0].mxu0
    %v244 = vadd.f32 %v145, %v243
    %v245 = vpop.f32.mrb[0].mxu0
    %246 = vmatprep.mubr.f32.mxu0 0.0
    %247 = vmatmul.mubr.f32.gmra.mrb[0].mxu0 %v155
    %v248 = vpop.f32.mrb[0].mxu0
    %v249 = vadd.f32 %v145, %v248
    %v250 = vpop.f32.mrb[0].mxu0
    %251 = vmatprep.mubr.f32.mxu0 0.0
    %252 = vmatmul.mubr.f32.gmra.mrb[0].mxu0 %v158
    %v253 = vpop.f32.mrb[0].mxu0
    %v254 = vadd.f32 %v145, %v253
    %v255 = vpop.f32.mrb[0].mxu0
    %256 = vmatprep.mubr.f32.mxu0 0.0
    %257 = vmatmul.mubr.f32.gmra.mrb[0].mxu0 %v161
    %v258 = vpop.f32.mrb[0].mxu0
    %v259 = vadd.f32 %v145, %v258
    %v260 = vpop.f32.mrb[0].mxu0
    %261 = vmatprep.mubr.f32.mxu0 0.0
    %262 = vmatmul.mubr.f32.gmra.mrb[0].mxu0 %v164
    %v263 = vpop.f32.mrb[0].mxu0
    %v264 = vadd.f32 %v145, %v263
    %v265 = vpop.f32.mrb[0].mxu0
    %266 = vmatprep.mubr.f32.mxu0 0.0
    %267 = vmatmul.mubr.f32.gmra.mrb[0].mxu0 %v167
    %v268 = vpop.f32.mrb[0].mxu0
    %v269 = vadd.f32 %v145, %v268
    %v270 = vpop.f32.mrb[0].mxu0
    %271 = vmatprep.mubr.f32.mxu0 0.0
    %272 = vmatmul.mubr.f32.gmra.mrb[0].mxu0 %v170
    %v273 = vpop.f32.mrb[0].mxu0
    %v274 = vadd.f32 %v145, %v273
    %v275 = vpop.f32.mrb[0].mxu0
    %276 = vdwg.mxu0
    %277 = vst [vmem:[#allocation2] sm:$0xff] %v239
    %278 = vst [vmem:[#allocation2 + $0x8] sm:$0xff] %v244
    %279 = vst [vmem:[#allocation2 + $0x10] sm:$0xff] %v249
    %280 = vst [vmem:[#allocation2 + $0x18] sm:$0xff] %v254
    %281 = vst [vmem:[#allocation2 + $0x20] sm:$0xff] %v259
    %282 = vst [vmem:[#allocation2 + $0x28] sm:$0xff] %v264
    %283 = vst [vmem:[#allocation2 + $0x30] sm:$0xff] %v269
    %284 = vst [vmem:[#allocation2 + $0x38] sm:$0xff] %v274
    %v285 = vld [vmem:[#allocation2] sm:$0xff]
    %s286 = scalar_lea.vmem [#allocation2], 56
    %v287 = vld [vmem:[%s286] sm:$0xff]
    %v288 = vsel %vm124, %v285, %v287
    %289 = vst [vmem:[#allocation2] sm:$0xff] %v288
    %v290 = vsel %vm124, %v287, %v285
    %291 = vst [vmem:[%s286] sm:$0xff] %v290
    %s292 = scalar_lea.vmem [#allocation2], 8
    %v293 = vld [vmem:[%s292] sm:$0xff]
    %s294 = scalar_lea.vmem [#allocation2], 48
    %v295 = vld [vmem:[%s294] sm:$0xff]
    %v296 = vsel %vm124, %v293, %v295
    %297 = vst [vmem:[%s292] sm:$0xff] %v296
    %v298 = vsel %vm124, %v295, %v293
    %299 = vst [vmem:[%s294] sm:$0xff] %v298
    %s300 = scalar_lea.vmem [#allocation2], 16
    %v301 = vld [vmem:[%s300] sm:$0xff]
    %s302 = scalar_lea.vmem [#allocation2], 40
    %v303 = vld [vmem:[%s302] sm:$0xff]
    %v304 = vsel %vm124, %v301, %v303
    %305 = vst [vmem:[%s300] sm:$0xff] %v304
    %v306 = vsel %vm124, %v303, %v301
    %307 = vst [vmem:[%s302] sm:$0xff] %v306
    %s308 = scalar_lea.vmem [#allocation2], 24
    %v309 = vld [vmem:[%s308] sm:$0xff]
    %s310 = scalar_lea.vmem [#allocation2], 32
    %v311 = vld [vmem:[%s310] sm:$0xff]
    %v312 = vsel %vm124, %v309, %v311
    %313 = vst [vmem:[%s308] sm:$0xff] %v312
    %v314 = vsel %vm124, %v311, %v309
    %315 = vst [vmem:[%s310] sm:$0xff] %v314
    %v316 = vld [vmem:[#allocation4] sm:$0xff]
    %v317 = vld [vmem:[#allocation4 + $0x8] sm:$0xff]
    %v318 = vld [vmem:[#allocation4 + $0x10] sm:$0xff]
    %v319 = vld [vmem:[#allocation4 + $0x18] sm:$0xff]
    %v320 = vld [vmem:[#allocation2] sm:$0xff]
    %v322 = vsel %vm147, 0.0, 0
    %324 = vmatprep.subr.mxu0 0.0
    %325 = vmatpush1.msra.mxu0 %v316
    %326 = vmatprep.subr.mxu0 0.0
    %327 = vmatpush1.msra.mxu0 %v317
    %328 = vmatprep.subr.mxu0 0.0
    %329 = vmatpush1.msra.mxu0 %v318
    %330 = vmatprep.subr.mxu0 0.0
    %331 = vmatpush1.msra.mxu0 %v319
    %332 = vmatprep.subr.mxu0 0.0
    %333 = vmatpush1.msra.mxu0 0.0
    %334 = vmatprep.subr.mxu0 0.0
    %335 = vmatpush1.msra.mxu0 0.0
    %336 = vmatprep.subr.mxu0 0.0
    %337 = vmatpush1.msra.mxu0 0.0
    %338 = vmatprep.subr.mxu0 0.0
    %339 = vmatpush1.msra.mxu0 0.0
    %340 = vmatprep.subr.mxu0 0.0
    %341 = vmatpush1.msra.mxu0 0.0
    %342 = vmatprep.subr.mxu0 0.0
    %343 = vmatpush1.msra.mxu0 0.0
    %344 = vmatprep.subr.mxu0 0.0
    %345 = vmatpush1.msra.mxu0 0.0
    %346 = vmatprep.subr.mxu0 0.0
    %347 = vmatpush1.msra.mxu0 0.0
    %348 = vmatprep.subr.mxu0 0.0
    %349 = vmatpush1.msra.mxu0 0.0
    %350 = vmatprep.subr.mxu0 0.0
    %351 = vmatpush1.msra.mxu0 0.0
    %352 = vmatprep.subr.mxu0 0.0
    %353 = vmatpush1.msra.mxu0 0.0
    %354 = vmatprep.subr.mxu0 0.0
    %355 = vmatpush1.msra.mxu0 0.0
    %356 = vmatprep.subr.mxu0 0.0
    %357 = vmatpush1.msra.mxu0 0.0
    %358 = vmatprep.subr.mxu0 0.0
    %359 = vmatpush1.msra.mxu0 0.0
    %360 = vmatprep.subr.mxu0 0.0
    %361 = vmatpush1.msra.mxu0 0.0
    %362 = vmatprep.subr.mxu0 0.0
    %363 = vmatpush1.msra.mxu0 0.0
    %364 = vmatprep.subr.mxu0 0.0
    %365 = vmatpush1.msra.mxu0 0.0
    %366 = vmatprep.subr.mxu0 0.0
    %367 = vmatpush1.msra.mxu0 0.0
    %368 = vmatprep.subr.mxu0 0.0
    %369 = vmatpush1.msra.mxu0 0.0
    %370 = vmatprep.subr.mxu0 0.0
    %371 = vmatpush1.msra.mxu0 0.0
    %372 = vmatprep.subr.mxu0 0.0
    %373 = vmatpush1.msra.mxu0 0.0
    %374 = vmatprep.subr.mxu0 0.0
    %375 = vmatpush1.msra.mxu0 0.0
    %376 = vmatprep.subr.mxu0 0.0
    %377 = vmatpush1.msra.mxu0 0.0
    %378 = vmatprep.subr.mxu0 0.0
    %379 = vmatpush1.msra.mxu0 0.0
    %380 = vmatprep.subr.mxu0 0.0
    %381 = vmatpush1.msra.mxu0 0.0
    %382 = vmatprep.subr.mxu0 0.0
    %383 = vmatpush1.msra.mxu0 0.0
    %384 = vmatprep.subr.mxu0 0.0
    %385 = vmatpush1.msra.mxu0 0.0
    %386 = vmatprep.subr.mxu0 0.0
    %387 = vmatpush1.msra.mxu0 0.0
    %388 = vmatprep.mubr.f32.mxu0 0.0
    %389 = vmatmul.mubr.f32.gmra.mrb[0].mxu0 %v322
    %v390 = vpop.f32.mrb[0].mxu0
    %v391 = vadd.f32 0.0, %v390
    %v392 = vpop.f32.mrb[0].mxu0
    %393 = vdwg.mxu0
    %v394 = vadd.f32 %v320, %v391
    %v395 = vmul.f32 %v394, 0.5
    %v396 = vsel %vm126, %v394, %v395
    %v397 = vtanh.pop %v396
    %v398 = vmul.f32 %v397, 0.5
    %v399 = vadd.f32 %v398, 0.5
    %v400 = vsel %vm126, %v397, %v399
    %v401 = vmul.f32 %v400, 0.0
    %403 = vrot.lane.b32.xlu0 %v400, 64
    %v404 = vpop.permute.xlu0 %403
    %v406 = vmul.f32 %v400, %v404
    %408 = vrot.lane.b32.xlu0 %v406, 32
    %v409 = vpop.permute.xlu0 %408
    %v411 = vadd.f32 %v401, %v409
    %v412 = vtanh.pop %v411
    %414 = vrot.lane.b32.xlu0 %v412, 64
    %v415 = vpop.permute.xlu0 %414
    %v417 = vmul.f32 %v400, %v415
    %v418 = vld [vmem:[%s0] sm:$0xff]
    %420 = vrot.lane.b32.xlu0 %v418, 96
    %v421 = vpop.permute.xlu0 %420
    %v423 = vmul.f32 %v417, %v421
    %425 = vrot.lane.b32.xlu0 %v423, 32
    %v426 = vpop.permute.xlu0 %425
    %428 = vst.msk [vmem:[#allocation3] sm:$0xff] %vm147, %v426
    %vm429 = vcmp.gt.f32.partialorder %v418, 0.0
    %431 = vrot.lane.b32.xlu0 %v417, 32
    %v432 = vpop.permute.xlu0 %431
    %v434 = vsel %vm429, %v432, 0.0
    %436 = vrot.lane.b32.xlu0 %v411, 96
    %v437 = vpop.permute.xlu0 %436
    %v439 = vsel %vm429, %v437, 0.0
    %v440 = vld [vmem:[%s292] sm:$0xff]
    %v442 = vsel %vm147, %v434, 0
    %444 = vmatprep.subr.mxu0 0.0
    %445 = vmatpush1.msra.mxu0 %v316
    %446 = vmatprep.subr.mxu0 0.0
    %447 = vmatpush1.msra.mxu0 %v317
    %448 = vmatprep.subr.mxu0 0.0
    %449 = vmatpush1.msra.mxu0 %v318
    %450 = vmatprep.subr.mxu0 0.0
    %451 = vmatpush1.msra.mxu0 %v319
    %452 = vmatprep.subr.mxu0 0.0
    %453 = vmatpush1.msra.mxu0 0.0
    %454 = vmatprep.subr.mxu0 0.0
    %455 = vmatpush1.msra.mxu0 0.0
    %456 = vmatprep.subr.mxu0 0.0
    %457 = vmatpush1.msra.mxu0 0.0
    %458 = vmatprep.subr.mxu0 0.0
    %459 = vmatpush1.msra.mxu0 0.0
    %460 = vmatprep.subr.mxu0 0.0
    %461 = vmatpush1.msra.mxu0 0.0
    %462 = vmatprep.subr.mxu0 0.0
    %463 = vmatpush1.msra.mxu0 0.0
    %464 = vmatprep.subr.mxu0 0.0
    %465 = vmatpush1.msra.mxu0 0.0
    %466 = vmatprep.subr.mxu0 0.0
    %467 = vmatpush1.msra.mxu0 0.0
    %468 = vmatprep.subr.mxu0 0.0
    %469 = vmatpush1.msra.mxu0 0.0
    %470 = vmatprep.subr.mxu0 0.0
    %471 = vmatpush1.msra.mxu0 0.0
    %472 = vmatprep.subr.mxu0 0.0
    %473 = vmatpush1.msra.mxu0 0.0
    %474 = vmatprep.subr.mxu0 0.0
    %475 = vmatpush1.msra.mxu0 0.0
    %476 = vmatprep.subr.mxu0 0.0
    %477 = vmatpush1.msra.mxu0 0.0
    %478 = vmatprep.subr.mxu0 0.0
    %479 = vmatpush1.msra.mxu0 0.0
    %480 = vmatprep.subr.mxu0 0.0
    %481 = vmatpush1.msra.mxu0 0.0
    %482 = vmatprep.subr.mxu0 0.0
    %483 = vmatpush1.msra.mxu0 0.0
    %484 = vmatprep.subr.mxu0 0.0
    %485 = vmatpush1.msra.mxu0 0.0
    %486 = vmatprep.subr.mxu0 0.0
    %487 = vmatpush1.msra.mxu0 0.0
    %488 = vmatprep.subr.mxu0 0.0
    %489 = vmatpush1.msra.mxu0 0.0
    %490 = vmatprep.subr.mxu0 0.0
    %491 = vmatpush1.msra.mxu0 0.0
    %492 = vmatprep.subr.mxu0 0.0
    %493 = vmatpush1.msra.mxu0 0.0
    %494 = vmatprep.subr.mxu0 0.0
    %495 = vmatpush1.msra.mxu0 0.0
    %496 = vmatprep.subr.mxu0 0.0
    %497 = vmatpush1.msra.mxu0 0.0
    %498 = vmatprep.subr.mxu0 0.0
    %499 = vmatpush1.msra.mxu0 0.0
    %500 = vmatprep.subr.mxu0 0.0
    %501 = vmatpush1.msra.mxu0 0.0
    %502 = vmatprep.subr.mxu0 0.0
    %503 = vmatpush1.msra.mxu0 0.0
    %504 = vmatprep.subr.mxu0 0.0
    %505 = vmatpush1.msra.mxu0 0.0
    %506 = vmatprep.subr.mxu0 0.0
    %507 = vmatpush1.msra.mxu0 0.0
    %508 = vmatprep.mubr.f32.mxu0 0.0
    %509 = vmatmul.mubr.f32.gmra.mrb[0].mxu0 %v442
    %v510 = vpop.f32.mrb[0].mxu0
    %v511 = vadd.f32 0.0, %v510
    %v512 = vpop.f32.mrb[0].mxu0
    %513 = vdwg.mxu0
    %v514 = vadd.f32 %v440, %v511
    %v515 = vmul.f32 %v514, 0.5
    %v516 = vsel %vm126, %v514, %v515
    %v517 = vtanh.pop %v516
    %v518 = vmul.f32 %v517, 0.5
    %v519 = vadd.f32 %v518, 0.5
    %v520 = vsel %vm126, %v517, %v519
    %522 = vrot.lane.b32.xlu0 %v439, 32
    %v523 = vpop.permute.xlu0 %522
    %v525 = vmul.f32 %v520, %v523
    %527 = vrot.lane.b32.xlu0 %v520, 64
    %v528 = vpop.permute.xlu0 %527
    %v530 = vmul.f32 %v520, %v528
    %532 = vrot.lane.b32.xlu0 %v530, 32
    %v533 = vpop.permute.xlu0 %532
    %v535 = vadd.f32 %v525, %v533
    %v536 = vtanh.pop %v535
    %538 = vrot.lane.b32.xlu0 %v536, 64
    %v539 = vpop.permute.xlu0 %538
    %v541 = vmul.f32 %v520, %v539
    %s542 = scalar_lea.vmem %s0, 8
    %v543 = vld [vmem:[%s542] sm:$0xff]
    %545 = vrot.lane.b32.xlu0 %v543, 96
    %v546 = vpop.permute.xlu0 %545
    %v548 = vmul.f32 %v541, %v546
    %550 = vrot.lane.b32.xlu0 %v548, 32
    %v551 = vpop.permute.xlu0 %550
    %s553 = scalar_lea.vmem [#allocation3], 8
    %554 = vst.msk [vmem:[%s553] sm:$0xff] %vm147, %v551
    %vm555 = vcmp.gt.f32.partialorder %v543, 0.0
    %557 = vrot.lane.b32.xlu0 %v541, 32
    %v558 = vpop.permute.xlu0 %557
    %v560 = vsel %vm555, %v558, %v434
    %562 = vrot.lane.b32.xlu0 %v535, 96
    %v563 = vpop.permute.xlu0 %562
    %v565 = vsel %vm555, %v563, %v439
    %v566 = vld [vmem:[%s300] sm:$0xff]
    %v568 = vsel %vm147, %v560, 0
    %570 = vmatprep.subr.mxu0 0.0
    %571 = vmatpush1.msra.mxu0 %v316
    %572 = vmatprep.subr.mxu0 0.0
    %573 = vmatpush1.msra.mxu0 %v317
    %574 = vmatprep.subr.mxu0 0.0
    %575 = vmatpush1.msra.mxu0 %v318
    %576 = vmatprep.subr.mxu0 0.0
    %577 = vmatpush1.msra.mxu0 %v319
    %578 = vmatprep.subr.mxu0 0.0
    %579 = vmatpush1.msra.mxu0 0.0
    %580 = vmatprep.subr.mxu0 0.0
    %581 = vmatpush1.msra.mxu0 0.0
    %582 = vmatprep.subr.mxu0 0.0
    %583 = vmatpush1.msra.mxu0 0.0
    %584 = vmatprep.subr.mxu0 0.0
    %585 = vmatpush1.msra.mxu0 0.0
    %586 = vmatprep.subr.mxu0 0.0
    %587 = vmatpush1.msra.mxu0 0.0
    %588 = vmatprep.subr.mxu0 0.0
    %589 = vmatpush1.msra.mxu0 0.0
    %590 = vmatprep.subr.mxu0 0.0
    %591 = vmatpush1.msra.mxu0 0.0
    %592 = vmatprep.subr.mxu0 0.0
    %593 = vmatpush1.msra.mxu0 0.0
    %594 = vmatprep.subr.mxu0 0.0
    %595 = vmatpush1.msra.mxu0 0.0
    %596 = vmatprep.subr.mxu0 0.0
    %597 = vmatpush1.msra.mxu0 0.0
    %598 = vmatprep.subr.mxu0 0.0
    %599 = vmatpush1.msra.mxu0 0.0
    %600 = vmatprep.subr.mxu0 0.0
    %601 = vmatpush1.msra.mxu0 0.0
    %602 = vmatprep.subr.mxu0 0.0
    %603 = vmatpush1.msra.mxu0 0.0
    %604 = vmatprep.subr.mxu0 0.0
    %605 = vmatpush1.msra.mxu0 0.0
    %606 = vmatprep.subr.mxu0 0.0
    %607 = vmatpush1.msra.mxu0 0.0
    %608 = vmatprep.subr.mxu0 0.0
    %609 = vmatpush1.msra.mxu0 0.0
    %610 = vmatprep.subr.mxu0 0.0
    %611 = vmatpush1.msra.mxu0 0.0
    %612 = vmatprep.subr.mxu0 0.0
    %613 = vmatpush1.msra.mxu0 0.0
    %614 = vmatprep.subr.mxu0 0.0
    %615 = vmatpush1.msra.mxu0 0.0
    %616 = vmatprep.subr.mxu0 0.0
    %617 = vmatpush1.msra.mxu0 0.0
    %618 = vmatprep.subr.mxu0 0.0
    %619 = vmatpush1.msra.mxu0 0.0
    %620 = vmatprep.subr.mxu0 0.0
    %621 = vmatpush1.msra.mxu0 0.0
    %622 = vmatprep.subr.mxu0 0.0
    %623 = vmatpush1.msra.mxu0 0.0
    %624 = vmatprep.subr.mxu0 0.0
    %625 = vmatpush1.msra.mxu0 0.0
    %626 = vmatprep.subr.mxu0 0.0
    %627 = vmatpush1.msra.mxu0 0.0
    %628 = vmatprep.subr.mxu0 0.0
    %629 = vmatpush1.msra.mxu0 0.0
    %630 = vmatprep.subr.mxu0 0.0
    %631 = vmatpush1.msra.mxu0 0.0
    %632 = vmatprep.subr.mxu0 0.0
    %633 = vmatpush1.msra.mxu0 0.0
    %634 = vmatprep.mubr.f32.mxu0 0.0
    %635 = vmatmul.mubr.f32.gmra.mrb[0].mxu0 %v568
    %v636 = vpop.f32.mrb[0].mxu0
    %v637 = vadd.f32 0.0, %v636
    %v638 = vpop.f32.mrb[0].mxu0
    %639 = vdwg.mxu0
    %v640 = vadd.f32 %v566, %v637
    %v641 = vmul.f32 %v640, 0.5
    %v642 = vsel %vm126, %v640, %v641
    %v643 = vtanh.pop %v642
    %v644 = vmul.f32 %v643, 0.5
    %v645 = vadd.f32 %v644, 0.5
    %v646 = vsel %vm126, %v643, %v645
    %648 = vrot.lane.b32.xlu0 %v565, 32
    %v649 = vpop.permute.xlu0 %648
    %v651 = vmul.f32 %v646, %v649
    %653 = vrot.lane.b32.xlu0 %v646, 64
    %v654 = vpop.permute.xlu0 %653
    %v656 = vmul.f32 %v646, %v654
    %658 = vrot.lane.b32.xlu0 %v656, 32
    %v659 = vpop.permute.xlu0 %658
    %v661 = vadd.f32 %v651, %v659
    %v662 = vtanh.pop %v661
    %664 = vrot.lane.b32.xlu0 %v662, 64
    %v665 = vpop.permute.xlu0 %664
    %v667 = vmul.f32 %v646, %v665
    %s668 = scalar_lea.vmem %s0, 16
    %v669 = vld [vmem:[%s668] sm:$0xff]
    %671 = vrot.lane.b32.xlu0 %v669, 96
    %v672 = vpop.permute.xlu0 %671
    %v674 = vmul.f32 %v667, %v672
    %676 = vrot.lane.b32.xlu0 %v674, 32
    %v677 = vpop.permute.xlu0 %676
    %s679 = scalar_lea.vmem [#allocation3], 16
    %680 = vst.msk [vmem:[%s679] sm:$0xff] %vm147, %v677
    %vm681 = vcmp.gt.f32.partialorder %v669, 0.0
    %683 = vrot.lane.b32.xlu0 %v667, 32
    %v684 = vpop.permute.xlu0 %683
    %v686 = vsel %vm681, %v684, %v560
    %688 = vrot.lane.b32.xlu0 %v661, 96
    %v689 = vpop.permute.xlu0 %688
    %v691 = vsel %vm681, %v689, %v565
    %v692 = vld [vmem:[%s308] sm:$0xff]
    %v694 = vsel %vm147, %v686, 0
    %696 = vmatprep.subr.mxu0 0.0
    %697 = vmatpush1.msra.mxu0 %v316
    %698 = vmatprep.subr.mxu0 0.0
    %699 = vmatpush1.msra.mxu0 %v317
    %700 = vmatprep.subr.mxu0 0.0
    %701 = vmatpush1.msra.mxu0 %v318
    %702 = vmatprep.subr.mxu0 0.0
    %703 = vmatpush1.msra.mxu0 %v319
    %704 = vmatprep.subr.mxu0 0.0
    %705 = vmatpush1.msra.mxu0 0.0
    %706 = vmatprep.subr.mxu0 0.0
    %707 = vmatpush1.msra.mxu0 0.0
    %708 = vmatprep.subr.mxu0 0.0
    %709 = vmatpush1.msra.mxu0 0.0
    %710 = vmatprep.subr.mxu0 0.0
    %711 = vmatpush1.msra.mxu0 0.0
    %712 = vmatprep.subr.mxu0 0.0
    %713 = vmatpush1.msra.mxu0 0.0
    %714 = vmatprep.subr.mxu0 0.0
    %715 = vmatpush1.msra.mxu0 0.0
    %716 = vmatprep.subr.mxu0 0.0
    %717 = vmatpush1.msra.mxu0 0.0
    %718 = vmatprep.subr.mxu0 0.0
    %719 = vmatpush1.msra.mxu0 0.0
    %720 = vmatprep.subr.mxu0 0.0
    %721 = vmatpush1.msra.mxu0 0.0
    %722 = vmatprep.subr.mxu0 0.0
    %723 = vmatpush1.msra.mxu0 0.0
    %724 = vmatprep.subr.mxu0 0.0
    %725 = vmatpush1.msra.mxu0 0.0
    %726 = vmatprep.subr.mxu0 0.0
    %727 = vmatpush1.msra.mxu0 0.0
    %728 = vmatprep.subr.mxu0 0.0
    %729 = vmatpush1.msra.mxu0 0.0
    %730 = vmatprep.subr.mxu0 0.0
    %731 = vmatpush1.msra.mxu0 0.0
    %732 = vmatprep.subr.mxu0 0.0
    %733 = vmatpush1.msra.mxu0 0.0
    %734 = vmatprep.subr.mxu0 0.0
    %735 = vmatpush1.msra.mxu0 0.0
    %736 = vmatprep.subr.mxu0 0.0
    %737 = vmatpush1.msra.mxu0 0.0
    %738 = vmatprep.subr.mxu0 0.0
    %739 = vmatpush1.msra.mxu0 0.0
    %740 = vmatprep.subr.mxu0 0.0
    %741 = vmatpush1.msra.mxu0 0.0
    %742 = vmatprep.subr.mxu0 0.0
    %743 = vmatpush1.msra.mxu0 0.0
    %744 = vmatprep.subr.mxu0 0.0
    %745 = vmatpush1.msra.mxu0 0.0
    %746 = vmatprep.subr.mxu0 0.0
    %747 = vmatpush1.msra.mxu0 0.0
    %748 = vmatprep.subr.mxu0 0.0
    %749 = vmatpush1.msra.mxu0 0.0
    %750 = vmatprep.subr.mxu0 0.0
    %751 = vmatpush1.msra.mxu0 0.0
    %752 = vmatprep.subr.mxu0 0.0
    %753 = vmatpush1.msra.mxu0 0.0
    %754 = vmatprep.subr.mxu0 0.0
    %755 = vmatpush1.msra.mxu0 0.0
    %756 = vmatprep.subr.mxu0 0.0
    %757 = vmatpush1.msra.mxu0 0.0
    %758 = vmatprep.subr.mxu0 0.0
    %759 = vmatpush1.msra.mxu0 0.0
    %760 = vmatprep.mubr.f32.mxu0 0.0
    %761 = vmatmul.mubr.f32.gmra.mrb[0].mxu0 %v694
    %v762 = vpop.f32.mrb[0].mxu0
    %v763 = vadd.f32 0.0, %v762
    %v764 = vpop.f32.mrb[0].mxu0
    %765 = vdwg.mxu0
    %v766 = vadd.f32 %v692, %v763
    %v767 = vmul.f32 %v766, 0.5
    %v768 = vsel %vm126, %v766, %v767
    %v769 = vtanh.pop %v768
    %v770 = vmul.f32 %v769, 0.5
    %v771 = vadd.f32 %v770, 0.5
    %v772 = vsel %vm126, %v769, %v771
    %774 = vrot.lane.b32.xlu0 %v691, 32
    %v775 = vpop.permute.xlu0 %774
    %v777 = vmul.f32 %v772, %v775
    %779 = vrot.lane.b32.xlu0 %v772, 64
    %v780 = vpop.permute.xlu0 %779
    %v782 = vmul.f32 %v772, %v780
    %784 = vrot.lane.b32.xlu0 %v782, 32
    %v785 = vpop.permute.xlu0 %784
    %v787 = vadd.f32 %v777, %v785
    %v788 = vtanh.pop %v787
    %790 = vrot.lane.b32.xlu0 %v788, 64
    %v791 = vpop.permute.xlu0 %790
    %v793 = vmul.f32 %v772, %v791
    %s794 = scalar_lea.vmem %s0, 24
    %v795 = vld [vmem:[%s794] sm:$0xff]
    %797 = vrot.lane.b32.xlu0 %v795, 96
    %v798 = vpop.permute.xlu0 %797
    %v800 = vmul.f32 %v793, %v798
    %802 = vrot.lane.b32.xlu0 %v800, 32
    %v803 = vpop.permute.xlu0 %802
    %s805 = scalar_lea.vmem [#allocation3], 24
    %806 = vst.msk [vmem:[%s805] sm:$0xff] %vm147, %v803
    %vm807 = vcmp.gt.f32.partialorder %v795, 0.0
    %809 = vrot.lane.b32.xlu0 %v793, 32
    %v810 = vpop.permute.xlu0 %809
    %v812 = vsel %vm807, %v810, %v686
    %814 = vrot.lane.b32.xlu0 %v787, 96
    %v815 = vpop.permute.xlu0 %814
    %v817 = vsel %vm807, %v815, %v691
    %v818 = vld [vmem:[%s310] sm:$0xff]
    %v820 = vsel %vm147, %v812, 0
    %822 = vmatprep.subr.mxu0 0.0
    %823 = vmatpush1.msra.mxu0 %v316
    %824 = vmatprep.subr.mxu0 0.0
    %825 = vmatpush1.msra.mxu0 %v317
    %826 = vmatprep.subr.mxu0 0.0
    %827 = vmatpush1.msra.mxu0 %v318
    %828 = vmatprep.subr.mxu0 0.0
    %829 = vmatpush1.msra.mxu0 %v319
    %830 = vmatprep.subr.mxu0 0.0
    %831 = vmatpush1.msra.mxu0 0.0
    %832 = vmatprep.subr.mxu0 0.0
    %833 = vmatpush1.msra.mxu0 0.0
    %834 = vmatprep.subr.mxu0 0.0
    %835 = vmatpush1.msra.mxu0 0.0
    %836 = vmatprep.subr.mxu0 0.0
    %837 = vmatpush1.msra.mxu0 0.0
    %838 = vmatprep.subr.mxu0 0.0
    %839 = vmatpush1.msra.mxu0 0.0
    %840 = vmatprep.subr.mxu0 0.0
    %841 = vmatpush1.msra.mxu0 0.0
    %842 = vmatprep.subr.mxu0 0.0
    %843 = vmatpush1.msra.mxu0 0.0
    %844 = vmatprep.subr.mxu0 0.0
    %845 = vmatpush1.msra.mxu0 0.0
    %846 = vmatprep.subr.mxu0 0.0
    %847 = vmatpush1.msra.mxu0 0.0
    %848 = vmatprep.subr.mxu0 0.0
    %849 = vmatpush1.msra.mxu0 0.0
    %850 = vmatprep.subr.mxu0 0.0
    %851 = vmatpush1.msra.mxu0 0.0
    %852 = vmatprep.subr.mxu0 0.0
    %853 = vmatpush1.msra.mxu0 0.0
    %854 = vmatprep.subr.mxu0 0.0
    %855 = vmatpush1.msra.mxu0 0.0
    %856 = vmatprep.subr.mxu0 0.0
    %857 = vmatpush1.msra.mxu0 0.0
    %858 = vmatprep.subr.mxu0 0.0
    %859 = vmatpush1.msra.mxu0 0.0
    %860 = vmatprep.subr.mxu0 0.0
    %861 = vmatpush1.msra.mxu0 0.0
    %862 = vmatprep.subr.mxu0 0.0
    %863 = vmatpush1.msra.mxu0 0.0
    %864 = vmatprep.subr.mxu0 0.0
    %865 = vmatpush1.msra.mxu0 0.0
    %866 = vmatprep.subr.mxu0 0.0
    %867 = vmatpush1.msra.mxu0 0.0
    %868 = vmatprep.subr.mxu0 0.0
    %869 = vmatpush1.msra.mxu0 0.0
    %870 = vmatprep.subr.mxu0 0.0
    %871 = vmatpush1.msra.mxu0 0.0
    %872 = vmatprep.subr.mxu0 0.0
    %873 = vmatpush1.msra.mxu0 0.0
    %874 = vmatprep.subr.mxu0 0.0
    %875 = vmatpush1.msra.mxu0 0.0
    %876 = vmatprep.subr.mxu0 0.0
    %877 = vmatpush1.msra.mxu0 0.0
    %878 = vmatprep.subr.mxu0 0.0
    %879 = vmatpush1.msra.mxu0 0.0
    %880 = vmatprep.subr.mxu0 0.0
    %881 = vmatpush1.msra.mxu0 0.0
    %882 = vmatprep.subr.mxu0 0.0
    %883 = vmatpush1.msra.mxu0 0.0
    %884 = vmatprep.subr.mxu0 0.0
    %885 = vmatpush1.msra.mxu0 0.0
    %886 = vmatprep.mubr.f32.mxu0 0.0
    %887 = vmatmul.mubr.f32.gmra.mrb[0].mxu0 %v820
    %v888 = vpop.f32.mrb[0].mxu0
    %v889 = vadd.f32 0.0, %v888
    %v890 = vpop.f32.mrb[0].mxu0
    %891 = vdwg.mxu0
    %v892 = vadd.f32 %v818, %v889
    %v893 = vmul.f32 %v892, 0.5
    %v894 = vsel %vm126, %v892, %v893
    %v895 = vtanh.pop %v894
    %v896 = vmul.f32 %v895, 0.5
    %v897 = vadd.f32 %v896, 0.5
    %v898 = vsel %vm126, %v895, %v897
    %900 = vrot.lane.b32.xlu0 %v817, 32
    %v901 = vpop.permute.xlu0 %900
    %v903 = vmul.f32 %v898, %v901
    %905 = vrot.lane.b32.xlu0 %v898, 64
    %v906 = vpop.permute.xlu0 %905
    %v908 = vmul.f32 %v898, %v906
    %910 = vrot.lane.b32.xlu0 %v908, 32
    %v911 = vpop.permute.xlu0 %910
    %v913 = vadd.f32 %v903, %v911
    %v914 = vtanh.pop %v913
    %916 = vrot.lane.b32.xlu0 %v914, 64
    %v917 = vpop.permute.xlu0 %916
    %v919 = vmul.f32 %v898, %v917
    %s920 = scalar_lea.vmem %s0, 32
    %v921 = vld [vmem:[%s920] sm:$0xff]
    %923 = vrot.lane.b32.xlu0 %v921, 96
    %v924 = vpop.permute.xlu0 %923
    %v926 = vmul.f32 %v919, %v924
    %928 = vrot.lane.b32.xlu0 %v926, 32
    %v929 = vpop.permute.xlu0 %928
    %s931 = scalar_lea.vmem [#allocation3], 32
    %932 = vst.msk [vmem:[%s931] sm:$0xff] %vm147, %v929
    %vm933 = vcmp.gt.f32.partialorder %v921, 0.0
    %935 = vrot.lane.b32.xlu0 %v919, 32
    %v936 = vpop.permute.xlu0 %935
    %v938 = vsel %vm933, %v936, %v812
    %940 = vrot.lane.b32.xlu0 %v913, 96
    %v941 = vpop.permute.xlu0 %940
    %v943 = vsel %vm933, %v941, %v817
    %v944 = vld [vmem:[%s302] sm:$0xff]
    %v946 = vsel %vm147, %v938, 0
    %948 = vmatprep.subr.mxu0 0.0
    %949 = vmatpush1.msra.mxu0 %v316
    %950 = vmatprep.subr.mxu0 0.0
    %951 = vmatpush1.msra.mxu0 %v317
    %952 = vmatprep.subr.mxu0 0.0
    %953 = vmatpush1.msra.mxu0 %v318
    %954 = vmatprep.subr.mxu0 0.0
    %955 = vmatpush1.msra.mxu0 %v319
    %956 = vmatprep.subr.mxu0 0.0
    %957 = vmatpush1.msra.mxu0 0.0
    %958 = vmatprep.subr.mxu0 0.0
    %959 = vmatpush1.msra.mxu0 0.0
    %960 = vmatprep.subr.mxu0 0.0
    %961 = vmatpush1.msra.mxu0 0.0
    %962 = vmatprep.subr.mxu0 0.0
    %963 = vmatpush1.msra.mxu0 0.0
    %964 = vmatprep.subr.mxu0 0.0
    %965 = vmatpush1.msra.mxu0 0.0
    %966 = vmatprep.subr.mxu0 0.0
    %967 = vmatpush1.msra.mxu0 0.0
    %968 = vmatprep.subr.mxu0 0.0
    %969 = vmatpush1.msra.mxu0 0.0
    %970 = vmatprep.subr.mxu0 0.0
    %971 = vmatpush1.msra.mxu0 0.0
    %972 = vmatprep.subr.mxu0 0.0
    %973 = vmatpush1.msra.mxu0 0.0
    %974 = vmatprep.subr.mxu0 0.0
    %975 = vmatpush1.msra.mxu0 0.0
    %976 = vmatprep.subr.mxu0 0.0
    %977 = vmatpush1.msra.mxu0 0.0
    %978 = vmatprep.subr.mxu0 0.0
    %979 = vmatpush1.msra.mxu0 0.0
    %980 = vmatprep.subr.mxu0 0.0
    %981 = vmatpush1.msra.mxu0 0.0
    %982 = vmatprep.subr.mxu0 0.0
    %983 = vmatpush1.msra.mxu0 0.0
    %984 = vmatprep.subr.mxu0 0.0
    %985 = vmatpush1.msra.mxu0 0.0
    %986 = vmatprep.subr.mxu0 0.0
    %987 = vmatpush1.msra.mxu0 0.0
    %988 = vmatprep.subr.mxu0 0.0
    %989 = vmatpush1.msra.mxu0 0.0
    %990 = vmatprep.subr.mxu0 0.0
    %991 = vmatpush1.msra.mxu0 0.0
    %992 = vmatprep.subr.mxu0 0.0
    %993 = vmatpush1.msra.mxu0 0.0
    %994 = vmatprep.subr.mxu0 0.0
    %995 = vmatpush1.msra.mxu0 0.0
    %996 = vmatprep.subr.mxu0 0.0
    %997 = vmatpush1.msra.mxu0 0.0
    %998 = vmatprep.subr.mxu0 0.0
    %999 = vmatpush1.msra.mxu0 0.0
    %1000 = vmatprep.subr.mxu0 0.0
    %1001 = vmatpush1.msra.mxu0 0.0
    %1002 = vmatprep.subr.mxu0 0.0
    %1003 = vmatpush1.msra.mxu0 0.0
    %1004 = vmatprep.subr.mxu0 0.0
    %1005 = vmatpush1.msra.mxu0 0.0
    %1006 = vmatprep.subr.mxu0 0.0
    %1007 = vmatpush1.msra.mxu0 0.0
    %1008 = vmatprep.subr.mxu0 0.0
    %1009 = vmatpush1.msra.mxu0 0.0
    %1010 = vmatprep.subr.mxu0 0.0
    %1011 = vmatpush1.msra.mxu0 0.0
    %1012 = vmatprep.mubr.f32.mxu0 0.0
    %1013 = vmatmul.mubr.f32.gmra.mrb[0].mxu0 %v946
    %v1014 = vpop.f32.mrb[0].mxu0
    %v1015 = vadd.f32 0.0, %v1014
    %v1016 = vpop.f32.mrb[0].mxu0
    %1017 = vdwg.mxu0
    %v1018 = vadd.f32 %v944, %v1015
    %v1019 = vmul.f32 %v1018, 0.5
    %v1020 = vsel %vm126, %v1018, %v1019
    %v1021 = vtanh.pop %v1020
    %v1022 = vmul.f32 %v1021, 0.5
    %v1023 = vadd.f32 %v1022, 0.5
    %v1024 = vsel %vm126, %v1021, %v1023
    %1026 = vrot.lane.b32.xlu0 %v943, 32
    %v1027 = vpop.permute.xlu0 %1026
    %v1029 = vmul.f32 %v1024, %v1027
    %1031 = vrot.lane.b32.xlu0 %v1024, 64
    %v1032 = vpop.permute.xlu0 %1031
    %v1034 = vmul.f32 %v1024, %v1032
    %1036 = vrot.lane.b32.xlu0 %v1034, 32
    %v1037 = vpop.permute.xlu0 %1036
    %v1039 = vadd.f32 %v1029, %v1037
    %v1040 = vtanh.pop %v1039
    %1042 = vrot.lane.b32.xlu0 %v1040, 64
    %v1043 = vpop.permute.xlu0 %1042
    %v1045 = vmul.f32 %v1024, %v1043
    %s1046 = scalar_lea.vmem %s0, 40
    %v1047 = vld [vmem:[%s1046] sm:$0xff]
    %1049 = vrot.lane.b32.xlu0 %v1047, 96
    %v1050 = vpop.permute.xlu0 %1049
    %v1052 = vmul.f32 %v1045, %v1050
    %1054 = vrot.lane.b32.xlu0 %v1052, 32
    %v1055 = vpop.permute.xlu0 %1054
    %s1057 = scalar_lea.vmem [#allocation3], 40
    %1058 = vst.msk [vmem:[%s1057] sm:$0xff] %vm147, %v1055
    %vm1059 = vcmp.gt.f32.partialorder %v1047, 0.0
    %1061 = vrot.lane.b32.xlu0 %v1045, 32
    %v1062 = vpop.permute.xlu0 %1061
    %v1064 = vsel %vm1059, %v1062, %v938
    %1066 = vrot.lane.b32.xlu0 %v1039, 96
    %v1067 = vpop.permute.xlu0 %1066
    %v1069 = vsel %vm1059, %v1067, %v943
    %v1070 = vld [vmem:[%s294] sm:$0xff]
    %v1072 = vsel %vm147, %v1064, 0
    %1074 = vmatprep.subr.mxu0 0.0
    %1075 = vmatpush1.msra.mxu0 %v316
    %1076 = vmatprep.subr.mxu0 0.0
    %1077 = vmatpush1.msra.mxu0 %v317
    %1078 = vmatprep.subr.mxu0 0.0
    %1079 = vmatpush1.msra.mxu0 %v318
    %1080 = vmatprep.subr.mxu0 0.0
    %1081 = vmatpush1.msra.mxu0 %v319
    %1082 = vmatprep.subr.mxu0 0.0
    %1083 = vmatpush1.msra.mxu0 0.0
    %1084 = vmatprep.subr.mxu0 0.0
    %1085 = vmatpush1.msra.mxu0 0.0
    %1086 = vmatprep.subr.mxu0 0.0
    %1087 = vmatpush1.msra.mxu0 0.0
    %1088 = vmatprep.subr.mxu0 0.0
    %1089 = vmatpush1.msra.mxu0 0.0
    %1090 = vmatprep.subr.mxu0 0.0
    %1091 = vmatpush1.msra.mxu0 0.0
    %1092 = vmatprep.subr.mxu0 0.0
    %1093 = vmatpush1.msra.mxu0 0.0
    %1094 = vmatprep.subr.mxu0 0.0
    %1095 = vmatpush1.msra.mxu0 0.0
    %1096 = vmatprep.subr.mxu0 0.0
    %1097 = vmatpush1.msra.mxu0 0.0
    %1098 = vmatprep.subr.mxu0 0.0
    %1099 = vmatpush1.msra.mxu0 0.0
    %1100 = vmatprep.subr.mxu0 0.0
    %1101 = vmatpush1.msra.mxu0 0.0
    %1102 = vmatprep.subr.mxu0 0.0
    %1103 = vmatpush1.msra.mxu0 0.0
    %1104 = vmatprep.subr.mxu0 0.0
    %1105 = vmatpush1.msra.mxu0 0.0
    %1106 = vmatprep.subr.mxu0 0.0
    %1107 = vmatpush1.msra.mxu0 0.0
    %1108 = vmatprep.subr.mxu0 0.0
    %1109 = vmatpush1.msra.mxu0 0.0
    %1110 = vmatprep.subr.mxu0 0.0
    %1111 = vmatpush1.msra.mxu0 0.0
    %1112 = vmatprep.subr.mxu0 0.0
    %1113 = vmatpush1.msra.mxu0 0.0
    %1114 = vmatprep.subr.mxu0 0.0
    %1115 = vmatpush1.msra.mxu0 0.0
    %1116 = vmatprep.subr.mxu0 0.0
    %1117 = vmatpush1.msra.mxu0 0.0
    %1118 = vmatprep.subr.mxu0 0.0
    %1119 = vmatpush1.msra.mxu0 0.0
    %1120 = vmatprep.subr.mxu0 0.0
    %1121 = vmatpush1.msra.mxu0 0.0
    %1122 = vmatprep.subr.mxu0 0.0
    %1123 = vmatpush1.msra.mxu0 0.0
    %1124 = vmatprep.subr.mxu0 0.0
    %1125 = vmatpush1.msra.mxu0 0.0
    %1126 = vmatprep.subr.mxu0 0.0
    %1127 = vmatpush1.msra.mxu0 0.0
    %1128 = vmatprep.subr.mxu0 0.0
    %1129 = vmatpush1.msra.mxu0 0.0
    %1130 = vmatprep.subr.mxu0 0.0
    %1131 = vmatpush1.msra.mxu0 0.0
    %1132 = vmatprep.subr.mxu0 0.0
    %1133 = vmatpush1.msra.mxu0 0.0
    %1134 = vmatprep.subr.mxu0 0.0
    %1135 = vmatpush1.msra.mxu0 0.0
    %1136 = vmatprep.subr.mxu0 0.0
    %1137 = vmatpush1.msra.mxu0 0.0
    %1138 = vmatprep.mubr.f32.mxu0 0.0
    %1139 = vmatmul.mubr.f32.gmra.mrb[0].mxu0 %v1072
    %v1140 = vpop.f32.mrb[0].mxu0
    %v1141 = vadd.f32 0.0, %v1140
    %v1142 = vpop.f32.mrb[0].mxu0
    %1143 = vdwg.mxu0
    %v1144 = vadd.f32 %v1070, %v1141
    %v1145 = vmul.f32 %v1144, 0.5
    %v1146 = vsel %vm126, %v1144, %v1145
    %v1147 = vtanh.pop %v1146
    %v1148 = vmul.f32 %v1147, 0.5
    %v1149 = vadd.f32 %v1148, 0.5
    %v1150 = vsel %vm126, %v1147, %v1149
    %1152 = vrot.lane.b32.xlu0 %v1069, 32
    %v1153 = vpop.permute.xlu0 %1152
    %v1155 = vmul.f32 %v1150, %v1153
    %1157 = vrot.lane.b32.xlu0 %v1150, 64
    %v1158 = vpop.permute.xlu0 %1157
    %v1160 = vmul.f32 %v1150, %v1158
    %1162 = vrot.lane.b32.xlu0 %v1160, 32
    %v1163 = vpop.permute.xlu0 %1162
    %v1165 = vadd.f32 %v1155, %v1163
    %v1166 = vtanh.pop %v1165
    %1168 = vrot.lane.b32.xlu0 %v1166, 64
    %v1169 = vpop.permute.xlu0 %1168
    %v1171 = vmul.f32 %v1150, %v1169
    %s1172 = scalar_lea.vmem %s0, 48
    %v1173 = vld [vmem:[%s1172] sm:$0xff]
    %1175 = vrot.lane.b32.xlu0 %v1173, 96
    %v1176 = vpop.permute.xlu0 %1175
    %v1178 = vmul.f32 %v1171, %v1176
    %1180 = vrot.lane.b32.xlu0 %v1178, 32
    %v1181 = vpop.permute.xlu0 %1180
    %s1183 = scalar_lea.vmem [#allocation3], 48
    %1184 = vst.msk [vmem:[%s1183] sm:$0xff] %vm147, %v1181
    %vm1185 = vcmp.gt.f32.partialorder %v1173, 0.0
    %1187 = vrot.lane.b32.xlu0 %v1171, 32
    %v1188 = vpop.permute.xlu0 %1187
    %v1190 = vsel %vm1185, %v1188, %v1064
    %1192 = vrot.lane.b32.xlu0 %v1165, 96
    %v1193 = vpop.permute.xlu0 %1192
    %v1195 = vsel %vm1185, %v1193, %v1069
    %v1196 = vld [vmem:[%s286] sm:$0xff]
    %v1198 = vsel %vm147, %v1190, 0
    %1200 = vmatprep.subr.mxu0 0.0
    %1201 = vmatpush1.msra.mxu0 %v316
    %1202 = vmatprep.subr.mxu0 0.0
    %1203 = vmatpush1.msra.mxu0 %v317
    %1204 = vmatprep.subr.mxu0 0.0
    %1205 = vmatpush1.msra.mxu0 %v318
    %1206 = vmatprep.subr.mxu0 0.0
    %1207 = vmatpush1.msra.mxu0 %v319
    %1208 = vmatprep.subr.mxu0 0.0
    %1209 = vmatpush1.msra.mxu0 0.0
    %1210 = vmatprep.subr.mxu0 0.0
    %1211 = vmatpush1.msra.mxu0 0.0
    %1212 = vmatprep.subr.mxu0 0.0
    %1213 = vmatpush1.msra.mxu0 0.0
    %1214 = vmatprep.subr.mxu0 0.0
    %1215 = vmatpush1.msra.mxu0 0.0
    %1216 = vmatprep.subr.mxu0 0.0
    %1217 = vmatpush1.msra.mxu0 0.0
    %1218 = vmatprep.subr.mxu0 0.0
    %1219 = vmatpush1.msra.mxu0 0.0
    %1220 = vmatprep.subr.mxu0 0.0
    %1221 = vmatpush1.msra.mxu0 0.0
    %1222 = vmatprep.subr.mxu0 0.0
    %1223 = vmatpush1.msra.mxu0 0.0
    %1224 = vmatprep.subr.mxu0 0.0
    %1225 = vmatpush1.msra.mxu0 0.0
    %1226 = vmatprep.subr.mxu0 0.0
    %1227 = vmatpush1.msra.mxu0 0.0
    %1228 = vmatprep.subr.mxu0 0.0
    %1229 = vmatpush1.msra.mxu0 0.0
    %1230 = vmatprep.subr.mxu0 0.0
    %1231 = vmatpush1.msra.mxu0 0.0
    %1232 = vmatprep.subr.mxu0 0.0
    %1233 = vmatpush1.msra.mxu0 0.0
    %1234 = vmatprep.subr.mxu0 0.0
    %1235 = vmatpush1.msra.mxu0 0.0
    %1236 = vmatprep.subr.mxu0 0.0
    %1237 = vmatpush1.msra.mxu0 0.0
    %1238 = vmatprep.subr.mxu0 0.0
    %1239 = vmatpush1.msra.mxu0 0.0
    %1240 = vmatprep.subr.mxu0 0.0
    %1241 = vmatpush1.msra.mxu0 0.0
    %1242 = vmatprep.subr.mxu0 0.0
    %1243 = vmatpush1.msra.mxu0 0.0
    %1244 = vmatprep.subr.mxu0 0.0
    %1245 = vmatpush1.msra.mxu0 0.0
    %1246 = vmatprep.subr.mxu0 0.0
    %1247 = vmatpush1.msra.mxu0 0.0
    %1248 = vmatprep.subr.mxu0 0.0
    %1249 = vmatpush1.msra.mxu0 0.0
    %1250 = vmatprep.subr.mxu0 0.0
    %1251 = vmatpush1.msra.mxu0 0.0
    %1252 = vmatprep.subr.mxu0 0.0
    %1253 = vmatpush1.msra.mxu0 0.0
    %1254 = vmatprep.subr.mxu0 0.0
    %1255 = vmatpush1.msra.mxu0 0.0
    %1256 = vmatprep.subr.mxu0 0.0
    %1257 = vmatpush1.msra.mxu0 0.0
    %1258 = vmatprep.subr.mxu0 0.0
    %1259 = vmatpush1.msra.mxu0 0.0
    %1260 = vmatprep.subr.mxu0 0.0
    %1261 = vmatpush1.msra.mxu0 0.0
    %1262 = vmatprep.subr.mxu0 0.0
    %1263 = vmatpush1.msra.mxu0 0.0
    %1264 = vmatprep.mubr.f32.mxu0 0.0
    %1265 = vmatmul.mubr.f32.gmra.mrb[0].mxu0 %v1198
    %v1266 = vpop.f32.mrb[0].mxu0
    %v1267 = vadd.f32 0.0, %v1266
    %v1268 = vpop.f32.mrb[0].mxu0
    %1269 = vdwg.mxu0
    %v1270 = vadd.f32 %v1196, %v1267
    %v1271 = vmul.f32 %v1270, 0.5
    %v1272 = vsel %vm126, %v1270, %v1271
    %v1273 = vtanh.pop %v1272
    %v1274 = vmul.f32 %v1273, 0.5
    %v1275 = vadd.f32 %v1274, 0.5
    %v1276 = vsel %vm126, %v1273, %v1275
    %1278 = vrot.lane.b32.xlu0 %v1195, 32
    %v1279 = vpop.permute.xlu0 %1278
    %v1281 = vmul.f32 %v1276, %v1279
    %1283 = vrot.lane.b32.xlu0 %v1276, 64
    %v1284 = vpop.permute.xlu0 %1283
    %v1286 = vmul.f32 %v1276, %v1284
    %1288 = vrot.lane.b32.xlu0 %v1286, 32
    %v1289 = vpop.permute.xlu0 %1288
    %v1291 = vadd.f32 %v1281, %v1289
    %v1292 = vtanh.pop %v1291
    %1294 = vrot.lane.b32.xlu0 %v1292, 64
    %v1295 = vpop.permute.xlu0 %1294
    %v1297 = vmul.f32 %v1276, %v1295
    %s1298 = scalar_lea.vmem %s0, 56
    %v1299 = vld [vmem:[%s1298] sm:$0xff]
    %1301 = vrot.lane.b32.xlu0 %v1299, 96
    %v1302 = vpop.permute.xlu0 %1301
    %v1304 = vmul.f32 %v1297, %v1302
    %1306 = vrot.lane.b32.xlu0 %v1304, 32
    %v1307 = vpop.permute.xlu0 %1306
    %s1309 = scalar_lea.vmem [#allocation3], 56
    %1310 = vst.msk [vmem:[%s1309] sm:$0xff] %vm147, %v1307
    %v1311 = vld [vmem:[#allocation3] sm:$0xff]
    %v1312 = vld [vmem:[%s1309] sm:$0xff]
    %v1313 = vsel %vm127, %v1312, %v1311
    %1314 = vst.msk [vmem:[#allocation3] sm:$0xff] %vm147, %v1313
    %v1315 = vsel %vm127, %v1311, %v1312
    %1316 = vst.msk [vmem:[%s1309] sm:$0xff] %vm147, %v1315
    %v1317 = vld [vmem:[%s553] sm:$0xff]
    %v1318 = vld [vmem:[%s1183] sm:$0xff]
    %v1319 = vsel %vm127, %v1318, %v1317
    %1320 = vst.msk [vmem:[%s553] sm:$0xff] %vm147, %v1319
    %v1321 = vsel %vm127, %v1317, %v1318
    %1322 = vst.msk [vmem:[%s1183] sm:$0xff] %vm147, %v1321
    %v1323 = vld [vmem:[%s679] sm:$0xff]
    %v1324 = vld [vmem:[%s1057] sm:$0xff]
    %v1325 = vsel %vm127, %v1324, %v1323
    %1326 = vst.msk [vmem:[%s679] sm:$0xff] %vm147, %v1325
    %v1327 = vsel %vm127, %v1323, %v1324
    %1328 = vst.msk [vmem:[%s1057] sm:$0xff] %vm147, %v1327
    %v1329 = vld [vmem:[%s805] sm:$0xff]
    %v1330 = vld [vmem:[%s931] sm:$0xff]
    %v1331 = vsel %vm127, %v1330, %v1329
    %1332 = vst.msk [vmem:[%s805] sm:$0xff] %vm147, %v1331
    %v1333 = vsel %vm127, %v1329, %v1330
    %1334 = vst.msk [vmem:[%s931] sm:$0xff] %vm147, %v1333
    %v1335 = vld [vmem:[#allocation3] sm:$0xff]
    %v1336 = vld [vmem:[#allocation3 + $0x8] sm:$0xff]
    %v1337 = vld [vmem:[#allocation3 + $0x10] sm:$0xff]
    %v1338 = vld [vmem:[#allocation3 + $0x18] sm:$0xff]
    %v1339 = vld [vmem:[#allocation3 + $0x20] sm:$0xff]
    %v1340 = vld [vmem:[#allocation3 + $0x28] sm:$0xff]
    %v1341 = vld [vmem:[#allocation3 + $0x30] sm:$0xff]
    %v1342 = vld [vmem:[#allocation3 + $0x38] sm:$0xff]
    %v1343 = vld [vmem:[#allocation7] sm:$0xff]
    %v1344 = vld [vmem:[#allocation7 + $0x8] sm:$0xff]
    %v1345 = vld [vmem:[#allocation7 + $0x10] sm:$0xff]
    %v1346 = vld [vmem:[#allocation7 + $0x18] sm:$0xff]
    %v1347 = vld [vmem:[%s7] sm:$0x1]
    %v1349 = vlaneseq
    %v1350 = vshrl.u32 %v1349, 7
    %v1351 = vsub.s32 0, %v1350
    %v1352 = vrot.slane %v1347, %v1351
    %v1355 = vsel %vm147, %v1335, 0
    %v1358 = vsel %vm147, %v1336, 0
    %v1361 = vsel %vm147, %v1337, 0
    %v1364 = vsel %vm147, %v1338, 0
    %v1367 = vsel %vm147, %v1339, 0
    %v1370 = vsel %vm147, %v1340, 0
    %v1373 = vsel %vm147, %v1341, 0
    %v1376 = vsel %vm147, %v1342, 0
    %1378 = vmatprep.subr.mxu0 0.0
    %1379 = vmatpush1.msra.mxu0 %v1343
    %1380 = vmatprep.subr.mxu0 0.0
    %1381 = vmatpush1.msra.mxu0 %v1344
    %1382 = vmatprep.subr.mxu0 0.0
    %1383 = vmatpush1.msra.mxu0 %v1345
    %1384 = vmatprep.subr.mxu0 0.0
    %1385 = vmatpush1.msra.mxu0 %v1346
    %1386 = vmatprep.subr.mxu0 0.0
    %1387 = vmatpush1.msra.mxu0 0.0
    %1388 = vmatprep.subr.mxu0 0.0
    %1389 = vmatpush1.msra.mxu0 0.0
    %1390 = vmatprep.subr.mxu0 0.0
    %1391 = vmatpush1.msra.mxu0 0.0
    %1392 = vmatprep.subr.mxu0 0.0
    %1393 = vmatpush1.msra.mxu0 0.0
    %1394 = vmatprep.subr.mxu0 0.0
    %1395 = vmatpush1.msra.mxu0 0.0
    %1396 = vmatprep.subr.mxu0 0.0
    %1397 = vmatpush1.msra.mxu0 0.0
    %1398 = vmatprep.subr.mxu0 0.0
    %1399 = vmatpush1.msra.mxu0 0.0
    %1400 = vmatprep.subr.mxu0 0.0
    %1401 = vmatpush1.msra.mxu0 0.0
    %1402 = vmatprep.subr.mxu0 0.0
    %1403 = vmatpush1.msra.mxu0 0.0
    %1404 = vmatprep.subr.mxu0 0.0
    %1405 = vmatpush1.msra.mxu0 0.0
    %1406 = vmatprep.subr.mxu0 0.0
    %1407 = vmatpush1.msra.mxu0 0.0
    %1408 = vmatprep.subr.mxu0 0.0
    %1409 = vmatpush1.msra.mxu0 0.0
    %1410 = vmatprep.subr.mxu0 0.0
    %1411 = vmatpush1.msra.mxu0 0.0
    %1412 = vmatprep.subr.mxu0 0.0
    %1413 = vmatpush1.msra.mxu0 0.0
    %1414 = vmatprep.subr.mxu0 0.0
    %1415 = vmatpush1.msra.mxu0 0.0
    %1416 = vmatprep.subr.mxu0 0.0
    %1417 = vmatpush1.msra.mxu0 0.0
    %1418 = vmatprep.subr.mxu0 0.0
    %1419 = vmatpush1.msra.mxu0 0.0
    %1420 = vmatprep.subr.mxu0 0.0
    %1421 = vmatpush1.msra.mxu0 0.0
    %1422 = vmatprep.subr.mxu0 0.0
    %1423 = vmatpush1.msra.mxu0 0.0
    %1424 = vmatprep.subr.mxu0 0.0
    %1425 = vmatpush1.msra.mxu0 0.0
    %1426 = vmatprep.subr.mxu0 0.0
    %1427 = vmatpush1.msra.mxu0 0.0
    %1428 = vmatprep.subr.mxu0 0.0
    %1429 = vmatpush1.msra.mxu0 0.0
    %1430 = vmatprep.subr.mxu0 0.0
    %1431 = vmatpush1.msra.mxu0 0.0
    %1432 = vmatprep.subr.mxu0 0.0
    %1433 = vmatpush1.msra.mxu0 0.0
    %1434 = vmatprep.subr.mxu0 0.0
    %1435 = vmatpush1.msra.mxu0 0.0
    %1436 = vmatprep.subr.mxu0 0.0
    %1437 = vmatpush1.msra.mxu0 0.0
    %1438 = vmatprep.subr.mxu0 0.0
    %1439 = vmatpush1.msra.mxu0 0.0
    %1440 = vmatprep.subr.mxu0 0.0
    %1441 = vmatpush1.msra.mxu0 0.0
    %1442 = vmatprep.mubr.f32.mxu0 0.0
    %1443 = vmatmul.mubr.f32.gmra.mrb[0].mxu0 %v1355
    %v1444 = vpop.f32.mrb[0].mxu0
    %v1445 = vadd.f32 %v1352, %v1444
    %v1446 = vpop.f32.mrb[0].mxu0
    %1447 = vmatprep.mubr.f32.mxu0 0.0
    %1448 = vmatmul.mubr.f32.gmra.mrb[0].mxu0 %v1358
    %v1449 = vpop.f32.mrb[0].mxu0
    %v1450 = vadd.f32 %v1352, %v1449
    %v1451 = vpop.f32.mrb[0].mxu0
    %1452 = vmatprep.mubr.f32.mxu0 0.0
    %1453 = vmatmul.mubr.f32.gmra.mrb[0].mxu0 %v1361
    %v1454 = vpop.f32.mrb[0].mxu0
    %v1455 = vadd.f32 %v1352, %v1454
    %v1456 = vpop.f32.mrb[0].mxu0
    %1457 = vmatprep.mubr.f32.mxu0 0.0
    %1458 = vmatmul.mubr.f32.gmra.mrb[0].mxu0 %v1364
    %v1459 = vpop.f32.mrb[0].mxu0
    %v1460 = vadd.f32 %v1352, %v1459
    %v1461 = vpop.f32.mrb[0].mxu0
    %1462 = vmatprep.mubr.f32.mxu0 0.0
    %1463 = vmatmul.mubr.f32.gmra.mrb[0].mxu0 %v1367
    %v1464 = vpop.f32.mrb[0].mxu0
    %v1465 = vadd.f32 %v1352, %v1464
    %v1466 = vpop.f32.mrb[0].mxu0
    %1467 = vmatprep.mubr.f32.mxu0 0.0
    %1468 = vmatmul.mubr.f32.gmra.mrb[0].mxu0 %v1370
    %v1469 = vpop.f32.mrb[0].mxu0
    %v1470 = vadd.f32 %v1352, %v1469
    %v1471 = vpop.f32.mrb[0].mxu0
    %1472 = vmatprep.mubr.f32.mxu0 0.0
    %1473 = vmatmul.mubr.f32.gmra.mrb[0].mxu0 %v1373
    %v1474 = vpop.f32.mrb[0].mxu0
    %v1475 = vadd.f32 %v1352, %v1474
    %v1476 = vpop.f32.mrb[0].mxu0
    %1477 = vmatprep.mubr.f32.mxu0 0.0
    %1478 = vmatmul.mubr.f32.gmra.mrb[0].mxu0 %v1376
    %v1479 = vpop.f32.mrb[0].mxu0
    %v1480 = vadd.f32 %v1352, %v1479
    %v1481 = vpop.f32.mrb[0].mxu0
    %1482 = vdwg.mxu0
    %1483 = vst [vmem:[#allocation2] sm:$0xff] %v1445
    %1484 = vst [vmem:[#allocation2 + $0x8] sm:$0xff] %v1450
    %1485 = vst [vmem:[#allocation2 + $0x10] sm:$0xff] %v1455
    %1486 = vst [vmem:[#allocation2 + $0x18] sm:$0xff] %v1460
    %1487 = vst [vmem:[#allocation2 + $0x20] sm:$0xff] %v1465
    %1488 = vst [vmem:[#allocation2 + $0x28] sm:$0xff] %v1470
    %1489 = vst [vmem:[#allocation2 + $0x30] sm:$0xff] %v1475
    %1490 = vst [vmem:[#allocation2 + $0x38] sm:$0xff] %v1480
    %v1491 = vld [vmem:[#allocation2] sm:$0xff]
    %v1492 = vld [vmem:[%s286] sm:$0xff]
    %v1493 = vsel %vm124, %v1491, %v1492
    %1494 = vst [vmem:[#allocation2] sm:$0xff] %v1493
    %v1495 = vsel %vm124, %v1492, %v1491
    %1496 = vst [vmem:[%s286] sm:$0xff] %v1495
    %v1497 = vld [vmem:[%s292] sm:$0xff]
    %v1498 = vld [vmem:[%s294] sm:$0xff]
    %v1499 = vsel %vm124, %v1497, %v1498
    %1500 = vst [vmem:[%s292] sm:$0xff] %v1499
    %v1501 = vsel %vm124, %v1498, %v1497
    %1502 = vst [vmem:[%s294] sm:$0xff] %v1501
    %v1503 = vld [vmem:[%s300] sm:$0xff]
    %v1504 = vld [vmem:[%s302] sm:$0xff]
    %v1505 = vsel %vm124, %v1503, %v1504
    %1506 = vst [vmem:[%s300] sm:$0xff] %v1505
    %v1507 = vsel %vm124, %v1504, %v1503
    %1508 = vst [vmem:[%s302] sm:$0xff] %v1507
    %v1509 = vld [vmem:[%s308] sm:$0xff]
    %v1510 = vld [vmem:[%s310] sm:$0xff]
    %v1511 = vsel %vm124, %v1509, %v1510
    %1512 = vst [vmem:[%s308] sm:$0xff] %v1511
    %v1513 = vsel %vm124, %v1510, %v1509
    %1514 = vst [vmem:[%s310] sm:$0xff] %v1513
    %v1515 = vld [vmem:[#allocation9] sm:$0xff]
    %v1516 = vld [vmem:[#allocation9 + $0x8] sm:$0xff]
    %v1517 = vld [vmem:[#allocation9 + $0x10] sm:$0xff]
    %v1518 = vld [vmem:[#allocation9 + $0x18] sm:$0xff]
    %v1519 = vld [vmem:[#allocation2] sm:$0xff]
    %1520 = vmatprep.subr.mxu0 0.0
    %1521 = vmatpush1.msra.mxu0 %v1515
    %1522 = vmatprep.subr.mxu0 0.0
    %1523 = vmatpush1.msra.mxu0 %v1516
    %1524 = vmatprep.subr.mxu0 0.0
    %1525 = vmatpush1.msra.mxu0 %v1517
    %1526 = vmatprep.subr.mxu0 0.0
    %1527 = vmatpush1.msra.mxu0 %v1518
    %1528 = vmatprep.subr.mxu0 0.0
    %1529 = vmatpush1.msra.mxu0 0.0
    %1530 = vmatprep.subr.mxu0 0.0
    %1531 = vmatpush1.msra.mxu0 0.0
    %1532 = vmatprep.subr.mxu0 0.0
    %1533 = vmatpush1.msra.mxu0 0.0
    %1534 = vmatprep.subr.mxu0 0.0
    %1535 = vmatpush1.msra.mxu0 0.0
    %1536 = vmatprep.subr.mxu0 0.0
    %1537 = vmatpush1.msra.mxu0 0.0
    %1538 = vmatprep.subr.mxu0 0.0
    %1539 = vmatpush1.msra.mxu0 0.0
    %1540 = vmatprep.subr.mxu0 0.0
    %1541 = vmatpush1.msra.mxu0 0.0
    %1542 = vmatprep.subr.mxu0 0.0
    %1543 = vmatpush1.msra.mxu0 0.0
    %1544 = vmatprep.subr.mxu0 0.0
    %1545 = vmatpush1.msra.mxu0 0.0
    %1546 = vmatprep.subr.mxu0 0.0
    %1547 = vmatpush1.msra.mxu0 0.0
    %1548 = vmatprep.subr.mxu0 0.0
    %1549 = vmatpush1.msra.mxu0 0.0
    %1550 = vmatprep.subr.mxu0 0.0
    %1551 = vmatpush1.msra.mxu0 0.0
    %1552 = vmatprep.subr.mxu0 0.0
    %1553 = vmatpush1.msra.mxu0 0.0
    %1554 = vmatprep.subr.mxu0 0.0
    %1555 = vmatpush1.msra.mxu0 0.0
    %1556 = vmatprep.subr.mxu0 0.0
    %1557 = vmatpush1.msra.mxu0 0.0
    %1558 = vmatprep.subr.mxu0 0.0
    %1559 = vmatpush1.msra.mxu0 0.0
    %1560 = vmatprep.subr.mxu0 0.0
    %1561 = vmatpush1.msra.mxu0 0.0
    %1562 = vmatprep.subr.mxu0 0.0
    %1563 = vmatpush1.msra.mxu0 0.0
    %1564 = vmatprep.subr.mxu0 0.0
    %1565 = vmatpush1.msra.mxu0 0.0
    %1566 = vmatprep.subr.mxu0 0.0
    %1567 = vmatpush1.msra.mxu0 0.0
    %1568 = vmatprep.subr.mxu0 0.0
    %1569 = vmatpush1.msra.mxu0 0.0
    %1570 = vmatprep.subr.mxu0 0.0
    %1571 = vmatpush1.msra.mxu0 0.0
    %1572 = vmatprep.subr.mxu0 0.0
    %1573 = vmatpush1.msra.mxu0 0.0
    %1574 = vmatprep.subr.mxu0 0.0
    %1575 = vmatpush1.msra.mxu0 0.0
    %1576 = vmatprep.subr.mxu0 0.0
    %1577 = vmatpush1.msra.mxu0 0.0
    %1578 = vmatprep.subr.mxu0 0.0
    %1579 = vmatpush1.msra.mxu0 0.0
    %1580 = vmatprep.subr.mxu0 0.0
    %1581 = vmatpush1.msra.mxu0 0.0
    %1582 = vmatprep.subr.mxu0 0.0
    %1583 = vmatpush1.msra.mxu0 0.0
    %1584 = vmatprep.mubr.f32.mxu0 0.0
    %1585 = vmatmul.mubr.f32.gmra.mrb[0].mxu0 %v322
    %v1586 = vpop.f32.mrb[0].mxu0
    %v1587 = vadd.f32 0.0, %v1586
    %v1588 = vpop.f32.mrb[0].mxu0
    %1589 = vdwg.mxu0
    %v1590 = vadd.f32 %v1519, %v1587
    %v1591 = vmul.f32 %v1590, 0.5
    %v1592 = vsel %vm126, %v1590, %v1591
    %v1593 = vtanh.pop %v1592
    %v1594 = vmul.f32 %v1593, 0.5
    %v1595 = vadd.f32 %v1594, 0.5
    %v1596 = vsel %vm126, %v1593, %v1595
    %v1597 = vmul.f32 %v1596, 0.0
    %1599 = vrot.lane.b32.xlu0 %v1596, 64
    %v1600 = vpop.permute.xlu0 %1599
    %v1602 = vmul.f32 %v1596, %v1600
    %1604 = vrot.lane.b32.xlu0 %v1602, 32
    %v1605 = vpop.permute.xlu0 %1604
    %v1607 = vadd.f32 %v1597, %v1605
    %v1608 = vtanh.pop %v1607
    %1610 = vrot.lane.b32.xlu0 %v1608, 64
    %v1611 = vpop.permute.xlu0 %1610
    %v1613 = vmul.f32 %v1596, %v1611
    %v1614 = vld [vmem:[%s0] sm:$0xff]
    %vm1615 = vcmp.gt.f32.partialorder %v1614, 0.0
    %1617 = vrot.lane.b32.xlu0 %v1613, 32
    %v1618 = vpop.permute.xlu0 %1617
    %v1620 = vsel %vm1615, %v1618, 0.0
    %1622 = vrot.lane.b32.xlu0 %v1607, 96
    %v1623 = vpop.permute.xlu0 %1622
    %v1625 = vsel %vm1615, %v1623, 0.0
    %v1626 = vld [vmem:[%s292] sm:$0xff]
    %v1628 = vsel %vm147, %v1620, 0
    %1630 = vmatprep.subr.mxu0 0.0
    %1631 = vmatpush1.msra.mxu0 %v1515
    %1632 = vmatprep.subr.mxu0 0.0
    %1633 = vmatpush1.msra.mxu0 %v1516
    %1634 = vmatprep.subr.mxu0 0.0
    %1635 = vmatpush1.msra.mxu0 %v1517
    %1636 = vmatprep.subr.mxu0 0.0
    %1637 = vmatpush1.msra.mxu0 %v1518
    %1638 = vmatprep.subr.mxu0 0.0
    %1639 = vmatpush1.msra.mxu0 0.0
    %1640 = vmatprep.subr.mxu0 0.0
    %1641 = vmatpush1.msra.mxu0 0.0
    %1642 = vmatprep.subr.mxu0 0.0
    %1643 = vmatpush1.msra.mxu0 0.0
    %1644 = vmatprep.subr.mxu0 0.0
    %1645 = vmatpush1.msra.mxu0 0.0
    %1646 = vmatprep.subr.mxu0 0.0
    %1647 = vmatpush1.msra.mxu0 0.0
    %1648 = vmatprep.subr.mxu0 0.0
    %1649 = vmatpush1.msra.mxu0 0.0
    %1650 = vmatprep.subr.mxu0 0.0
    %1651 = vmatpush1.msra.mxu0 0.0
    %1652 = vmatprep.subr.mxu0 0.0
    %1653 = vmatpush1.msra.mxu0 0.0
    %1654 = vmatprep.subr.mxu0 0.0
    %1655 = vmatpush1.msra.mxu0 0.0
    %1656 = vmatprep.subr.mxu0 0.0
    %1657 = vmatpush1.msra.mxu0 0.0
    %1658 = vmatprep.subr.mxu0 0.0
    %1659 = vmatpush1.msra.mxu0 0.0
    %1660 = vmatprep.subr.mxu0 0.0
    %1661 = vmatpush1.msra.mxu0 0.0
    %1662 = vmatprep.subr.mxu0 0.0
    %1663 = vmatpush1.msra.mxu0 0.0
    %1664 = vmatprep.subr.mxu0 0.0
    %1665 = vmatpush1.msra.mxu0 0.0
    %1666 = vmatprep.subr.mxu0 0.0
    %1667 = vmatpush1.msra.mxu0 0.0
    %1668 = vmatprep.subr.mxu0 0.0
    %1669 = vmatpush1.msra.mxu0 0.0
    %1670 = vmatprep.subr.mxu0 0.0
    %1671 = vmatpush1.msra.mxu0 0.0
    %1672 = vmatprep.subr.mxu0 0.0
    %1673 = vmatpush1.msra.mxu0 0.0
    %1674 = vmatprep.subr.mxu0 0.0
    %1675 = vmatpush1.msra.mxu0 0.0
    %1676 = vmatprep.subr.mxu0 0.0
    %1677 = vmatpush1.msra.mxu0 0.0
    %1678 = vmatprep.subr.mxu0 0.0
    %1679 = vmatpush1.msra.mxu0 0.0
    %1680 = vmatprep.subr.mxu0 0.0
    %1681 = vmatpush1.msra.mxu0 0.0
    %1682 = vmatprep.subr.mxu0 0.0
    %1683 = vmatpush1.msra.mxu0 0.0
    %1684 = vmatprep.subr.mxu0 0.0
    %1685 = vmatpush1.msra.mxu0 0.0
    %1686 = vmatprep.subr.mxu0 0.0
    %1687 = vmatpush1.msra.mxu0 0.0
    %1688 = vmatprep.subr.mxu0 0.0
    %1689 = vmatpush1.msra.mxu0 0.0
    %1690 = vmatprep.subr.mxu0 0.0
    %1691 = vmatpush1.msra.mxu0 0.0
    %1692 = vmatprep.subr.mxu0 0.0
    %1693 = vmatpush1.msra.mxu0 0.0
    %1694 = vmatprep.mubr.f32.mxu0 0.0
    %1695 = vmatmul.mubr.f32.gmra.mrb[0].mxu0 %v1628
    %v1696 = vpop.f32.mrb[0].mxu0
    %v1697 = vadd.f32 0.0, %v1696
    %v1698 = vpop.f32.mrb[0].mxu0
    %1699 = vdwg.mxu0
    %v1700 = vadd.f32 %v1626, %v1697
    %v1701 = vmul.f32 %v1700, 0.5
    %v1702 = vsel %vm126, %v1700, %v1701
    %v1703 = vtanh.pop %v1702
    %v1704 = vmul.f32 %v1703, 0.5
    %v1705 = vadd.f32 %v1704, 0.5
    %v1706 = vsel %vm126, %v1703, %v1705
    %1708 = vrot.lane.b32.xlu0 %v1625, 32
    %v1709 = vpop.permute.xlu0 %1708
    %v1711 = vmul.f32 %v1706, %v1709
    %1713 = vrot.lane.b32.xlu0 %v1706, 64
    %v1714 = vpop.permute.xlu0 %1713
    %v1716 = vmul.f32 %v1706, %v1714
    %1718 = vrot.lane.b32.xlu0 %v1716, 32
    %v1719 = vpop.permute.xlu0 %1718
    %v1721 = vadd.f32 %v1711, %v1719
    %v1722 = vtanh.pop %v1721
    %1724 = vrot.lane.b32.xlu0 %v1722, 64
    %v1725 = vpop.permute.xlu0 %1724
    %v1727 = vmul.f32 %v1706, %v1725
    %v1728 = vld [vmem:[%s542] sm:$0xff]
    %vm1729 = vcmp.gt.f32.partialorder %v1728, 0.0
    %1731 = vrot.lane.b32.xlu0 %v1727, 32
    %v1732 = vpop.permute.xlu0 %1731
    %v1734 = vsel %vm1729, %v1732, %v1620
    %1736 = vrot.lane.b32.xlu0 %v1721, 96
    %v1737 = vpop.permute.xlu0 %1736
    %v1739 = vsel %vm1729, %v1737, %v1625
    %v1740 = vld [vmem:[%s300] sm:$0xff]
    %v1742 = vsel %vm147, %v1734, 0
    %1744 = vmatprep.subr.mxu0 0.0
    %1745 = vmatpush1.msra.mxu0 %v1515
    %1746 = vmatprep.subr.mxu0 0.0
    %1747 = vmatpush1.msra.mxu0 %v1516
    %1748 = vmatprep.subr.mxu0 0.0
    %1749 = vmatpush1.msra.mxu0 %v1517
    %1750 = vmatprep.subr.mxu0 0.0
    %1751 = vmatpush1.msra.mxu0 %v1518
    %1752 = vmatprep.subr.mxu0 0.0
    %1753 = vmatpush1.msra.mxu0 0.0
    %1754 = vmatprep.subr.mxu0 0.0
    %1755 = vmatpush1.msra.mxu0 0.0
    %1756 = vmatprep.subr.mxu0 0.0
    %1757 = vmatpush1.msra.mxu0 0.0
    %1758 = vmatprep.subr.mxu0 0.0
    %1759 = vmatpush1.msra.mxu0 0.0
    %1760 = vmatprep.subr.mxu0 0.0
    %1761 = vmatpush1.msra.mxu0 0.0
    %1762 = vmatprep.subr.mxu0 0.0
    %1763 = vmatpush1.msra.mxu0 0.0
    %1764 = vmatprep.subr.mxu0 0.0
    %1765 = vmatpush1.msra.mxu0 0.0
    %1766 = vmatprep.subr.mxu0 0.0
    %1767 = vmatpush1.msra.mxu0 0.0
    %1768 = vmatprep.subr.mxu0 0.0
    %1769 = vmatpush1.msra.mxu0 0.0
    %1770 = vmatprep.subr.mxu0 0.0
    %1771 = vmatpush1.msra.mxu0 0.0
    %1772 = vmatprep.subr.mxu0 0.0
    %1773 = vmatpush1.msra.mxu0 0.0
    %1774 = vmatprep.subr.mxu0 0.0
    %1775 = vmatpush1.msra.mxu0 0.0
    %1776 = vmatprep.subr.mxu0 0.0
    %1777 = vmatpush1.msra.mxu0 0.0
    %1778 = vmatprep.subr.mxu0 0.0
    %1779 = vmatpush1.msra.mxu0 0.0
    %1780 = vmatprep.subr.mxu0 0.0
    %1781 = vmatpush1.msra.mxu0 0.0
    %1782 = vmatprep.subr.mxu0 0.0
    %1783 = vmatpush1.msra.mxu0 0.0
    %1784 = vmatprep.subr.mxu0 0.0
    %1785 = vmatpush1.msra.mxu0 0.0
    %1786 = vmatprep.subr.mxu0 0.0
    %1787 = vmatpush1.msra.mxu0 0.0
    %1788 = vmatprep.subr.mxu0 0.0
    %1789 = vmatpush1.msra.mxu0 0.0
    %1790 = vmatprep.subr.mxu0 0.0
    %1791 = vmatpush1.msra.mxu0 0.0
    %1792 = vmatprep.subr.mxu0 0.0
    %1793 = vmatpush1.msra.mxu0 0.0
    %1794 = vmatprep.subr.mxu0 0.0
    %1795 = vmatpush1.msra.mxu0 0.0
    %1796 = vmatprep.subr.mxu0 0.0
    %1797 = vmatpush1.msra.mxu0 0.0
    %1798 = vmatprep.subr.mxu0 0.0
    %1799 = vmatpush1.msra.mxu0 0.0
    %1800 = vmatprep.subr.mxu0 0.0
    %1801 = vmatpush1.msra.mxu0 0.0
    %1802 = vmatprep.subr.mxu0 0.0
    %1803 = vmatpush1.msra.mxu0 0.0
    %1804 = vmatprep.subr.mxu0 0.0
    %1805 = vmatpush1.msra.mxu0 0.0
    %1806 = vmatprep.subr.mxu0 0.0
    %1807 = vmatpush1.msra.mxu0 0.0
    %1808 = vmatprep.mubr.f32.mxu0 0.0
    %1809 = vmatmul.mubr.f32.gmra.mrb[0].mxu0 %v1742
    %v1810 = vpop.f32.mrb[0].mxu0
    %v1811 = vadd.f32 0.0, %v1810
    %v1812 = vpop.f32.mrb[0].mxu0
    %1813 = vdwg.mxu0
    %v1814 = vadd.f32 %v1740, %v1811
    %v1815 = vmul.f32 %v1814, 0.5
    %v1816 = vsel %vm126, %v1814, %v1815
    %v1817 = vtanh.pop %v1816
    %v1818 = vmul.f32 %v1817, 0.5
    %v1819 = vadd.f32 %v1818, 0.5
    %v1820 = vsel %vm126, %v1817, %v1819
    %1822 = vrot.lane.b32.xlu0 %v1739, 32
    %v1823 = vpop.permute.xlu0 %1822
    %v1825 = vmul.f32 %v1820, %v1823
    %1827 = vrot.lane.b32.xlu0 %v1820, 64
    %v1828 = vpop.permute.xlu0 %1827
    %v1830 = vmul.f32 %v1820, %v1828
    %1832 = vrot.lane.b32.xlu0 %v1830, 32
    %v1833 = vpop.permute.xlu0 %1832
    %v1835 = vadd.f32 %v1825, %v1833
    %v1836 = vtanh.pop %v1835
    %1838 = vrot.lane.b32.xlu0 %v1836, 64
    %v1839 = vpop.permute.xlu0 %1838
    %v1841 = vmul.f32 %v1820, %v1839
    %v1842 = vld [vmem:[%s668] sm:$0xff]
    %vm1843 = vcmp.gt.f32.partialorder %v1842, 0.0
    %1845 = vrot.lane.b32.xlu0 %v1841, 32
    %v1846 = vpop.permute.xlu0 %1845
    %v1848 = vsel %vm1843, %v1846, %v1734
    %1850 = vrot.lane.b32.xlu0 %v1835, 96
    %v1851 = vpop.permute.xlu0 %1850
    %v1853 = vsel %vm1843, %v1851, %v1739
    %v1854 = vld [vmem:[%s308] sm:$0xff]
    %v1856 = vsel %vm147, %v1848, 0
    %1858 = vmatprep.subr.mxu0 0.0
    %1859 = vmatpush1.msra.mxu0 %v1515
    %1860 = vmatprep.subr.mxu0 0.0
    %1861 = vmatpush1.msra.mxu0 %v1516
    %1862 = vmatprep.subr.mxu0 0.0
    %1863 = vmatpush1.msra.mxu0 %v1517
    %1864 = vmatprep.subr.mxu0 0.0
    %1865 = vmatpush1.msra.mxu0 %v1518
    %1866 = vmatprep.subr.mxu0 0.0
    %1867 = vmatpush1.msra.mxu0 0.0
    %1868 = vmatprep.subr.mxu0 0.0
    %1869 = vmatpush1.msra.mxu0 0.0
    %1870 = vmatprep.subr.mxu0 0.0
    %1871 = vmatpush1.msra.mxu0 0.0
    %1872 = vmatprep.subr.mxu0 0.0
    %1873 = vmatpush1.msra.mxu0 0.0
    %1874 = vmatprep.subr.mxu0 0.0
    %1875 = vmatpush1.msra.mxu0 0.0
    %1876 = vmatprep.subr.mxu0 0.0
    %1877 = vmatpush1.msra.mxu0 0.0
    %1878 = vmatprep.subr.mxu0 0.0
    %1879 = vmatpush1.msra.mxu0 0.0
    %1880 = vmatprep.subr.mxu0 0.0
    %1881 = vmatpush1.msra.mxu0 0.0
    %1882 = vmatprep.subr.mxu0 0.0
    %1883 = vmatpush1.msra.mxu0 0.0
    %1884 = vmatprep.subr.mxu0 0.0
    %1885 = vmatpush1.msra.mxu0 0.0
    %1886 = vmatprep.subr.mxu0 0.0
    %1887 = vmatpush1.msra.mxu0 0.0
    %1888 = vmatprep.subr.mxu0 0.0
    %1889 = vmatpush1.msra.mxu0 0.0
    %1890 = vmatprep.subr.mxu0 0.0
    %1891 = vmatpush1.msra.mxu0 0.0
    %1892 = vmatprep.subr.mxu0 0.0
    %1893 = vmatpush1.msra.mxu0 0.0
    %1894 = vmatprep.subr.mxu0 0.0
    %1895 = vmatpush1.msra.mxu0 0.0
    %1896 = vmatprep.subr.mxu0 0.0
    %1897 = vmatpush1.msra.mxu0 0.0
    %1898 = vmatprep.subr.mxu0 0.0
    %1899 = vmatpush1.msra.mxu0 0.0
    %1900 = vmatprep.subr.mxu0 0.0
    %1901 = vmatpush1.msra.mxu0 0.0
    %1902 = vmatprep.subr.mxu0 0.0
    %1903 = vmatpush1.msra.mxu0 0.0
    %1904 = vmatprep.subr.mxu0 0.0
    %1905 = vmatpush1.msra.mxu0 0.0
    %1906 = vmatprep.subr.mxu0 0.0
    %1907 = vmatpush1.msra.mxu0 0.0
    %1908 = vmatprep.subr.mxu0 0.0
    %1909 = vmatpush1.msra.mxu0 0.0
    %1910 = vmatprep.subr.mxu0 0.0
    %1911 = vmatpush1.msra.mxu0 0.0
    %1912 = vmatprep.subr.mxu0 0.0
    %1913 = vmatpush1.msra.mxu0 0.0
    %1914 = vmatprep.subr.mxu0 0.0
    %1915 = vmatpush1.msra.mxu0 0.0
    %1916 = vmatprep.subr.mxu0 0.0
    %1917 = vmatpush1.msra.mxu0 0.0
    %1918 = vmatprep.subr.mxu0 0.0
    %1919 = vmatpush1.msra.mxu0 0.0
    %1920 = vmatprep.subr.mxu0 0.0
    %1921 = vmatpush1.msra.mxu0 0.0
    %1922 = vmatprep.mubr.f32.mxu0 0.0
    %1923 = vmatmul.mubr.f32.gmra.mrb[0].mxu0 %v1856
    %v1924 = vpop.f32.mrb[0].mxu0
    %v1925 = vadd.f32 0.0, %v1924
    %v1926 = vpop.f32.mrb[0].mxu0
    %1927 = vdwg.mxu0
    %v1928 = vadd.f32 %v1854, %v1925
    %v1929 = vmul.f32 %v1928, 0.5
    %v1930 = vsel %vm126, %v1928, %v1929
    %v1931 = vtanh.pop %v1930
    %v1932 = vmul.f32 %v1931, 0.5
    %v1933 = vadd.f32 %v1932, 0.5
    %v1934 = vsel %vm126, %v1931, %v1933
    %1936 = vrot.lane.b32.xlu0 %v1853, 32
    %v1937 = vpop.permute.xlu0 %1936
    %v1939 = vmul.f32 %v1934, %v1937
    %1941 = vrot.lane.b32.xlu0 %v1934, 64
    %v1942 = vpop.permute.xlu0 %1941
    %v1944 = vmul.f32 %v1934, %v1942
    %1946 = vrot.lane.b32.xlu0 %v1944, 32
    %v1947 = vpop.permute.xlu0 %1946
    %v1949 = vadd.f32 %v1939, %v1947
    %v1950 = vtanh.pop %v1949
    %1952 = vrot.lane.b32.xlu0 %v1950, 64
    %v1953 = vpop.permute.xlu0 %1952
    %v1955 = vmul.f32 %v1934, %v1953
    %v1956 = vld [vmem:[%s794] sm:$0xff]
    %vm1957 = vcmp.gt.f32.partialorder %v1956, 0.0
    %1959 = vrot.lane.b32.xlu0 %v1955, 32
    %v1960 = vpop.permute.xlu0 %1959
    %v1962 = vsel %vm1957, %v1960, %v1848
    %1964 = vrot.lane.b32.xlu0 %v1949, 96
    %v1965 = vpop.permute.xlu0 %1964
    %v1967 = vsel %vm1957, %v1965, %v1853
    %v1968 = vld [vmem:[%s310] sm:$0xff]
    %v1970 = vsel %vm147, %v1962, 0
    %1972 = vmatprep.subr.mxu0 0.0
    %1973 = vmatpush1.msra.mxu0 %v1515
    %1974 = vmatprep.subr.mxu0 0.0
    %1975 = vmatpush1.msra.mxu0 %v1516
    %1976 = vmatprep.subr.mxu0 0.0
    %1977 = vmatpush1.msra.mxu0 %v1517
    %1978 = vmatprep.subr.mxu0 0.0
    %1979 = vmatpush1.msra.mxu0 %v1518
    %1980 = vmatprep.subr.mxu0 0.0
    %1981 = vmatpush1.msra.mxu0 0.0
    %1982 = vmatprep.subr.mxu0 0.0
    %1983 = vmatpush1.msra.mxu0 0.0
    %1984 = vmatprep.subr.mxu0 0.0
    %1985 = vmatpush1.msra.mxu0 0.0
    %1986 = vmatprep.subr.mxu0 0.0
    %1987 = vmatpush1.msra.mxu0 0.0
    %1988 = vmatprep.subr.mxu0 0.0
    %1989 = vmatpush1.msra.mxu0 0.0
    %1990 = vmatprep.subr.mxu0 0.0
    %1991 = vmatpush1.msra.mxu0 0.0
    %1992 = vmatprep.subr.mxu0 0.0
    %1993 = vmatpush1.msra.mxu0 0.0
    %1994 = vmatprep.subr.mxu0 0.0
    %1995 = vmatpush1.msra.mxu0 0.0
    %1996 = vmatprep.subr.mxu0 0.0
    %1997 = vmatpush1.msra.mxu0 0.0
    %1998 = vmatprep.subr.mxu0 0.0
    %1999 = vmatpush1.msra.mxu0 0.0
    %2000 = vmatprep.subr.mxu0 0.0
    %2001 = vmatpush1.msra.mxu0 0.0
    %2002 = vmatprep.subr.mxu0 0.0
    %2003 = vmatpush1.msra.mxu0 0.0
    %2004 = vmatprep.subr.mxu0 0.0
    %2005 = vmatpush1.msra.mxu0 0.0
    %2006 = vmatprep.subr.mxu0 0.0
    %2007 = vmatpush1.msra.mxu0 0.0
    %2008 = vmatprep.subr.mxu0 0.0
    %2009 = vmatpush1.msra.mxu0 0.0
    %2010 = vmatprep.subr.mxu0 0.0
    %2011 = vmatpush1.msra.mxu0 0.0
    %2012 = vmatprep.subr.mxu0 0.0
    %2013 = vmatpush1.msra.mxu0 0.0
    %2014 = vmatprep.subr.mxu0 0.0
    %2015 = vmatpush1.msra.mxu0 0.0
    %2016 = vmatprep.subr.mxu0 0.0
    %2017 = vmatpush1.msra.mxu0 0.0
    %2018 = vmatprep.subr.mxu0 0.0
    %2019 = vmatpush1.msra.mxu0 0.0
    %2020 = vmatprep.subr.mxu0 0.0
    %2021 = vmatpush1.msra.mxu0 0.0
    %2022 = vmatprep.subr.mxu0 0.0
    %2023 = vmatpush1.msra.mxu0 0.0
    %2024 = vmatprep.subr.mxu0 0.0
    %2025 = vmatpush1.msra.mxu0 0.0
    %2026 = vmatprep.subr.mxu0 0.0
    %2027 = vmatpush1.msra.mxu0 0.0
    %2028 = vmatprep.subr.mxu0 0.0
    %2029 = vmatpush1.msra.mxu0 0.0
    %2030 = vmatprep.subr.mxu0 0.0
    %2031 = vmatpush1.msra.mxu0 0.0
    %2032 = vmatprep.subr.mxu0 0.0
    %2033 = vmatpush1.msra.mxu0 0.0
    %2034 = vmatprep.subr.mxu0 0.0
    %2035 = vmatpush1.msra.mxu0 0.0
    %2036 = vmatprep.mubr.f32.mxu0 0.0
    %2037 = vmatmul.mubr.f32.gmra.mrb[0].mxu0 %v1970
    %v2038 = vpop.f32.mrb[0].mxu0
    %v2039 = vadd.f32 0.0, %v2038
    %v2040 = vpop.f32.mrb[0].mxu0
    %2041 = vdwg.mxu0
    %v2042 = vadd.f32 %v1968, %v2039
    %v2043 = vmul.f32 %v2042, 0.5
    %v2044 = vsel %vm126, %v2042, %v2043
    %v2045 = vtanh.pop %v2044
    %v2046 = vmul.f32 %v2045, 0.5
    %v2047 = vadd.f32 %v2046, 0.5
    %v2048 = vsel %vm126, %v2045, %v2047
    %2050 = vrot.lane.b32.xlu0 %v1967, 32
    %v2051 = vpop.permute.xlu0 %2050
    %v2053 = vmul.f32 %v2048, %v2051
    %2055 = vrot.lane.b32.xlu0 %v2048, 64
    %v2056 = vpop.permute.xlu0 %2055
    %v2058 = vmul.f32 %v2048, %v2056
    %2060 = vrot.lane.b32.xlu0 %v2058, 32
    %v2061 = vpop.permute.xlu0 %2060
    %v2063 = vadd.f32 %v2053, %v2061
    %v2064 = vtanh.pop %v2063
    %2066 = vrot.lane.b32.xlu0 %v2064, 64
    %v2067 = vpop.permute.xlu0 %2066
    %v2069 = vmul.f32 %v2048, %v2067
    %v2070 = vld [vmem:[%s920] sm:$0xff]
    %vm2071 = vcmp.gt.f32.partialorder %v2070, 0.0
    %2073 = vrot.lane.b32.xlu0 %v2069, 32
    %v2074 = vpop.permute.xlu0 %2073
    %v2076 = vsel %vm2071, %v2074, %v1962
    %2078 = vrot.lane.b32.xlu0 %v2063, 96
    %v2079 = vpop.permute.xlu0 %2078
    %v2081 = vsel %vm2071, %v2079, %v1967
    %v2082 = vld [vmem:[%s302] sm:$0xff]
    %v2084 = vsel %vm147, %v2076, 0
    %2086 = vmatprep.subr.mxu0 0.0
    %2087 = vmatpush1.msra.mxu0 %v1515
    %2088 = vmatprep.subr.mxu0 0.0
    %2089 = vmatpush1.msra.mxu0 %v1516
    %2090 = vmatprep.subr.mxu0 0.0
    %2091 = vmatpush1.msra.mxu0 %v1517
    %2092 = vmatprep.subr.mxu0 0.0
    %2093 = vmatpush1.msra.mxu0 %v1518
    %2094 = vmatprep.subr.mxu0 0.0
    %2095 = vmatpush1.msra.mxu0 0.0
    %2096 = vmatprep.subr.mxu0 0.0
    %2097 = vmatpush1.msra.mxu0 0.0
    %2098 = vmatprep.subr.mxu0 0.0
    %2099 = vmatpush1.msra.mxu0 0.0
    %2100 = vmatprep.subr.mxu0 0.0
    %2101 = vmatpush1.msra.mxu0 0.0
    %2102 = vmatprep.subr.mxu0 0.0
    %2103 = vmatpush1.msra.mxu0 0.0
    %2104 = vmatprep.subr.mxu0 0.0
    %2105 = vmatpush1.msra.mxu0 0.0
    %2106 = vmatprep.subr.mxu0 0.0
    %2107 = vmatpush1.msra.mxu0 0.0
    %2108 = vmatprep.subr.mxu0 0.0
    %2109 = vmatpush1.msra.mxu0 0.0
    %2110 = vmatprep.subr.mxu0 0.0
    %2111 = vmatpush1.msra.mxu0 0.0
    %2112 = vmatprep.subr.mxu0 0.0
    %2113 = vmatpush1.msra.mxu0 0.0
    %2114 = vmatprep.subr.mxu0 0.0
    %2115 = vmatpush1.msra.mxu0 0.0
    %2116 = vmatprep.subr.mxu0 0.0
    %2117 = vmatpush1.msra.mxu0 0.0
    %2118 = vmatprep.subr.mxu0 0.0
    %2119 = vmatpush1.msra.mxu0 0.0
    %2120 = vmatprep.subr.mxu0 0.0
    %2121 = vmatpush1.msra.mxu0 0.0
    %2122 = vmatprep.subr.mxu0 0.0
    %2123 = vmatpush1.msra.mxu0 0.0
    %2124 = vmatprep.subr.mxu0 0.0
    %2125 = vmatpush1.msra.mxu0 0.0
    %2126 = vmatprep.subr.mxu0 0.0
    %2127 = vmatpush1.msra.mxu0 0.0
    %2128 = vmatprep.subr.mxu0 0.0
    %2129 = vmatpush1.msra.mxu0 0.0
    %2130 = vmatprep.subr.mxu0 0.0
    %2131 = vmatpush1.msra.mxu0 0.0
    %2132 = vmatprep.subr.mxu0 0.0
    %2133 = vmatpush1.msra.mxu0 0.0
    %2134 = vmatprep.subr.mxu0 0.0
    %2135 = vmatpush1.msra.mxu0 0.0
    %2136 = vmatprep.subr.mxu0 0.0
    %2137 = vmatpush1.msra.mxu0 0.0
    %2138 = vmatprep.subr.mxu0 0.0
    %2139 = vmatpush1.msra.mxu0 0.0
    %2140 = vmatprep.subr.mxu0 0.0
    %2141 = vmatpush1.msra.mxu0 0.0
    %2142 = vmatprep.subr.mxu0 0.0
    %2143 = vmatpush1.msra.mxu0 0.0
    %2144 = vmatprep.subr.mxu0 0.0
    %2145 = vmatpush1.msra.mxu0 0.0
    %2146 = vmatprep.subr.mxu0 0.0
    %2147 = vmatpush1.msra.mxu0 0.0
    %2148 = vmatprep.subr.mxu0 0.0
    %2149 = vmatpush1.msra.mxu0 0.0
    %2150 = vmatprep.mubr.f32.mxu0 0.0
    %2151 = vmatmul.mubr.f32.gmra.mrb[0].mxu0 %v2084
    %v2152 = vpop.f32.mrb[0].mxu0
    %v2153 = vadd.f32 0.0, %v2152
    %v2154 = vpop.f32.mrb[0].mxu0
    %2155 = vdwg.mxu0
    %v2156 = vadd.f32 %v2082, %v2153
    %v2157 = vmul.f32 %v2156, 0.5
    %v2158 = vsel %vm126, %v2156, %v2157
    %v2159 = vtanh.pop %v2158
    %v2160 = vmul.f32 %v2159, 0.5
    %v2161 = vadd.f32 %v2160, 0.5
    %v2162 = vsel %vm126, %v2159, %v2161
    %2164 = vrot.lane.b32.xlu0 %v2081, 32
    %v2165 = vpop.permute.xlu0 %2164
    %v2167 = vmul.f32 %v2162, %v2165
    %2169 = vrot.lane.b32.xlu0 %v2162, 64
    %v2170 = vpop.permute.xlu0 %2169
    %v2172 = vmul.f32 %v2162, %v2170
    %2174 = vrot.lane.b32.xlu0 %v2172, 32
    %v2175 = vpop.permute.xlu0 %2174
    %v2177 = vadd.f32 %v2167, %v2175
    %v2178 = vtanh.pop %v2177
    %2180 = vrot.lane.b32.xlu0 %v2178, 64
    %v2181 = vpop.permute.xlu0 %2180
    %v2183 = vmul.f32 %v2162, %v2181
    %v2184 = vld [vmem:[%s1046] sm:$0xff]
    %vm2185 = vcmp.gt.f32.partialorder %v2184, 0.0
    %2187 = vrot.lane.b32.xlu0 %v2183, 32
    %v2188 = vpop.permute.xlu0 %2187
    %v2190 = vsel %vm2185, %v2188, %v2076
    %2192 = vrot.lane.b32.xlu0 %v2177, 96
    %v2193 = vpop.permute.xlu0 %2192
    %v2195 = vsel %vm2185, %v2193, %v2081
    %v2196 = vld [vmem:[%s294] sm:$0xff]
    %v2198 = vsel %vm147, %v2190, 0
    %2200 = vmatprep.subr.mxu0 0.0
    %2201 = vmatpush1.msra.mxu0 %v1515
    %2202 = vmatprep.subr.mxu0 0.0
    %2203 = vmatpush1.msra.mxu0 %v1516
    %2204 = vmatprep.subr.mxu0 0.0
    %2205 = vmatpush1.msra.mxu0 %v1517
    %2206 = vmatprep.subr.mxu0 0.0
    %2207 = vmatpush1.msra.mxu0 %v1518
    %2208 = vmatprep.subr.mxu0 0.0
    %2209 = vmatpush1.msra.mxu0 0.0
    %2210 = vmatprep.subr.mxu0 0.0
    %2211 = vmatpush1.msra.mxu0 0.0
    %2212 = vmatprep.subr.mxu0 0.0
    %2213 = vmatpush1.msra.mxu0 0.0
    %2214 = vmatprep.subr.mxu0 0.0
    %2215 = vmatpush1.msra.mxu0 0.0
    %2216 = vmatprep.subr.mxu0 0.0
    %2217 = vmatpush1.msra.mxu0 0.0
    %2218 = vmatprep.subr.mxu0 0.0
    %2219 = vmatpush1.msra.mxu0 0.0
    %2220 = vmatprep.subr.mxu0 0.0
    %2221 = vmatpush1.msra.mxu0 0.0
    %2222 = vmatprep.subr.mxu0 0.0
    %2223 = vmatpush1.msra.mxu0 0.0
    %2224 = vmatprep.subr.mxu0 0.0
    %2225 = vmatpush1.msra.mxu0 0.0
    %2226 = vmatprep.subr.mxu0 0.0
    %2227 = vmatpush1.msra.mxu0 0.0
    %2228 = vmatprep.subr.mxu0 0.0
    %2229 = vmatpush1.msra.mxu0 0.0
    %2230 = vmatprep.subr.mxu0 0.0
    %2231 = vmatpush1.msra.mxu0 0.0
    %2232 = vmatprep.subr.mxu0 0.0
    %2233 = vmatpush1.msra.mxu0 0.0
    %2234 = vmatprep.subr.mxu0 0.0
    %2235 = vmatpush1.msra.mxu0 0.0
    %2236 = vmatprep.subr.mxu0 0.0
    %2237 = vmatpush1.msra.mxu0 0.0
    %2238 = vmatprep.subr.mxu0 0.0
    %2239 = vmatpush1.msra.mxu0 0.0
    %2240 = vmatprep.subr.mxu0 0.0
    %2241 = vmatpush1.msra.mxu0 0.0
    %2242 = vmatprep.subr.mxu0 0.0
    %2243 = vmatpush1.msra.mxu0 0.0
    %2244 = vmatprep.subr.mxu0 0.0
    %2245 = vmatpush1.msra.mxu0 0.0
    %2246 = vmatprep.subr.mxu0 0.0
    %2247 = vmatpush1.msra.mxu0 0.0
    %2248 = vmatprep.subr.mxu0 0.0
    %2249 = vmatpush1.msra.mxu0 0.0
    %2250 = vmatprep.subr.mxu0 0.0
    %2251 = vmatpush1.msra.mxu0 0.0
    %2252 = vmatprep.subr.mxu0 0.0
    %2253 = vmatpush1.msra.mxu0 0.0
    %2254 = vmatprep.subr.mxu0 0.0
    %2255 = vmatpush1.msra.mxu0 0.0
    %2256 = vmatprep.subr.mxu0 0.0
    %2257 = vmatpush1.msra.mxu0 0.0
    %2258 = vmatprep.subr.mxu0 0.0
    %2259 = vmatpush1.msra.mxu0 0.0
    %2260 = vmatprep.subr.mxu0 0.0
    %2261 = vmatpush1.msra.mxu0 0.0
    %2262 = vmatprep.subr.mxu0 0.0
    %2263 = vmatpush1.msra.mxu0 0.0
    %2264 = vmatprep.mubr.f32.mxu0 0.0
    %2265 = vmatmul.mubr.f32.gmra.mrb[0].mxu0 %v2198
    %v2266 = vpop.f32.mrb[0].mxu0
    %v2267 = vadd.f32 0.0, %v2266
    %v2268 = vpop.f32.mrb[0].mxu0
    %2269 = vdwg.mxu0
    %v2270 = vadd.f32 %v2196, %v2267
    %v2271 = vmul.f32 %v2270, 0.5
    %v2272 = vsel %vm126, %v2270, %v2271
    %v2273 = vtanh.pop %v2272
    %v2274 = vmul.f32 %v2273, 0.5
    %v2275 = vadd.f32 %v2274, 0.5
    %v2276 = vsel %vm126, %v2273, %v2275
    %2278 = vrot.lane.b32.xlu0 %v2195, 32
    %v2279 = vpop.permute.xlu0 %2278
    %v2281 = vmul.f32 %v2276, %v2279
    %2283 = vrot.lane.b32.xlu0 %v2276, 64
    %v2284 = vpop.permute.xlu0 %2283
    %v2286 = vmul.f32 %v2276, %v2284
    %2288 = vrot.lane.b32.xlu0 %v2286, 32
    %v2289 = vpop.permute.xlu0 %2288
    %v2291 = vadd.f32 %v2281, %v2289
    %v2292 = vtanh.pop %v2291
    %2294 = vrot.lane.b32.xlu0 %v2292, 64
    %v2295 = vpop.permute.xlu0 %2294
    %v2297 = vmul.f32 %v2276, %v2295
    %v2298 = vld [vmem:[%s1172] sm:$0xff]
    %vm2299 = vcmp.gt.f32.partialorder %v2298, 0.0
    %2301 = vrot.lane.b32.xlu0 %v2297, 32
    %v2302 = vpop.permute.xlu0 %2301
    %v2304 = vsel %vm2299, %v2302, %v2190
    %2306 = vrot.lane.b32.xlu0 %v2291, 96
    %v2307 = vpop.permute.xlu0 %2306
    %v2309 = vsel %vm2299, %v2307, %v2195
    %v2310 = vld [vmem:[%s286] sm:$0xff]
    %v2312 = vsel %vm147, %v2304, 0
    %2314 = vmatprep.subr.mxu0 0.0
    %2315 = vmatpush1.msra.mxu0 %v1515
    %2316 = vmatprep.subr.mxu0 0.0
    %2317 = vmatpush1.msra.mxu0 %v1516
    %2318 = vmatprep.subr.mxu0 0.0
    %2319 = vmatpush1.msra.mxu0 %v1517
    %2320 = vmatprep.subr.mxu0 0.0
    %2321 = vmatpush1.msra.mxu0 %v1518
    %2322 = vmatprep.subr.mxu0 0.0
    %2323 = vmatpush1.msra.mxu0 0.0
    %2324 = vmatprep.subr.mxu0 0.0
    %2325 = vmatpush1.msra.mxu0 0.0
    %2326 = vmatprep.subr.mxu0 0.0
    %2327 = vmatpush1.msra.mxu0 0.0
    %2328 = vmatprep.subr.mxu0 0.0
    %2329 = vmatpush1.msra.mxu0 0.0
    %2330 = vmatprep.subr.mxu0 0.0
    %2331 = vmatpush1.msra.mxu0 0.0
    %2332 = vmatprep.subr.mxu0 0.0
    %2333 = vmatpush1.msra.mxu0 0.0
    %2334 = vmatprep.subr.mxu0 0.0
    %2335 = vmatpush1.msra.mxu0 0.0
    %2336 = vmatprep.subr.mxu0 0.0
    %2337 = vmatpush1.msra.mxu0 0.0
    %2338 = vmatprep.subr.mxu0 0.0
    %2339 = vmatpush1.msra.mxu0 0.0
    %2340 = vmatprep.subr.mxu0 0.0
    %2341 = vmatpush1.msra.mxu0 0.0
    %2342 = vmatprep.subr.mxu0 0.0
    %2343 = vmatpush1.msra.mxu0 0.0
    %2344 = vmatprep.subr.mxu0 0.0
    %2345 = vmatpush1.msra.mxu0 0.0
    %2346 = vmatprep.subr.mxu0 0.0
    %2347 = vmatpush1.msra.mxu0 0.0
    %2348 = vmatprep.subr.mxu0 0.0
    %2349 = vmatpush1.msra.mxu0 0.0
    %2350 = vmatprep.subr.mxu0 0.0
    %2351 = vmatpush1.msra.mxu0 0.0
    %2352 = vmatprep.subr.mxu0 0.0
    %2353 = vmatpush1.msra.mxu0 0.0
    %2354 = vmatprep.subr.mxu0 0.0
    %2355 = vmatpush1.msra.mxu0 0.0
    %2356 = vmatprep.subr.mxu0 0.0
    %2357 = vmatpush1.msra.mxu0 0.0
    %2358 = vmatprep.subr.mxu0 0.0
    %2359 = vmatpush1.msra.mxu0 0.0
    %2360 = vmatprep.subr.mxu0 0.0
    %2361 = vmatpush1.msra.mxu0 0.0
    %2362 = vmatprep.subr.mxu0 0.0
    %2363 = vmatpush1.msra.mxu0 0.0
    %2364 = vmatprep.subr.mxu0 0.0
    %2365 = vmatpush1.msra.mxu0 0.0
    %2366 = vmatprep.subr.mxu0 0.0
    %2367 = vmatpush1.msra.mxu0 0.0
    %2368 = vmatprep.subr.mxu0 0.0
    %2369 = vmatpush1.msra.mxu0 0.0
    %2370 = vmatprep.subr.mxu0 0.0
    %2371 = vmatpush1.msra.mxu0 0.0
    %2372 = vmatprep.subr.mxu0 0.0
    %2373 = vmatpush1.msra.mxu0 0.0
    %2374 = vmatprep.subr.mxu0 0.0
    %2375 = vmatpush1.msra.mxu0 0.0
    %2376 = vmatprep.subr.mxu0 0.0
    %2377 = vmatpush1.msra.mxu0 0.0
    %2378 = vmatprep.mubr.f32.mxu0 0.0
    %2379 = vmatmul.mubr.f32.gmra.mrb[0].mxu0 %v2312
    %v2380 = vpop.f32.mrb[0].mxu0
    %v2381 = vadd.f32 0.0, %v2380
    %v2382 = vpop.f32.mrb[0].mxu0
    %2383 = vdwg.mxu0
    %v2384 = vadd.f32 %v2310, %v2381
    %v2385 = vmul.f32 %v2384, 0.5
    %v2386 = vsel %vm126, %v2384, %v2385
    %v2387 = vtanh.pop %v2386
    %v2388 = vmul.f32 %v2387, 0.5
    %v2389 = vadd.f32 %v2388, 0.5
    %v2390 = vsel %vm126, %v2387, %v2389
    %2392 = vrot.lane.b32.xlu0 %v2309, 32
    %v2393 = vpop.permute.xlu0 %2392
    %v2395 = vmul.f32 %v2390, %v2393
    %2397 = vrot.lane.b32.xlu0 %v2390, 64
    %v2398 = vpop.permute.xlu0 %2397
    %v2400 = vmul.f32 %v2390, %v2398
    %2402 = vrot.lane.b32.xlu0 %v2400, 32
    %v2403 = vpop.permute.xlu0 %2402
    %v2405 = vadd.f32 %v2395, %v2403
    %v2406 = vtanh.pop %v2405
    %2408 = vrot.lane.b32.xlu0 %v2406, 64
    %v2409 = vpop.permute.xlu0 %2408
    %v2411 = vmul.f32 %v2390, %v2409
    %v2412 = vld [vmem:[%s1298] sm:$0xff]
    %vm2413 = vcmp.gt.f32.partialorder %v2412, 0.0
    %2415 = vrot.lane.b32.xlu0 %v2411, 32
    %v2416 = vpop.permute.xlu0 %2415
    %v2418 = vsel %vm2413, %v2416, %v2304
    %v2419 = vld [vmem:[#allocation10] sm:$0xff]
    %v2420 = vld [vmem:[#allocation10 + $0x8] sm:$0xff]
    %v2421 = vld [vmem:[#allocation10 + $0x10] sm:$0xff]
    %v2422 = vld [vmem:[#allocation10 + $0x18] sm:$0xff]
    %v2423 = vld [vmem:[#allocation12] sm:$0x1]
    %v2425 = vlaneseq
    %v2426 = vshrl.u32 %v2425, 7
    %v2427 = vsub.s32 0, %v2426
    %v2428 = vrot.slane %v2423, %v2427
    %v2431 = vsel %vm147, %v2418, 0
    %2433 = vmatprep.subr.mxu0 0.0
    %2434 = vmatpush1.msra.mxu0 %v2419
    %2435 = vmatprep.subr.mxu0 0.0
    %2436 = vmatpush1.msra.mxu0 %v2420
    %2437 = vmatprep.subr.mxu0 0.0
    %2438 = vmatpush1.msra.mxu0 %v2421
    %2439 = vmatprep.subr.mxu0 0.0
    %2440 = vmatpush1.msra.mxu0 %v2422
    %2441 = vmatprep.subr.mxu0 0.0
    %2442 = vmatpush1.msra.mxu0 0.0
    %2443 = vmatprep.subr.mxu0 0.0
    %2444 = vmatpush1.msra.mxu0 0.0
    %2445 = vmatprep.subr.mxu0 0.0
    %2446 = vmatpush1.msra.mxu0 0.0
    %2447 = vmatprep.subr.mxu0 0.0
    %2448 = vmatpush1.msra.mxu0 0.0
    %2449 = vmatprep.subr.mxu0 0.0
    %2450 = vmatpush1.msra.mxu0 0.0
    %2451 = vmatprep.subr.mxu0 0.0
    %2452 = vmatpush1.msra.mxu0 0.0
    %2453 = vmatprep.subr.mxu0 0.0
    %2454 = vmatpush1.msra.mxu0 0.0
    %2455 = vmatprep.subr.mxu0 0.0
    %2456 = vmatpush1.msra.mxu0 0.0
    %2457 = vmatprep.subr.mxu0 0.0
    %2458 = vmatpush1.msra.mxu0 0.0
    %2459 = vmatprep.subr.mxu0 0.0
    %2460 = vmatpush1.msra.mxu0 0.0
    %2461 = vmatprep.subr.mxu0 0.0
    %2462 = vmatpush1.msra.mxu0 0.0
    %2463 = vmatprep.subr.mxu0 0.0
    %2464 = vmatpush1.msra.mxu0 0.0
    %2465 = vmatprep.subr.mxu0 0.0
    %2466 = vmatpush1.msra.mxu0 0.0
    %2467 = vmatprep.subr.mxu0 0.0
    %2468 = vmatpush1.msra.mxu0 0.0
    %2469 = vmatprep.subr.mxu0 0.0
    %2470 = vmatpush1.msra.mxu0 0.0
    %2471 = vmatprep.subr.mxu0 0.0
    %2472 = vmatpush1.msra.mxu0 0.0
    %2473 = vmatprep.subr.mxu0 0.0
    %2474 = vmatpush1.msra.mxu0 0.0
    %2475 = vmatprep.subr.mxu0 0.0
    %2476 = vmatpush1.msra.mxu0 0.0
    %2477 = vmatprep.subr.mxu0 0.0
    %2478 = vmatpush1.msra.mxu0 0.0
    %2479 = vmatprep.subr.mxu0 0.0
    %2480 = vmatpush1.msra.mxu0 0.0
    %2481 = vmatprep.subr.mxu0 0.0
    %2482 = vmatpush1.msra.mxu0 0.0
    %2483 = vmatprep.subr.mxu0 0.0
    %2484 = vmatpush1.msra.mxu0 0.0
    %2485 = vmatprep.subr.mxu0 0.0
    %2486 = vmatpush1.msra.mxu0 0.0
    %2487 = vmatprep.subr.mxu0 0.0
    %2488 = vmatpush1.msra.mxu0 0.0
    %2489 = vmatprep.subr.mxu0 0.0
    %2490 = vmatpush1.msra.mxu0 0.0
    %2491 = vmatprep.subr.mxu0 0.0
    %2492 = vmatpush1.msra.mxu0 0.0
    %2493 = vmatprep.subr.mxu0 0.0
    %2494 = vmatpush1.msra.mxu0 0.0
    %2495 = vmatprep.subr.mxu0 0.0
    %2496 = vmatpush1.msra.mxu0 0.0
    %2497 = vmatprep.mubr.f32.mxu0 0.0
    %2498 = vmatmul.mubr.f32.gmra.mrb[0].mxu0 %v2431
    %v2499 = vpop.f32.mrb[0].mxu0
    %v2500 = vadd.f32 %v2428, %v2499
    %v2501 = vpop.f32.mrb[0].mxu0
    %2502 = vdwg.mxu0
    %v2503 = vmax.f32 %v2500, 0.0
    %v2504 = vld [vmem:[%s10] sm:$0xff]
    %v2505 = vld [vmem:[%s10 + $0x8] sm:$0xff]
    %v2506 = vld [vmem:[%s10 + $0x10] sm:$0xff]
    %v2507 = vld [vmem:[%s10 + $0x18] sm:$0xff]
    %v2508 = vld [vmem:[%s11] sm:$0x1]
    %v2510 = vlaneseq
    %v2511 = vshrl.u32 %v2510, 7
    %v2512 = vsub.s32 0, %v2511
    %v2513 = vrot.slane %v2508, %v2512
    %v2516 = vsel %vm147, %v2503, 0
    %2518 = vmatprep.subr.mxu0 0.0
    %2519 = vmatpush1.msra.mxu0 %v2504
    %2520 = vmatprep.subr.mxu0 0.0
    %2521 = vmatpush1.msra.mxu0 %v2505
    %2522 = vmatprep.subr.mxu0 0.0
    %2523 = vmatpush1.msra.mxu0 %v2506
    %2524 = vmatprep.subr.mxu0 0.0
    %2525 = vmatpush1.msra.mxu0 %v2507
    %2526 = vmatprep.subr.mxu0 0.0
    %2527 = vmatpush1.msra.mxu0 0.0
    %2528 = vmatprep.subr.mxu0 0.0
    %2529 = vmatpush1.msra.mxu0 0.0
    %2530 = vmatprep.subr.mxu0 0.0
    %2531 = vmatpush1.msra.mxu0 0.0
    %2532 = vmatprep.subr.mxu0 0.0
    %2533 = vmatpush1.msra.mxu0 0.0
    %2534 = vmatprep.subr.mxu0 0.0
    %2535 = vmatpush1.msra.mxu0 0.0
    %2536 = vmatprep.subr.mxu0 0.0
    %2537 = vmatpush1.msra.mxu0 0.0
    %2538 = vmatprep.subr.mxu0 0.0
    %2539 = vmatpush1.msra.mxu0 0.0
    %2540 = vmatprep.subr.mxu0 0.0
    %2541 = vmatpush1.msra.mxu0 0.0
    %2542 = vmatprep.subr.mxu0 0.0
    %2543 = vmatpush1.msra.mxu0 0.0
    %2544 = vmatprep.subr.mxu0 0.0
    %2545 = vmatpush1.msra.mxu0 0.0
    %2546 = vmatprep.subr.mxu0 0.0
    %2547 = vmatpush1.msra.mxu0 0.0
    %2548 = vmatprep.subr.mxu0 0.0
    %2549 = vmatpush1.msra.mxu0 0.0
    %2550 = vmatprep.subr.mxu0 0.0
    %2551 = vmatpush1.msra.mxu0 0.0
    %2552 = vmatprep.subr.mxu0 0.0
    %2553 = vmatpush1.msra.mxu0 0.0
    %2554 = vmatprep.subr.mxu0 0.0
    %2555 = vmatpush1.msra.mxu0 0.0
    %2556 = vmatprep.subr.mxu0 0.0
    %2557 = vmatpush1.msra.mxu0 0.0
    %2558 = vmatprep.subr.mxu0 0.0
    %2559 = vmatpush1.msra.mxu0 0.0
    %2560 = vmatprep.subr.mxu0 0.0
    %2561 = vmatpush1.msra.mxu0 0.0
    %2562 = vmatprep.subr.mxu0 0.0
    %2563 = vmatpush1.msra.mxu0 0.0
    %2564 = vmatprep.subr.mxu0 0.0
    %2565 = vmatpush1.msra.mxu0 0.0
    %2566 = vmatprep.subr.mxu0 0.0
    %2567 = vmatpush1.msra.mxu0 0.0
    %2568 = vmatprep.subr.mxu0 0.0
    %2569 = vmatpush1.msra.mxu0 0.0
    %2570 = vmatprep.subr.mxu0 0.0
    %2571 = vmatpush1.msra.mxu0 0.0
    %2572 = vmatprep.subr.mxu0 0.0
    %2573 = vmatpush1.msra.mxu0 0.0
    %2574 = vmatprep.subr.mxu0 0.0
    %2575 = vmatpush1.msra.mxu0 0.0
    %2576 = vmatprep.subr.mxu0 0.0
    %2577 = vmatpush1.msra.mxu0 0.0
    %2578 = vmatprep.subr.mxu0 0.0
    %2579 = vmatpush1.msra.mxu0 0.0
    %2580 = vmatprep.subr.mxu0 0.0
    %2581 = vmatpush1.msra.mxu0 0.0
    %2582 = vmatprep.mubr.f32.mxu0 0.0
    %2583 = vmatmul.mubr.f32.gmra.mrb[0].mxu0 %v2516
    %v2584 = vpop.f32.mrb[0].mxu0
    %v2585 = vadd.f32 %v2513, %v2584
    %v2586 = vpop.f32.mrb[0].mxu0
    %2587 = vdwg.mxu0
    %2588 = vst [vmem:[#allocation13] sm:$0xff] %v2585
    // Predicated region
    $region70: #{tpu_custom_call.1} parent=1 // pred_check
      _
    $region71: #{tpu_custom_call.1} parent=1 // pred_check_branch
      %2590 = sbr.rel (0) target = $region73
    $region72: #{tpu_custom_call.1} parent=1 // pred_region
      %s2592 = ssub.s32 128, 128
      %2593 = vsyncadd [#allocation6], %s2592
      %s2595 = sshll.u32 [#allocation13], 4
      %s2596 = int_to_ptr.vmem [resolvable:$true] %s2595
      %2598 = dma.vmem_to_hbm [thread:$0]  %s2596, 128, %s12, [#allocation6]
    $region73: #{tpu_custom_call.1} parent=1 // pred_fallthru
      _
    // Predicated region
    $region74: #{tpu_custom_call.1} parent=1 // pred_check
      _
    $region75: #{tpu_custom_call.1} parent=1 // pred_check_branch
      %2600 = sbr.rel (0) target = $region77
    $region76: #{tpu_custom_call.1} parent=1 // pred_region
      %2601 = dma.done [#allocation6], 128
    $region77: #{tpu_custom_call.1} parent=1 // pred_fallthru
      _
    %2602 = vsyncpa [#allocation5], 1
    %2603 = vsyncpa [#allocation8], 1
    %2604 = vsyncpa [#allocation11], 1
    %2605 = vsyncpa [#allocation6], 1

</llo_original>
